<compile_context>
chip_gen: v5e
topology: v5e:2x2
jax: 0.10.0
libtpu: 0.0.40
codegen_flags: <defaults>
</compile_context>

<pallas_src>
import jax
import jax.numpy as jnp
from jax.experimental import pallas as pl
from jax.experimental.pallas import tpu as pltpu  # noqa: F401  (kept for scaling notes)

# ----------------------- small synthetic config ------------------------
B, S = 2, 8          # batch, sequence length
H = 32               # hidden size (roberta-base would be 768)
NH = 4               # attention heads
DH = H // NH         # per-head dim
FF = 64              # FFN intermediate size
L = 2                # encoder layers
VOCAB = 100          # vocab size (stand-in for 50265)
MAX_POS = 64
EMB_FEAT = 8         # embedding_size for the 3 binary features
N_CLASSES = 3
N_CLS_PAD = 128      # lane-dense classifier output (sliced to 3 outside)
LN_EPS = 1e-5


# --------------------------- fused kernel -------------------------------
def _bert_fused_kernel(
    x_ref, mask_ref,                                   # activations / mask
    emb_g_ref, emb_b_ref,                              # embedding LayerNorm
    wq_ref, bq_ref, wk_ref, bk_ref, wv_ref, bv_ref,    # per-(layer,head) QKV
    wo_ref, bo_ref,                                    # per-(layer,head) out-proj
    ln1_g_ref, ln1_b_ref,
    w1_ref, b1_ref, w2_ref, b2_ref,                    # FFN (stacked over L)
    ln2_g_ref, ln2_b_ref,
    feat_ref, wclsx_ref, wclsf_ref, bcls_ref,          # head weights
    out_ref,                                           # (B, N_CLS_PAD) output
):
    def mmf(a_bf16, b_bf16):
        # both operands already bf16; f32 accumulation on the MXU
        return jnp.dot(a_bf16, b_bf16, preferred_element_type=jnp.float32)

    def layernorm(x, g, b):
        mu = jnp.mean(x, axis=-1, keepdims=True)
        var = jnp.mean((x - mu) ** 2, axis=-1, keepdims=True)
        return (x - mu) * jax.lax.rsqrt(var + LN_EPS) * g + b

    def gelu(y):
        # TODO(synk): HF roberta uses exact erf GELU; tanh approximation used
        # here (EUP-friendly), outputs differ slightly from the PyTorch ref.
        return 0.5 * y * (1.0 + jnp.tanh(0.7978845608028654 *
                                         (y + 0.044715 * y * y * y)))

    # ---- embeddings -> LayerNorm (all in VMEM) ----
    x = x_ref[...].astype(jnp.float32)                       # (B*S, H)
    x = layernorm(x, emb_g_ref[...], emb_b_ref[...])

    # additive key-mask, broadcast HOISTED out of the layer/head loops:
    # one (S, S) bias per batch, reused by every layer and every head.
    mask = mask_ref[...]                                     # (B, S) float {0,1}
    neg = (1.0 - mask) * (-1e9)
    bias_rows = [jnp.broadcast_to(neg[b:b + 1, :], (S, S)) for b in range(B)]
    scale = 1.0 / (DH ** 0.5)

    # ---- encoder layers, fully unrolled (tiny L/B/NH); x stays in vregs/VMEM.
    # NOTE: for real roberta-base scale, replace these Python loops with
    # lax.fori_loop / a grid axis over layers (bounded live ranges, per-layer
    # weight streaming) and a "parallel" row-tile axis for v7x megacore.
    for l in range(L):
        xb = x.astype(jnp.bfloat16)                          # cast once per layer

        # per-head, lane-0-aligned projections: (B*S, H) @ (H, DH)
        q_heads, k_heads, v_heads = [], [], []
        for h in range(NH):
            i = l * NH + h
            q_heads.append(mmf(xb, wq_ref[i]) + bq_ref[i])   # (B*S, DH) f32
            k_heads.append(mmf(xb, wk_ref[i]) + bk_ref[i])
            v_heads.append(mmf(xb, wv_ref[i]) + bv_ref[i])

        # attention: all heads register-resident; per-head output projection
        # folded into a running sum -> no VMEM scratch, no lane concat.
        attn_blocks = []
        for b in range(B):
            r0 = b * S                                        # sublane-aligned rows
            acc = None                                        # (S, H) f32
            for h in range(NH):
                i = l * NH + h
                qh = q_heads[h][r0:r0 + S, :].astype(jnp.bfloat16)   # (S, DH)
                kh = k_heads[h][r0:r0 + S, :].astype(jnp.bfloat16)
                vh = v_heads[h][r0:r0 + S, :].astype(jnp.bfloat16)
                # q @ k^T without materializing a transpose
                s = jax.lax.dot_general(
                    qh, kh, (((1,), (1,)), ((), ())),
                    preferred_element_type=jnp.float32) * scale
                s = s + bias_rows[b]                          # mask key positions
                s = s - jnp.max(s, axis=-1, keepdims=True)
                p = jnp.exp(s)
                p = p * pl.reciprocal(jnp.sum(p, axis=-1, keepdims=True),
                                      approx=True)            # EUP slot
                ctx = mmf(p.astype(jnp.bfloat16), vh)          # (S, DH), registers
                contrib = mmf(ctx.astype(jnp.bfloat16), wo_ref[i])   # (S, H)
                acc = contrib if acc is None else acc + contrib
            attn_blocks.append(acc)
        # row (sublane) concat of tile-aligned (S, H) blocks — cheap
        attn = jnp.concatenate(attn_blocks, axis=0) + bo_ref[l]      # (B*S, H)
        x = layernorm(x + attn, ln1_g_ref[l], ln1_b_ref[l])

        x1b = x.astype(jnp.bfloat16)
        ff = gelu(mmf(x1b, w1_ref[l]) + b1_ref[l])
        ff = mmf(ff.astype(jnp.bfloat16), w2_ref[l]) + b2_ref[l]
        x = layernorm(x + ff, ln2_g_ref[l], ln2_b_ref[l])

    # ---- head: [CLS] token -> (dropout = identity at eval) -> classifier ----
    # TODO(synk): training-mode dropout (self.l2) omitted; identity at inference.
    # B=2: two single-row selects; for large B extract CLS rows with a strided
    # copy / during the final LayerNorm instead.
    cls = jnp.concatenate([x[b * S:b * S + 1, :] for b in range(B)], axis=0)  # (B, H)

    # classifier over [cls | features] as two matmuls (pre-split weights ->
    # no in-kernel row slicing); output is lane-dense (128 cols).
    logits = (mmf(cls.astype(jnp.bfloat16), wclsx_ref[...])
              + mmf(feat_ref[...].astype(jnp.bfloat16), wclsf_ref[...])
              + bcls_ref[...])                               # (B, 128) f32
    out_ref[...] = logits.astype(out_ref.dtype)


# --------------------------- parameter setup ----------------------------
def init_params(key):
    def nrm(k, shape, scale=0.02, dtype=jnp.float32):
        return (scale * jax.random.normal(k, shape, dtype=jnp.float32)).astype(dtype)

    bf = jnp.bfloat16
    keys = iter(jax.random.split(key, 64))
    p = {
        "word_emb": nrm(next(keys), (VOCAB, H)),
        # NOTE: RoBERTa offsets positions by padding_idx+1; the synthetic
        # encoder uses positions 0..S-1 (not numerically equal to self.l1).
        "pos_emb": nrm(next(keys), (MAX_POS, H)),
        "emb_ln_g": jnp.ones((1, H), jnp.float32),
        "emb_ln_b": jnp.zeros((1, H), jnp.float32),
        # per-(layer, head) projection weights, stored bf16 and lane-0 aligned
        "wq": nrm(next(keys), (L * NH, H, DH), dtype=bf),
        "bq": jnp.zeros((L * NH, 1, DH), jnp.float32),
        "wk": nrm(next(keys), (L * NH, H, DH), dtype=bf),
        "bk": jnp.zeros((L * NH, 1, DH), jnp.float32),
        "wv": nrm(next(keys), (L * NH, H, DH), dtype=bf),
        "bv": jnp.zeros((L * NH, 1, DH), jnp.float32),
        "wo": nrm(next(keys), (L * NH, DH, H), dtype=bf),
        "bo": jnp.zeros((L, 1, H), jnp.float32),
        "ln1_g": jnp.ones((L, 1, H), jnp.float32),
        "ln1_b": jnp.zeros((L, 1, H), jnp.float32),
        "w1": nrm(next(keys), (L, H, FF), dtype=bf),
        "b1": jnp.zeros((L, 1, FF), jnp.float32),
        "w2": nrm(next(keys), (L, FF, H), dtype=bf),
        "b2": jnp.zeros((L, 1, H), jnp.float32),
        "ln2_g": jnp.ones((L, 1, H), jnp.float32),
        "ln2_b": jnp.zeros((L, 1, H), jnp.float32),
        # the 3 x nn.Embedding(2, 8) feature embeddings
        "feat_emb": [nrm(next(keys), (2, EMB_FEAT)) for _ in range(3)],
    }
    # final classifier Linear(H + 3*8, 3), lane-padded to 128 output columns
    # and pre-split into the [CLS]-part and the feature-part (no in-kernel
    # row slicing of the weight).
    w_cls = nrm(next(keys), (H + 3 * EMB_FEAT, N_CLASSES))
    w_pad = (jnp.zeros((H + 3 * EMB_FEAT, N_CLS_PAD), jnp.float32)
             .at[:, :N_CLASSES].set(w_cls))
    p["w_cls_x"] = w_pad[:H, :].astype(bf)
    p["w_cls_f"] = w_pad[H:, :].astype(bf)
    p["b_cls_pad"] = jnp.zeros((1, N_CLS_PAD), jnp.float32)
    return p


# ------------------------------ forward ---------------------------------
def bert_class_forward(params, ids, mask, features):
    # integer embedding gathers stay as XLA ops fused under jit around the kernel
    x_emb = (jnp.take(params["word_emb"], ids, axis=0)
             + params["pos_emb"][:S][None, :, :]).reshape(B * S, H)
    mask_f = mask.astype(jnp.float32)

    # 3 binary-feature embeddings, concat along last dim -> (B, 24)
    feats = jnp.concatenate(
        [jnp.take(params["feat_emb"][i], features[:, i], axis=0) for i in range(3)],
        axis=-1)

    # one fused, gridless pallas_call for the whole encoder + classifier head
    # (total weights + activations < 100 KB -> fits VMEM on v5e/v6e/v7x; at
    # real roberta-base shapes this must become a grid over layers/row-tiles
    # with bf16 weight streaming, pl.Buffered(2), explicit vmem_limit_bytes,
    # and a "parallel" axis for v7x's 2 TensorCores.)
    logits_pad = pl.pallas_call(
        _bert_fused_kernel,
        out_shape=jax.ShapeDtypeStruct((B, N_CLS_PAD), jnp.float32),
    )(x_emb, mask_f,
      params["emb_ln_g"], params["emb_ln_b"],
      params["wq"], params["bq"], params["wk"], params["bk"],
      params["wv"], params["bv"], params["wo"], params["bo"],
      params["ln1_g"], params["ln1_b"],
      params["w1"], params["b1"], params["w2"], params["b2"],
      params["ln2_g"], params["ln2_b"],
      feats, params["w_cls_x"], params["w_cls_f"], params["b_cls_pad"])

    # slice the lane-padded classifier output back to the 3 real classes
    return logits_pad[:, :N_CLASSES]


# -------------------------------- main -----------------------------------
if __name__ == "__main__":
    key = jax.random.PRNGKey(0)
    k_param, k_ids, k_mask, k_feat = jax.random.split(key, 4)

    params = init_params(k_param)

    ids = jax.random.randint(k_ids, (B, S), 0, VOCAB, dtype=jnp.int32)
    # attention mask: first tokens valid, tail padded (last 2 positions of sample 1)
    mask = jnp.ones((B, S), dtype=jnp.int32).at[1, -2:].set(0)
    features = jax.random.randint(k_feat, (B, 3), 0, 2, dtype=jnp.int32)

    fwd = jax.jit(bert_class_forward)
    out = fwd(params, ids, mask, features)
    out = jax.block_until_ready(out)
    assert out.shape == (B, N_CLASSES), out.shape
    assert bool(jnp.all(jnp.isfinite(out)))
    print("KERNEL_OK")
</pallas_src>

<mosaic_0001>
module attributes {stable_mosaic.version = 11 : i64} {
  func.func @_bert_fused_kernel(%arg0: memref<16x32xf32, #tpu.memory_space<vmem>>, %arg1: memref<2x8xf32, #tpu.memory_space<vmem>>, %arg2: memref<1x32xf32, #tpu.memory_space<vmem>>, %arg3: memref<1x32xf32, #tpu.memory_space<vmem>>, %arg4: memref<8x32x8xbf16, #tpu.memory_space<vmem>>, %arg5: memref<8x1x8xf32, #tpu.memory_space<vmem>>, %arg6: memref<8x32x8xbf16, #tpu.memory_space<vmem>>, %arg7: memref<8x1x8xf32, #tpu.memory_space<vmem>>, %arg8: memref<8x32x8xbf16, #tpu.memory_space<vmem>>, %arg9: memref<8x1x8xf32, #tpu.memory_space<vmem>>, %arg10: memref<8x8x32xbf16, #tpu.memory_space<vmem>>, %arg11: memref<2x1x32xf32, #tpu.memory_space<vmem>>, %arg12: memref<2x1x32xf32, #tpu.memory_space<vmem>>, %arg13: memref<2x1x32xf32, #tpu.memory_space<vmem>>, %arg14: memref<2x32x64xbf16, #tpu.memory_space<vmem>>, %arg15: memref<2x1x64xf32, #tpu.memory_space<vmem>>, %arg16: memref<2x64x32xbf16, #tpu.memory_space<vmem>>, %arg17: memref<2x1x32xf32, #tpu.memory_space<vmem>>, %arg18: memref<2x1x32xf32, #tpu.memory_space<vmem>>, %arg19: memref<2x1x32xf32, #tpu.memory_space<vmem>>, %arg20: memref<2x24xf32, #tpu.memory_space<vmem>>, %arg21: memref<32x128xbf16, #tpu.memory_space<vmem>>, %arg22: memref<24x128xbf16, #tpu.memory_space<vmem>>, %arg23: memref<1x128xf32, #tpu.memory_space<vmem>>, %arg24: memref<2x128xf32, #tpu.memory_space<vmem>>) attributes {dimension_semantics = [], scalar_prefetch = 0 : i64, scratch_operands = 0 : i64, tpu.core_type = #tpu.core_type<tc>} {
    %c0 = arith.constant 0 : index
    %c0_0 = arith.constant 0 : index
    %0 = vector.load %arg0[%c0, %c0_0] : memref<16x32xf32, #tpu.memory_space<vmem>>, vector<16x32xf32>
    %c0_1 = arith.constant 0 : index
    %c0_2 = arith.constant 0 : index
    %1 = vector.load %arg2[%c0_1, %c0_2] : memref<1x32xf32, #tpu.memory_space<vmem>>, vector<1x32xf32>
    %c0_3 = arith.constant 0 : index
    %c0_4 = arith.constant 0 : index
    %2 = vector.load %arg3[%c0_3, %c0_4] : memref<1x32xf32, #tpu.memory_space<vmem>>, vector<1x32xf32>
    %cst = arith.constant dense<0.000000e+00> : vector<16xf32>
    %3 = vector.multi_reduction <add>, %0, %cst [1] : vector<16x32xf32> to vector<16xf32>
    %4 = vector.shape_cast %3 : vector<16xf32> to vector<16x1xf32>
    %cst_5 = arith.constant 3.200000e+01 : f32
    %5 = vector.broadcast %cst_5 : f32 to vector<16x1xf32>
    %6 = arith.divf %4, %5 : vector<16x1xf32>
    %7 = vector.broadcast %6 : vector<16x1xf32> to vector<16x32xf32>
    %8 = arith.subf %0, %7 : vector<16x32xf32>
    %9 = arith.mulf %8, %8 : vector<16x32xf32>
    %cst_6 = arith.constant dense<0.000000e+00> : vector<16xf32>
    %10 = vector.multi_reduction <add>, %9, %cst_6 [1] : vector<16x32xf32> to vector<16xf32>
    %11 = vector.shape_cast %10 : vector<16xf32> to vector<16x1xf32>
    %cst_7 = arith.constant 3.200000e+01 : f32
    %12 = vector.broadcast %cst_7 : f32 to vector<16x1xf32>
    %13 = arith.divf %11, %12 : vector<16x1xf32>
    %14 = vector.broadcast %6 : vector<16x1xf32> to vector<16x32xf32>
    %15 = arith.subf %0, %14 : vector<16x32xf32>
    %cst_8 = arith.constant 9.99999974E-6 : f32
    %16 = vector.broadcast %cst_8 : f32 to vector<16x1xf32>
    %17 = arith.addf %13, %16 : vector<16x1xf32>
    %18 = math.rsqrt %17 : vector<16x1xf32>
    %19 = vector.broadcast %18 : vector<16x1xf32> to vector<16x32xf32>
    %20 = arith.mulf %15, %19 : vector<16x32xf32>
    %21 = vector.broadcast %1 : vector<1x32xf32> to vector<16x32xf32>
    %22 = arith.mulf %20, %21 : vector<16x32xf32>
    %23 = vector.broadcast %2 : vector<1x32xf32> to vector<16x32xf32>
    %24 = arith.addf %22, %23 : vector<16x32xf32>
    %c0_9 = arith.constant 0 : index
    %c0_10 = arith.constant 0 : index
    %25 = vector.load %arg1[%c0_9, %c0_10] : memref<2x8xf32, #tpu.memory_space<vmem>>, vector<2x8xf32>
    %cst_11 = arith.constant 1.000000e+00 : f32
    %26 = vector.broadcast %cst_11 : f32 to vector<2x8xf32>
    %27 = arith.subf %26, %25 : vector<2x8xf32>
    %cst_12 = arith.constant -1.000000e+09 : f32
    %28 = vector.broadcast %cst_12 : f32 to vector<2x8xf32>
    %29 = arith.mulf %27, %28 : vector<2x8xf32>
    %30 = vector.extract_strided_slice %29 {offsets = [0, 0], sizes = [1, 8], strides = [1, 1]} : vector<2x8xf32> to vector<1x8xf32>
    %31 = vector.shape_cast %30 : vector<1x8xf32> to vector<1x8xf32>
    %32 = vector.broadcast %31 : vector<1x8xf32> to vector<8x8xf32>
    %33 = vector.extract_strided_slice %29 {offsets = [1, 0], sizes = [1, 8], strides = [1, 1]} : vector<2x8xf32> to vector<1x8xf32>
    %34 = vector.shape_cast %33 : vector<1x8xf32> to vector<1x8xf32>
    %35 = vector.broadcast %34 : vector<1x8xf32> to vector<8x8xf32>
    %36 = arith.truncf %24 : vector<16x32xf32> to vector<16x32xbf16>
    %c0_13 = arith.constant 0 : index
    %c0_14 = arith.constant 0 : index
    %c0_15 = arith.constant 0 : index
    %37 = vector.load %arg4[%c0_13, %c0_14, %c0_15] : memref<8x32x8xbf16, #tpu.memory_space<vmem>>, vector<1x32x8xbf16>
    %38 = vector.shape_cast %37 : vector<1x32x8xbf16> to vector<32x8xbf16>
    %cst_16 = arith.constant dense<0.000000e+00> : vector<16x8xf32>
    %39 = tpu.matmul %36, %38, %cst_16 {dimension_numbers = #tpu.dot_dimension_numbers<[1], [0], [0], [1], [0, 0, 1, 1], [], []>} : vector<16x32xbf16>, vector<32x8xbf16>, vector<16x8xf32> -> vector<16x8xf32>
    %c0_17 = arith.constant 0 : index
    %c0_18 = arith.constant 0 : index
    %c0_19 = arith.constant 0 : index
    %40 = vector.load %arg5[%c0_17, %c0_18, %c0_19] : memref<8x1x8xf32, #tpu.memory_space<vmem>>, vector<1x1x8xf32>
    %41 = vector.shape_cast %40 : vector<1x1x8xf32> to vector<1x8xf32>
    %42 = vector.broadcast %41 : vector<1x8xf32> to vector<16x8xf32>
    %43 = arith.addf %39, %42 : vector<16x8xf32>
    %c0_20 = arith.constant 0 : index
    %c0_21 = arith.constant 0 : index
    %c0_22 = arith.constant 0 : index
    %44 = vector.load %arg6[%c0_20, %c0_21, %c0_22] : memref<8x32x8xbf16, #tpu.memory_space<vmem>>, vector<1x32x8xbf16>
    %45 = vector.shape_cast %44 : vector<1x32x8xbf16> to vector<32x8xbf16>
    %cst_23 = arith.constant dense<0.000000e+00> : vector<16x8xf32>
    %46 = tpu.matmul %36, %45, %cst_23 {dimension_numbers = #tpu.dot_dimension_numbers<[1], [0], [0], [1], [0, 0, 1, 1], [], []>} : vector<16x32xbf16>, vector<32x8xbf16>, vector<16x8xf32> -> vector<16x8xf32>
    %c0_24 = arith.constant 0 : index
    %c0_25 = arith.constant 0 : index
    %c0_26 = arith.constant 0 : index
    %47 = vector.load %arg7[%c0_24, %c0_25, %c0_26] : memref<8x1x8xf32, #tpu.memory_space<vmem>>, vector<1x1x8xf32>
    %48 = vector.shape_cast %47 : vector<1x1x8xf32> to vector<1x8xf32>
    %49 = vector.broadcast %48 : vector<1x8xf32> to vector<16x8xf32>
    %50 = arith.addf %46, %49 : vector<16x8xf32>
    %c0_27 = arith.constant 0 : index
    %c0_28 = arith.constant 0 : index
    %c0_29 = arith.constant 0 : index
    %51 = vector.load %arg8[%c0_27, %c0_28, %c0_29] : memref<8x32x8xbf16, #tpu.memory_space<vmem>>, vector<1x32x8xbf16>
    %52 = vector.shape_cast %51 : vector<1x32x8xbf16> to vector<32x8xbf16>
    %cst_30 = arith.constant dense<0.000000e+00> : vector<16x8xf32>
    %53 = tpu.matmul %36, %52, %cst_30 {dimension_numbers = #tpu.dot_dimension_numbers<[1], [0], [0], [1], [0, 0, 1, 1], [], []>} : vector<16x32xbf16>, vector<32x8xbf16>, vector<16x8xf32> -> vector<16x8xf32>
    %c0_31 = arith.constant 0 : index
    %c0_32 = arith.constant 0 : index
    %c0_33 = arith.constant 0 : index
    %54 = vector.load %arg9[%c0_31, %c0_32, %c0_33] : memref<8x1x8xf32, #tpu.memory_space<vmem>>, vector<1x1x8xf32>
    %55 = vector.shape_cast %54 : vector<1x1x8xf32> to vector<1x8xf32>
    %56 = vector.broadcast %55 : vector<1x8xf32> to vector<16x8xf32>
    %57 = arith.addf %53, %56 : vector<16x8xf32>
    %c1 = arith.constant 1 : index
    %c0_34 = arith.constant 0 : index
    %c0_35 = arith.constant 0 : index
    %58 = vector.load %arg4[%c1, %c0_34, %c0_35] : memref<8x32x8xbf16, #tpu.memory_space<vmem>>, vector<1x32x8xbf16>
    %59 = vector.shape_cast %58 : vector<1x32x8xbf16> to vector<32x8xbf16>
    %cst_36 = arith.constant dense<0.000000e+00> : vector<16x8xf32>
    %60 = tpu.matmul %36, %59, %cst_36 {dimension_numbers = #tpu.dot_dimension_numbers<[1], [0], [0], [1], [0, 0, 1, 1], [], []>} : vector<16x32xbf16>, vector<32x8xbf16>, vector<16x8xf32> -> vector<16x8xf32>
    %c1_37 = arith.constant 1 : index
    %c0_38 = arith.constant 0 : index
    %c0_39 = arith.constant 0 : index
    %61 = vector.load %arg5[%c1_37, %c0_38, %c0_39] : memref<8x1x8xf32, #tpu.memory_space<vmem>>, vector<1x1x8xf32>
    %62 = vector.shape_cast %61 : vector<1x1x8xf32> to vector<1x8xf32>
    %63 = vector.broadcast %62 : vector<1x8xf32> to vector<16x8xf32>
    %64 = arith.addf %60, %63 : vector<16x8xf32>
    %c1_40 = arith.constant 1 : index
    %c0_41 = arith.constant 0 : index
    %c0_42 = arith.constant 0 : index
    %65 = vector.load %arg6[%c1_40, %c0_41, %c0_42] : memref<8x32x8xbf16, #tpu.memory_space<vmem>>, vector<1x32x8xbf16>
    %66 = vector.shape_cast %65 : vector<1x32x8xbf16> to vector<32x8xbf16>
    %cst_43 = arith.constant dense<0.000000e+00> : vector<16x8xf32>
    %67 = tpu.matmul %36, %66, %cst_43 {dimension_numbers = #tpu.dot_dimension_numbers<[1], [0], [0], [1], [0, 0, 1, 1], [], []>} : vector<16x32xbf16>, vector<32x8xbf16>, vector<16x8xf32> -> vector<16x8xf32>
    %c1_44 = arith.constant 1 : index
    %c0_45 = arith.constant 0 : index
    %c0_46 = arith.constant 0 : index
    %68 = vector.load %arg7[%c1_44, %c0_45, %c0_46] : memref<8x1x8xf32, #tpu.memory_space<vmem>>, vector<1x1x8xf32>
    %69 = vector.shape_cast %68 : vector<1x1x8xf32> to vector<1x8xf32>
    %70 = vector.broadcast %69 : vector<1x8xf32> to vector<16x8xf32>
    %71 = arith.addf %67, %70 : vector<16x8xf32>
    %c1_47 = arith.constant 1 : index
    %c0_48 = arith.constant 0 : index
    %c0_49 = arith.constant 0 : index
    %72 = vector.load %arg8[%c1_47, %c0_48, %c0_49] : memref<8x32x8xbf16, #tpu.memory_space<vmem>>, vector<1x32x8xbf16>
    %73 = vector.shape_cast %72 : vector<1x32x8xbf16> to vector<32x8xbf16>
    %cst_50 = arith.constant dense<0.000000e+00> : vector<16x8xf32>
    %74 = tpu.matmul %36, %73, %cst_50 {dimension_numbers = #tpu.dot_dimension_numbers<[1], [0], [0], [1], [0, 0, 1, 1], [], []>} : vector<16x32xbf16>, vector<32x8xbf16>, vector<16x8xf32> -> vector<16x8xf32>
    %c1_51 = arith.constant 1 : index
    %c0_52 = arith.constant 0 : index
    %c0_53 = arith.constant 0 : index
    %75 = vector.load %arg9[%c1_51, %c0_52, %c0_53] : memref<8x1x8xf32, #tpu.memory_space<vmem>>, vector<1x1x8xf32>
    %76 = vector.shape_cast %75 : vector<1x1x8xf32> to vector<1x8xf32>
    %77 = vector.broadcast %76 : vector<1x8xf32> to vector<16x8xf32>
    %78 = arith.addf %74, %77 : vector<16x8xf32>
    %c2 = arith.constant 2 : index
    %c0_54 = arith.constant 0 : index
    %c0_55 = arith.constant 0 : index
    %79 = vector.load %arg4[%c2, %c0_54, %c0_55] : memref<8x32x8xbf16, #tpu.memory_space<vmem>>, vector<1x32x8xbf16>
    %80 = vector.shape_cast %79 : vector<1x32x8xbf16> to vector<32x8xbf16>
    %cst_56 = arith.constant dense<0.000000e+00> : vector<16x8xf32>
    %81 = tpu.matmul %36, %80, %cst_56 {dimension_numbers = #tpu.dot_dimension_numbers<[1], [0], [0], [1], [0, 0, 1, 1], [], []>} : vector<16x32xbf16>, vector<32x8xbf16>, vector<16x8xf32> -> vector<16x8xf32>
    %c2_57 = arith.constant 2 : index
    %c0_58 = arith.constant 0 : index
    %c0_59 = arith.constant 0 : index
    %82 = vector.load %arg5[%c2_57, %c0_58, %c0_59] : memref<8x1x8xf32, #tpu.memory_space<vmem>>, vector<1x1x8xf32>
    %83 = vector.shape_cast %82 : vector<1x1x8xf32> to vector<1x8xf32>
    %84 = vector.broadcast %83 : vector<1x8xf32> to vector<16x8xf32>
    %85 = arith.addf %81, %84 : vector<16x8xf32>
    %c2_60 = arith.constant 2 : index
    %c0_61 = arith.constant 0 : index
    %c0_62 = arith.constant 0 : index
    %86 = vector.load %arg6[%c2_60, %c0_61, %c0_62] : memref<8x32x8xbf16, #tpu.memory_space<vmem>>, vector<1x32x8xbf16>
    %87 = vector.shape_cast %86 : vector<1x32x8xbf16> to vector<32x8xbf16>
    %cst_63 = arith.constant dense<0.000000e+00> : vector<16x8xf32>
    %88 = tpu.matmul %36, %87, %cst_63 {dimension_numbers = #tpu.dot_dimension_numbers<[1], [0], [0], [1], [0, 0, 1, 1], [], []>} : vector<16x32xbf16>, vector<32x8xbf16>, vector<16x8xf32> -> vector<16x8xf32>
    %c2_64 = arith.constant 2 : index
    %c0_65 = arith.constant 0 : index
    %c0_66 = arith.constant 0 : index
    %89 = vector.load %arg7[%c2_64, %c0_65, %c0_66] : memref<8x1x8xf32, #tpu.memory_space<vmem>>, vector<1x1x8xf32>
    %90 = vector.shape_cast %89 : vector<1x1x8xf32> to vector<1x8xf32>
    %91 = vector.broadcast %90 : vector<1x8xf32> to vector<16x8xf32>
    %92 = arith.addf %88, %91 : vector<16x8xf32>
    %c2_67 = arith.constant 2 : index
    %c0_68 = arith.constant 0 : index
    %c0_69 = arith.constant 0 : index
    %93 = vector.load %arg8[%c2_67, %c0_68, %c0_69] : memref<8x32x8xbf16, #tpu.memory_space<vmem>>, vector<1x32x8xbf16>
    %94 = vector.shape_cast %93 : vector<1x32x8xbf16> to vector<32x8xbf16>
    %cst_70 = arith.constant dense<0.000000e+00> : vector<16x8xf32>
    %95 = tpu.matmul %36, %94, %cst_70 {dimension_numbers = #tpu.dot_dimension_numbers<[1], [0], [0], [1], [0, 0, 1, 1], [], []>} : vector<16x32xbf16>, vector<32x8xbf16>, vector<16x8xf32> -> vector<16x8xf32>
    %c2_71 = arith.constant 2 : index
    %c0_72 = arith.constant 0 : index
    %c0_73 = arith.constant 0 : index
    %96 = vector.load %arg9[%c2_71, %c0_72, %c0_73] : memref<8x1x8xf32, #tpu.memory_space<vmem>>, vector<1x1x8xf32>
    %97 = vector.shape_cast %96 : vector<1x1x8xf32> to vector<1x8xf32>
    %98 = vector.broadcast %97 : vector<1x8xf32> to vector<16x8xf32>
    %99 = arith.addf %95, %98 : vector<16x8xf32>
    %c3 = arith.constant 3 : index
    %c0_74 = arith.constant 0 : index
    %c0_75 = arith.constant 0 : index
    %100 = vector.load %arg4[%c3, %c0_74, %c0_75] : memref<8x32x8xbf16, #tpu.memory_space<vmem>>, vector<1x32x8xbf16>
    %101 = vector.shape_cast %100 : vector<1x32x8xbf16> to vector<32x8xbf16>
    %cst_76 = arith.constant dense<0.000000e+00> : vector<16x8xf32>
    %102 = tpu.matmul %36, %101, %cst_76 {dimension_numbers = #tpu.dot_dimension_numbers<[1], [0], [0], [1], [0, 0, 1, 1], [], []>} : vector<16x32xbf16>, vector<32x8xbf16>, vector<16x8xf32> -> vector<16x8xf32>
    %c3_77 = arith.constant 3 : index
    %c0_78 = arith.constant 0 : index
    %c0_79 = arith.constant 0 : index
    %103 = vector.load %arg5[%c3_77, %c0_78, %c0_79] : memref<8x1x8xf32, #tpu.memory_space<vmem>>, vector<1x1x8xf32>
    %104 = vector.shape_cast %103 : vector<1x1x8xf32> to vector<1x8xf32>
    %105 = vector.broadcast %104 : vector<1x8xf32> to vector<16x8xf32>
    %106 = arith.addf %102, %105 : vector<16x8xf32>
    %c3_80 = arith.constant 3 : index
    %c0_81 = arith.constant 0 : index
    %c0_82 = arith.constant 0 : index
    %107 = vector.load %arg6[%c3_80, %c0_81, %c0_82] : memref<8x32x8xbf16, #tpu.memory_space<vmem>>, vector<1x32x8xbf16>
    %108 = vector.shape_cast %107 : vector<1x32x8xbf16> to vector<32x8xbf16>
    %cst_83 = arith.constant dense<0.000000e+00> : vector<16x8xf32>
    %109 = tpu.matmul %36, %108, %cst_83 {dimension_numbers = #tpu.dot_dimension_numbers<[1], [0], [0], [1], [0, 0, 1, 1], [], []>} : vector<16x32xbf16>, vector<32x8xbf16>, vector<16x8xf32> -> vector<16x8xf32>
    %c3_84 = arith.constant 3 : index
    %c0_85 = arith.constant 0 : index
    %c0_86 = arith.constant 0 : index
    %110 = vector.load %arg7[%c3_84, %c0_85, %c0_86] : memref<8x1x8xf32, #tpu.memory_space<vmem>>, vector<1x1x8xf32>
    %111 = vector.shape_cast %110 : vector<1x1x8xf32> to vector<1x8xf32>
    %112 = vector.broadcast %111 : vector<1x8xf32> to vector<16x8xf32>
    %113 = arith.addf %109, %112 : vector<16x8xf32>
    %c3_87 = arith.constant 3 : index
    %c0_88 = arith.constant 0 : index
    %c0_89 = arith.constant 0 : index
    %114 = vector.load %arg8[%c3_87, %c0_88, %c0_89] : memref<8x32x8xbf16, #tpu.memory_space<vmem>>, vector<1x32x8xbf16>
    %115 = vector.shape_cast %114 : vector<1x32x8xbf16> to vector<32x8xbf16>
    %cst_90 = arith.constant dense<0.000000e+00> : vector<16x8xf32>
    %116 = tpu.matmul %36, %115, %cst_90 {dimension_numbers = #tpu.dot_dimension_numbers<[1], [0], [0], [1], [0, 0, 1, 1], [], []>} : vector<16x32xbf16>, vector<32x8xbf16>, vector<16x8xf32> -> vector<16x8xf32>
    %c3_91 = arith.constant 3 : index
    %c0_92 = arith.constant 0 : index
    %c0_93 = arith.constant 0 : index
    %117 = vector.load %arg9[%c3_91, %c0_92, %c0_93] : memref<8x1x8xf32, #tpu.memory_space<vmem>>, vector<1x1x8xf32>
    %118 = vector.shape_cast %117 : vector<1x1x8xf32> to vector<1x8xf32>
    %119 = vector.broadcast %118 : vector<1x8xf32> to vector<16x8xf32>
    %120 = arith.addf %116, %119 : vector<16x8xf32>
    %121 = vector.extract_strided_slice %43 {offsets = [0, 0], sizes = [8, 8], strides = [1, 1]} : vector<16x8xf32> to vector<8x8xf32>
    %122 = arith.truncf %121 : vector<8x8xf32> to vector<8x8xbf16>
    %123 = vector.extract_strided_slice %50 {offsets = [0, 0], sizes = [8, 8], strides = [1, 1]} : vector<16x8xf32> to vector<8x8xf32>
    %124 = arith.truncf %123 : vector<8x8xf32> to vector<8x8xbf16>
    %125 = vector.extract_strided_slice %57 {offsets = [0, 0], sizes = [8, 8], strides = [1, 1]} : vector<16x8xf32> to vector<8x8xf32>
    %126 = arith.truncf %125 : vector<8x8xf32> to vector<8x8xbf16>
    %cst_94 = arith.constant dense<0.000000e+00> : vector<8x8xf32>
    %127 = tpu.matmul %122, %124, %cst_94 {dimension_numbers = #tpu.dot_dimension_numbers<[1], [1], [0], [0], [0, 0, 1, 0], [], []>} : vector<8x8xbf16>, vector<8x8xbf16>, vector<8x8xf32> -> vector<8x8xf32>
    %cst_95 = arith.constant 0.353553385 : f32
    %128 = vector.broadcast %cst_95 : f32 to vector<8x8xf32>
    %129 = arith.mulf %127, %128 : vector<8x8xf32>
    %130 = arith.addf %129, %32 : vector<8x8xf32>
    %cst_96 = arith.constant dense<0xFF800000> : vector<8xf32>
    %131 = vector.multi_reduction <maximumf>, %130, %cst_96 [1] : vector<8x8xf32> to vector<8xf32>
    %132 = vector.shape_cast %131 : vector<8xf32> to vector<8x1xf32>
    %133 = vector.broadcast %132 : vector<8x1xf32> to vector<8x8xf32>
    %134 = arith.subf %130, %133 : vector<8x8xf32>
    %135 = math.exp %134 : vector<8x8xf32>
    %cst_97 = arith.constant dense<0.000000e+00> : vector<8xf32>
    %136 = vector.multi_reduction <add>, %135, %cst_97 [1] : vector<8x8xf32> to vector<8xf32>
    %137 = vector.shape_cast %136 : vector<8xf32> to vector<8x1xf32>
    %138 = tpu.reciprocal %137 {approx = true} : vector<8x1xf32> -> vector<8x1xf32>
    %139 = vector.broadcast %138 : vector<8x1xf32> to vector<8x8xf32>
    %140 = arith.mulf %135, %139 : vector<8x8xf32>
    %141 = arith.truncf %140 : vector<8x8xf32> to vector<8x8xbf16>
    %cst_98 = arith.constant dense<0.000000e+00> : vector<8x8xf32>
    %142 = tpu.matmul %141, %126, %cst_98 {dimension_numbers = #tpu.dot_dimension_numbers<[1], [0], [0], [1], [0, 0, 1, 1], [], []>} : vector<8x8xbf16>, vector<8x8xbf16>, vector<8x8xf32> -> vector<8x8xf32>
    %143 = arith.truncf %142 : vector<8x8xf32> to vector<8x8xbf16>
    %c0_99 = arith.constant 0 : index
    %c0_100 = arith.constant 0 : index
    %c0_101 = arith.constant 0 : index
    %144 = vector.load %arg10[%c0_99, %c0_100, %c0_101] : memref<8x8x32xbf16, #tpu.memory_space<vmem>>, vector<1x8x32xbf16>
    %145 = vector.shape_cast %144 : vector<1x8x32xbf16> to vector<8x32xbf16>
    %cst_102 = arith.constant dense<0.000000e+00> : vector<8x32xf32>
    %146 = tpu.matmul %143, %145, %cst_102 {dimension_numbers = #tpu.dot_dimension_numbers<[1], [0], [0], [1], [0, 0, 1, 1], [], []>} : vector<8x8xbf16>, vector<8x32xbf16>, vector<8x32xf32> -> vector<8x32xf32>
    %147 = vector.extract_strided_slice %64 {offsets = [0, 0], sizes = [8, 8], strides = [1, 1]} : vector<16x8xf32> to vector<8x8xf32>
    %148 = arith.truncf %147 : vector<8x8xf32> to vector<8x8xbf16>
    %149 = vector.extract_strided_slice %71 {offsets = [0, 0], sizes = [8, 8], strides = [1, 1]} : vector<16x8xf32> to vector<8x8xf32>
    %150 = arith.truncf %149 : vector<8x8xf32> to vector<8x8xbf16>
    %151 = vector.extract_strided_slice %78 {offsets = [0, 0], sizes = [8, 8], strides = [1, 1]} : vector<16x8xf32> to vector<8x8xf32>
    %152 = arith.truncf %151 : vector<8x8xf32> to vector<8x8xbf16>
    %cst_103 = arith.constant dense<0.000000e+00> : vector<8x8xf32>
    %153 = tpu.matmul %148, %150, %cst_103 {dimension_numbers = #tpu.dot_dimension_numbers<[1], [1], [0], [0], [0, 0, 1, 0], [], []>} : vector<8x8xbf16>, vector<8x8xbf16>, vector<8x8xf32> -> vector<8x8xf32>
    %cst_104 = arith.constant 0.353553385 : f32
    %154 = vector.broadcast %cst_104 : f32 to vector<8x8xf32>
    %155 = arith.mulf %153, %154 : vector<8x8xf32>
    %156 = arith.addf %155, %32 : vector<8x8xf32>
    %cst_105 = arith.constant dense<0xFF800000> : vector<8xf32>
    %157 = vector.multi_reduction <maximumf>, %156, %cst_105 [1] : vector<8x8xf32> to vector<8xf32>
    %158 = vector.shape_cast %157 : vector<8xf32> to vector<8x1xf32>
    %159 = vector.broadcast %158 : vector<8x1xf32> to vector<8x8xf32>
    %160 = arith.subf %156, %159 : vector<8x8xf32>
    %161 = math.exp %160 : vector<8x8xf32>
    %cst_106 = arith.constant dense<0.000000e+00> : vector<8xf32>
    %162 = vector.multi_reduction <add>, %161, %cst_106 [1] : vector<8x8xf32> to vector<8xf32>
    %163 = vector.shape_cast %162 : vector<8xf32> to vector<8x1xf32>
    %164 = tpu.reciprocal %163 {approx = true} : vector<8x1xf32> -> vector<8x1xf32>
    %165 = vector.broadcast %164 : vector<8x1xf32> to vector<8x8xf32>
    %166 = arith.mulf %161, %165 : vector<8x8xf32>
    %167 = arith.truncf %166 : vector<8x8xf32> to vector<8x8xbf16>
    %cst_107 = arith.constant dense<0.000000e+00> : vector<8x8xf32>
    %168 = tpu.matmul %167, %152, %cst_107 {dimension_numbers = #tpu.dot_dimension_numbers<[1], [0], [0], [1], [0, 0, 1, 1], [], []>} : vector<8x8xbf16>, vector<8x8xbf16>, vector<8x8xf32> -> vector<8x8xf32>
    %169 = arith.truncf %168 : vector<8x8xf32> to vector<8x8xbf16>
    %c1_108 = arith.constant 1 : index
    %c0_109 = arith.constant 0 : index
    %c0_110 = arith.constant 0 : index
    %170 = vector.load %arg10[%c1_108, %c0_109, %c0_110] : memref<8x8x32xbf16, #tpu.memory_space<vmem>>, vector<1x8x32xbf16>
    %171 = vector.shape_cast %170 : vector<1x8x32xbf16> to vector<8x32xbf16>
    %cst_111 = arith.constant dense<0.000000e+00> : vector<8x32xf32>
    %172 = tpu.matmul %169, %171, %cst_111 {dimension_numbers = #tpu.dot_dimension_numbers<[1], [0], [0], [1], [0, 0, 1, 1], [], []>} : vector<8x8xbf16>, vector<8x32xbf16>, vector<8x32xf32> -> vector<8x32xf32>
    %173 = arith.addf %146, %172 : vector<8x32xf32>
    %174 = vector.extract_strided_slice %85 {offsets = [0, 0], sizes = [8, 8], strides = [1, 1]} : vector<16x8xf32> to vector<8x8xf32>
    %175 = arith.truncf %174 : vector<8x8xf32> to vector<8x8xbf16>
    %176 = vector.extract_strided_slice %92 {offsets = [0, 0], sizes = [8, 8], strides = [1, 1]} : vector<16x8xf32> to vector<8x8xf32>
    %177 = arith.truncf %176 : vector<8x8xf32> to vector<8x8xbf16>
    %178 = vector.extract_strided_slice %99 {offsets = [0, 0], sizes = [8, 8], strides = [1, 1]} : vector<16x8xf32> to vector<8x8xf32>
    %179 = arith.truncf %178 : vector<8x8xf32> to vector<8x8xbf16>
    %cst_112 = arith.constant dense<0.000000e+00> : vector<8x8xf32>
    %180 = tpu.matmul %175, %177, %cst_112 {dimension_numbers = #tpu.dot_dimension_numbers<[1], [1], [0], [0], [0, 0, 1, 0], [], []>} : vector<8x8xbf16>, vector<8x8xbf16>, vector<8x8xf32> -> vector<8x8xf32>
    %cst_113 = arith.constant 0.353553385 : f32
    %181 = vector.broadcast %cst_113 : f32 to vector<8x8xf32>
    %182 = arith.mulf %180, %181 : vector<8x8xf32>
    %183 = arith.addf %182, %32 : vector<8x8xf32>
    %cst_114 = arith.constant dense<0xFF800000> : vector<8xf32>
    %184 = vector.multi_reduction <maximumf>, %183, %cst_114 [1] : vector<8x8xf32> to vector<8xf32>
    %185 = vector.shape_cast %184 : vector<8xf32> to vector<8x1xf32>
    %186 = vector.broadcast %185 : vector<8x1xf32> to vector<8x8xf32>
    %187 = arith.subf %183, %186 : vector<8x8xf32>
    %188 = math.exp %187 : vector<8x8xf32>
    %cst_115 = arith.constant dense<0.000000e+00> : vector<8xf32>
    %189 = vector.multi_reduction <add>, %188, %cst_115 [1] : vector<8x8xf32> to vector<8xf32>
    %190 = vector.shape_cast %189 : vector<8xf32> to vector<8x1xf32>
    %191 = tpu.reciprocal %190 {approx = true} : vector<8x1xf32> -> vector<8x1xf32>
    %192 = vector.broadcast %191 : vector<8x1xf32> to vector<8x8xf32>
    %193 = arith.mulf %188, %192 : vector<8x8xf32>
    %194 = arith.truncf %193 : vector<8x8xf32> to vector<8x8xbf16>
    %cst_116 = arith.constant dense<0.000000e+00> : vector<8x8xf32>
    %195 = tpu.matmul %194, %179, %cst_116 {dimension_numbers = #tpu.dot_dimension_numbers<[1], [0], [0], [1], [0, 0, 1, 1], [], []>} : vector<8x8xbf16>, vector<8x8xbf16>, vector<8x8xf32> -> vector<8x8xf32>
    %196 = arith.truncf %195 : vector<8x8xf32> to vector<8x8xbf16>
    %c2_117 = arith.constant 2 : index
    %c0_118 = arith.constant 0 : index
    %c0_119 = arith.constant 0 : index
    %197 = vector.load %arg10[%c2_117, %c0_118, %c0_119] : memref<8x8x32xbf16, #tpu.memory_space<vmem>>, vector<1x8x32xbf16>
    %198 = vector.shape_cast %197 : vector<1x8x32xbf16> to vector<8x32xbf16>
    %cst_120 = arith.constant dense<0.000000e+00> : vector<8x32xf32>
    %199 = tpu.matmul %196, %198, %cst_120 {dimension_numbers = #tpu.dot_dimension_numbers<[1], [0], [0], [1], [0, 0, 1, 1], [], []>} : vector<8x8xbf16>, vector<8x32xbf16>, vector<8x32xf32> -> vector<8x32xf32>
    %200 = arith.addf %173, %199 : vector<8x32xf32>
    %201 = vector.extract_strided_slice %106 {offsets = [0, 0], sizes = [8, 8], strides = [1, 1]} : vector<16x8xf32> to vector<8x8xf32>
    %202 = arith.truncf %201 : vector<8x8xf32> to vector<8x8xbf16>
    %203 = vector.extract_strided_slice %113 {offsets = [0, 0], sizes = [8, 8], strides = [1, 1]} : vector<16x8xf32> to vector<8x8xf32>
    %204 = arith.truncf %203 : vector<8x8xf32> to vector<8x8xbf16>
    %205 = vector.extract_strided_slice %120 {offsets = [0, 0], sizes = [8, 8], strides = [1, 1]} : vector<16x8xf32> to vector<8x8xf32>
    %206 = arith.truncf %205 : vector<8x8xf32> to vector<8x8xbf16>
    %cst_121 = arith.constant dense<0.000000e+00> : vector<8x8xf32>
    %207 = tpu.matmul %202, %204, %cst_121 {dimension_numbers = #tpu.dot_dimension_numbers<[1], [1], [0], [0], [0, 0, 1, 0], [], []>} : vector<8x8xbf16>, vector<8x8xbf16>, vector<8x8xf32> -> vector<8x8xf32>
    %cst_122 = arith.constant 0.353553385 : f32
    %208 = vector.broadcast %cst_122 : f32 to vector<8x8xf32>
    %209 = arith.mulf %207, %208 : vector<8x8xf32>
    %210 = arith.addf %209, %32 : vector<8x8xf32>
    %cst_123 = arith.constant dense<0xFF800000> : vector<8xf32>
    %211 = vector.multi_reduction <maximumf>, %210, %cst_123 [1] : vector<8x8xf32> to vector<8xf32>
    %212 = vector.shape_cast %211 : vector<8xf32> to vector<8x1xf32>
    %213 = vector.broadcast %212 : vector<8x1xf32> to vector<8x8xf32>
    %214 = arith.subf %210, %213 : vector<8x8xf32>
    %215 = math.exp %214 : vector<8x8xf32>
    %cst_124 = arith.constant dense<0.000000e+00> : vector<8xf32>
    %216 = vector.multi_reduction <add>, %215, %cst_124 [1] : vector<8x8xf32> to vector<8xf32>
    %217 = vector.shape_cast %216 : vector<8xf32> to vector<8x1xf32>
    %218 = tpu.reciprocal %217 {approx = true} : vector<8x1xf32> -> vector<8x1xf32>
    %219 = vector.broadcast %218 : vector<8x1xf32> to vector<8x8xf32>
    %220 = arith.mulf %215, %219 : vector<8x8xf32>
    %221 = arith.truncf %220 : vector<8x8xf32> to vector<8x8xbf16>
    %cst_125 = arith.constant dense<0.000000e+00> : vector<8x8xf32>
    %222 = tpu.matmul %221, %206, %cst_125 {dimension_numbers = #tpu.dot_dimension_numbers<[1], [0], [0], [1], [0, 0, 1, 1], [], []>} : vector<8x8xbf16>, vector<8x8xbf16>, vector<8x8xf32> -> vector<8x8xf32>
    %223 = arith.truncf %222 : vector<8x8xf32> to vector<8x8xbf16>
    %c3_126 = arith.constant 3 : index
    %c0_127 = arith.constant 0 : index
    %c0_128 = arith.constant 0 : index
    %224 = vector.load %arg10[%c3_126, %c0_127, %c0_128] : memref<8x8x32xbf16, #tpu.memory_space<vmem>>, vector<1x8x32xbf16>
    %225 = vector.shape_cast %224 : vector<1x8x32xbf16> to vector<8x32xbf16>
    %cst_129 = arith.constant dense<0.000000e+00> : vector<8x32xf32>
    %226 = tpu.matmul %223, %225, %cst_129 {dimension_numbers = #tpu.dot_dimension_numbers<[1], [0], [0], [1], [0, 0, 1, 1], [], []>} : vector<8x8xbf16>, vector<8x32xbf16>, vector<8x32xf32> -> vector<8x32xf32>
    %227 = arith.addf %200, %226 : vector<8x32xf32>
    %228 = vector.extract_strided_slice %43 {offsets = [8, 0], sizes = [8, 8], strides = [1, 1]} : vector<16x8xf32> to vector<8x8xf32>
    %229 = arith.truncf %228 : vector<8x8xf32> to vector<8x8xbf16>
    %230 = vector.extract_strided_slice %50 {offsets = [8, 0], sizes = [8, 8], strides = [1, 1]} : vector<16x8xf32> to vector<8x8xf32>
    %231 = arith.truncf %230 : vector<8x8xf32> to vector<8x8xbf16>
    %232 = vector.extract_strided_slice %57 {offsets = [8, 0], sizes = [8, 8], strides = [1, 1]} : vector<16x8xf32> to vector<8x8xf32>
    %233 = arith.truncf %232 : vector<8x8xf32> to vector<8x8xbf16>
    %cst_130 = arith.constant dense<0.000000e+00> : vector<8x8xf32>
    %234 = tpu.matmul %229, %231, %cst_130 {dimension_numbers = #tpu.dot_dimension_numbers<[1], [1], [0], [0], [0, 0, 1, 0], [], []>} : vector<8x8xbf16>, vector<8x8xbf16>, vector<8x8xf32> -> vector<8x8xf32>
    %cst_131 = arith.constant 0.353553385 : f32
    %235 = vector.broadcast %cst_131 : f32 to vector<8x8xf32>
    %236 = arith.mulf %234, %235 : vector<8x8xf32>
    %237 = arith.addf %236, %35 : vector<8x8xf32>
    %cst_132 = arith.constant dense<0xFF800000> : vector<8xf32>
    %238 = vector.multi_reduction <maximumf>, %237, %cst_132 [1] : vector<8x8xf32> to vector<8xf32>
    %239 = vector.shape_cast %238 : vector<8xf32> to vector<8x1xf32>
    %240 = vector.broadcast %239 : vector<8x1xf32> to vector<8x8xf32>
    %241 = arith.subf %237, %240 : vector<8x8xf32>
    %242 = math.exp %241 : vector<8x8xf32>
    %cst_133 = arith.constant dense<0.000000e+00> : vector<8xf32>
    %243 = vector.multi_reduction <add>, %242, %cst_133 [1] : vector<8x8xf32> to vector<8xf32>
    %244 = vector.shape_cast %243 : vector<8xf32> to vector<8x1xf32>
    %245 = tpu.reciprocal %244 {approx = true} : vector<8x1xf32> -> vector<8x1xf32>
    %246 = vector.broadcast %245 : vector<8x1xf32> to vector<8x8xf32>
    %247 = arith.mulf %242, %246 : vector<8x8xf32>
    %248 = arith.truncf %247 : vector<8x8xf32> to vector<8x8xbf16>
    %cst_134 = arith.constant dense<0.000000e+00> : vector<8x8xf32>
    %249 = tpu.matmul %248, %233, %cst_134 {dimension_numbers = #tpu.dot_dimension_numbers<[1], [0], [0], [1], [0, 0, 1, 1], [], []>} : vector<8x8xbf16>, vector<8x8xbf16>, vector<8x8xf32> -> vector<8x8xf32>
    %250 = arith.truncf %249 : vector<8x8xf32> to vector<8x8xbf16>
    %c0_135 = arith.constant 0 : index
    %c0_136 = arith.constant 0 : index
    %c0_137 = arith.constant 0 : index
    %251 = vector.load %arg10[%c0_135, %c0_136, %c0_137] : memref<8x8x32xbf16, #tpu.memory_space<vmem>>, vector<1x8x32xbf16>
    %252 = vector.shape_cast %251 : vector<1x8x32xbf16> to vector<8x32xbf16>
    %cst_138 = arith.constant dense<0.000000e+00> : vector<8x32xf32>
    %253 = tpu.matmul %250, %252, %cst_138 {dimension_numbers = #tpu.dot_dimension_numbers<[1], [0], [0], [1], [0, 0, 1, 1], [], []>} : vector<8x8xbf16>, vector<8x32xbf16>, vector<8x32xf32> -> vector<8x32xf32>
    %254 = vector.extract_strided_slice %64 {offsets = [8, 0], sizes = [8, 8], strides = [1, 1]} : vector<16x8xf32> to vector<8x8xf32>
    %255 = arith.truncf %254 : vector<8x8xf32> to vector<8x8xbf16>
    %256 = vector.extract_strided_slice %71 {offsets = [8, 0], sizes = [8, 8], strides = [1, 1]} : vector<16x8xf32> to vector<8x8xf32>
    %257 = arith.truncf %256 : vector<8x8xf32> to vector<8x8xbf16>
    %258 = vector.extract_strided_slice %78 {offsets = [8, 0], sizes = [8, 8], strides = [1, 1]} : vector<16x8xf32> to vector<8x8xf32>
    %259 = arith.truncf %258 : vector<8x8xf32> to vector<8x8xbf16>
    %cst_139 = arith.constant dense<0.000000e+00> : vector<8x8xf32>
    %260 = tpu.matmul %255, %257, %cst_139 {dimension_numbers = #tpu.dot_dimension_numbers<[1], [1], [0], [0], [0, 0, 1, 0], [], []>} : vector<8x8xbf16>, vector<8x8xbf16>, vector<8x8xf32> -> vector<8x8xf32>
    %cst_140 = arith.constant 0.353553385 : f32
    %261 = vector.broadcast %cst_140 : f32 to vector<8x8xf32>
    %262 = arith.mulf %260, %261 : vector<8x8xf32>
    %263 = arith.addf %262, %35 : vector<8x8xf32>
    %cst_141 = arith.constant dense<0xFF800000> : vector<8xf32>
    %264 = vector.multi_reduction <maximumf>, %263, %cst_141 [1] : vector<8x8xf32> to vector<8xf32>
    %265 = vector.shape_cast %264 : vector<8xf32> to vector<8x1xf32>
    %266 = vector.broadcast %265 : vector<8x1xf32> to vector<8x8xf32>
    %267 = arith.subf %263, %266 : vector<8x8xf32>
    %268 = math.exp %267 : vector<8x8xf32>
    %cst_142 = arith.constant dense<0.000000e+00> : vector<8xf32>
    %269 = vector.multi_reduction <add>, %268, %cst_142 [1] : vector<8x8xf32> to vector<8xf32>
    %270 = vector.shape_cast %269 : vector<8xf32> to vector<8x1xf32>
    %271 = tpu.reciprocal %270 {approx = true} : vector<8x1xf32> -> vector<8x1xf32>
    %272 = vector.broadcast %271 : vector<8x1xf32> to vector<8x8xf32>
    %273 = arith.mulf %268, %272 : vector<8x8xf32>
    %274 = arith.truncf %273 : vector<8x8xf32> to vector<8x8xbf16>
    %cst_143 = arith.constant dense<0.000000e+00> : vector<8x8xf32>
    %275 = tpu.matmul %274, %259, %cst_143 {dimension_numbers = #tpu.dot_dimension_numbers<[1], [0], [0], [1], [0, 0, 1, 1], [], []>} : vector<8x8xbf16>, vector<8x8xbf16>, vector<8x8xf32> -> vector<8x8xf32>
    %276 = arith.truncf %275 : vector<8x8xf32> to vector<8x8xbf16>
    %c1_144 = arith.constant 1 : index
    %c0_145 = arith.constant 0 : index
    %c0_146 = arith.constant 0 : index
    %277 = vector.load %arg10[%c1_144, %c0_145, %c0_146] : memref<8x8x32xbf16, #tpu.memory_space<vmem>>, vector<1x8x32xbf16>
    %278 = vector.shape_cast %277 : vector<1x8x32xbf16> to vector<8x32xbf16>
    %cst_147 = arith.constant dense<0.000000e+00> : vector<8x32xf32>
    %279 = tpu.matmul %276, %278, %cst_147 {dimension_numbers = #tpu.dot_dimension_numbers<[1], [0], [0], [1], [0, 0, 1, 1], [], []>} : vector<8x8xbf16>, vector<8x32xbf16>, vector<8x32xf32> -> vector<8x32xf32>
    %280 = arith.addf %253, %279 : vector<8x32xf32>
    %281 = vector.extract_strided_slice %85 {offsets = [8, 0], sizes = [8, 8], strides = [1, 1]} : vector<16x8xf32> to vector<8x8xf32>
    %282 = arith.truncf %281 : vector<8x8xf32> to vector<8x8xbf16>
    %283 = vector.extract_strided_slice %92 {offsets = [8, 0], sizes = [8, 8], strides = [1, 1]} : vector<16x8xf32> to vector<8x8xf32>
    %284 = arith.truncf %283 : vector<8x8xf32> to vector<8x8xbf16>
    %285 = vector.extract_strided_slice %99 {offsets = [8, 0], sizes = [8, 8], strides = [1, 1]} : vector<16x8xf32> to vector<8x8xf32>
    %286 = arith.truncf %285 : vector<8x8xf32> to vector<8x8xbf16>
    %cst_148 = arith.constant dense<0.000000e+00> : vector<8x8xf32>
    %287 = tpu.matmul %282, %284, %cst_148 {dimension_numbers = #tpu.dot_dimension_numbers<[1], [1], [0], [0], [0, 0, 1, 0], [], []>} : vector<8x8xbf16>, vector<8x8xbf16>, vector<8x8xf32> -> vector<8x8xf32>
    %cst_149 = arith.constant 0.353553385 : f32
    %288 = vector.broadcast %cst_149 : f32 to vector<8x8xf32>
    %289 = arith.mulf %287, %288 : vector<8x8xf32>
    %290 = arith.addf %289, %35 : vector<8x8xf32>
    %cst_150 = arith.constant dense<0xFF800000> : vector<8xf32>
    %291 = vector.multi_reduction <maximumf>, %290, %cst_150 [1] : vector<8x8xf32> to vector<8xf32>
    %292 = vector.shape_cast %291 : vector<8xf32> to vector<8x1xf32>
    %293 = vector.broadcast %292 : vector<8x1xf32> to vector<8x8xf32>
    %294 = arith.subf %290, %293 : vector<8x8xf32>
    %295 = math.exp %294 : vector<8x8xf32>
    %cst_151 = arith.constant dense<0.000000e+00> : vector<8xf32>
    %296 = vector.multi_reduction <add>, %295, %cst_151 [1] : vector<8x8xf32> to vector<8xf32>
    %297 = vector.shape_cast %296 : vector<8xf32> to vector<8x1xf32>
    %298 = tpu.reciprocal %297 {approx = true} : vector<8x1xf32> -> vector<8x1xf32>
    %299 = vector.broadcast %298 : vector<8x1xf32> to vector<8x8xf32>
    %300 = arith.mulf %295, %299 : vector<8x8xf32>
    %301 = arith.truncf %300 : vector<8x8xf32> to vector<8x8xbf16>
    %cst_152 = arith.constant dense<0.000000e+00> : vector<8x8xf32>
    %302 = tpu.matmul %301, %286, %cst_152 {dimension_numbers = #tpu.dot_dimension_numbers<[1], [0], [0], [1], [0, 0, 1, 1], [], []>} : vector<8x8xbf16>, vector<8x8xbf16>, vector<8x8xf32> -> vector<8x8xf32>
    %303 = arith.truncf %302 : vector<8x8xf32> to vector<8x8xbf16>
    %c2_153 = arith.constant 2 : index
    %c0_154 = arith.constant 0 : index
    %c0_155 = arith.constant 0 : index
    %304 = vector.load %arg10[%c2_153, %c0_154, %c0_155] : memref<8x8x32xbf16, #tpu.memory_space<vmem>>, vector<1x8x32xbf16>
    %305 = vector.shape_cast %304 : vector<1x8x32xbf16> to vector<8x32xbf16>
    %cst_156 = arith.constant dense<0.000000e+00> : vector<8x32xf32>
    %306 = tpu.matmul %303, %305, %cst_156 {dimension_numbers = #tpu.dot_dimension_numbers<[1], [0], [0], [1], [0, 0, 1, 1], [], []>} : vector<8x8xbf16>, vector<8x32xbf16>, vector<8x32xf32> -> vector<8x32xf32>
    %307 = arith.addf %280, %306 : vector<8x32xf32>
    %308 = vector.extract_strided_slice %106 {offsets = [8, 0], sizes = [8, 8], strides = [1, 1]} : vector<16x8xf32> to vector<8x8xf32>
    %309 = arith.truncf %308 : vector<8x8xf32> to vector<8x8xbf16>
    %310 = vector.extract_strided_slice %113 {offsets = [8, 0], sizes = [8, 8], strides = [1, 1]} : vector<16x8xf32> to vector<8x8xf32>
    %311 = arith.truncf %310 : vector<8x8xf32> to vector<8x8xbf16>
    %312 = vector.extract_strided_slice %120 {offsets = [8, 0], sizes = [8, 8], strides = [1, 1]} : vector<16x8xf32> to vector<8x8xf32>
    %313 = arith.truncf %312 : vector<8x8xf32> to vector<8x8xbf16>
    %cst_157 = arith.constant dense<0.000000e+00> : vector<8x8xf32>
    %314 = tpu.matmul %309, %311, %cst_157 {dimension_numbers = #tpu.dot_dimension_numbers<[1], [1], [0], [0], [0, 0, 1, 0], [], []>} : vector<8x8xbf16>, vector<8x8xbf16>, vector<8x8xf32> -> vector<8x8xf32>
    %cst_158 = arith.constant 0.353553385 : f32
    %315 = vector.broadcast %cst_158 : f32 to vector<8x8xf32>
    %316 = arith.mulf %314, %315 : vector<8x8xf32>
    %317 = arith.addf %316, %35 : vector<8x8xf32>
    %cst_159 = arith.constant dense<0xFF800000> : vector<8xf32>
    %318 = vector.multi_reduction <maximumf>, %317, %cst_159 [1] : vector<8x8xf32> to vector<8xf32>
    %319 = vector.shape_cast %318 : vector<8xf32> to vector<8x1xf32>
    %320 = vector.broadcast %319 : vector<8x1xf32> to vector<8x8xf32>
    %321 = arith.subf %317, %320 : vector<8x8xf32>
    %322 = math.exp %321 : vector<8x8xf32>
    %cst_160 = arith.constant dense<0.000000e+00> : vector<8xf32>
    %323 = vector.multi_reduction <add>, %322, %cst_160 [1] : vector<8x8xf32> to vector<8xf32>
    %324 = vector.shape_cast %323 : vector<8xf32> to vector<8x1xf32>
    %325 = tpu.reciprocal %324 {approx = true} : vector<8x1xf32> -> vector<8x1xf32>
    %326 = vector.broadcast %325 : vector<8x1xf32> to vector<8x8xf32>
    %327 = arith.mulf %322, %326 : vector<8x8xf32>
    %328 = arith.truncf %327 : vector<8x8xf32> to vector<8x8xbf16>
    %cst_161 = arith.constant dense<0.000000e+00> : vector<8x8xf32>
    %329 = tpu.matmul %328, %313, %cst_161 {dimension_numbers = #tpu.dot_dimension_numbers<[1], [0], [0], [1], [0, 0, 1, 1], [], []>} : vector<8x8xbf16>, vector<8x8xbf16>, vector<8x8xf32> -> vector<8x8xf32>
    %330 = arith.truncf %329 : vector<8x8xf32> to vector<8x8xbf16>
    %c3_162 = arith.constant 3 : index
    %c0_163 = arith.constant 0 : index
    %c0_164 = arith.constant 0 : index
    %331 = vector.load %arg10[%c3_162, %c0_163, %c0_164] : memref<8x8x32xbf16, #tpu.memory_space<vmem>>, vector<1x8x32xbf16>
    %332 = vector.shape_cast %331 : vector<1x8x32xbf16> to vector<8x32xbf16>
    %cst_165 = arith.constant dense<0.000000e+00> : vector<8x32xf32>
    %333 = tpu.matmul %330, %332, %cst_165 {dimension_numbers = #tpu.dot_dimension_numbers<[1], [0], [0], [1], [0, 0, 1, 1], [], []>} : vector<8x8xbf16>, vector<8x32xbf16>, vector<8x32xf32> -> vector<8x32xf32>
    %334 = arith.addf %307, %333 : vector<8x32xf32>
    %335 = tpu.concatenate %227, %334 in 0 : vector<8x32xf32>, vector<8x32xf32> -> vector<16x32xf32>
    %c0_166 = arith.constant 0 : index
    %c0_167 = arith.constant 0 : index
    %c0_168 = arith.constant 0 : index
    %336 = vector.load %arg11[%c0_166, %c0_167, %c0_168] : memref<2x1x32xf32, #tpu.memory_space<vmem>>, vector<1x1x32xf32>
    %337 = vector.shape_cast %336 : vector<1x1x32xf32> to vector<1x32xf32>
    %338 = vector.broadcast %337 : vector<1x32xf32> to vector<16x32xf32>
    %339 = arith.addf %335, %338 : vector<16x32xf32>
    %340 = arith.addf %24, %339 : vector<16x32xf32>
    %c0_169 = arith.constant 0 : index
    %c0_170 = arith.constant 0 : index
    %c0_171 = arith.constant 0 : index
    %341 = vector.load %arg12[%c0_169, %c0_170, %c0_171] : memref<2x1x32xf32, #tpu.memory_space<vmem>>, vector<1x1x32xf32>
    %342 = vector.shape_cast %341 : vector<1x1x32xf32> to vector<1x32xf32>
    %c0_172 = arith.constant 0 : index
    %c0_173 = arith.constant 0 : index
    %c0_174 = arith.constant 0 : index
    %343 = vector.load %arg13[%c0_172, %c0_173, %c0_174] : memref<2x1x32xf32, #tpu.memory_space<vmem>>, vector<1x1x32xf32>
    %344 = vector.shape_cast %343 : vector<1x1x32xf32> to vector<1x32xf32>
    %cst_175 = arith.constant dense<0.000000e+00> : vector<16xf32>
    %345 = vector.multi_reduction <add>, %340, %cst_175 [1] : vector<16x32xf32> to vector<16xf32>
    %346 = vector.shape_cast %345 : vector<16xf32> to vector<16x1xf32>
    %cst_176 = arith.constant 3.200000e+01 : f32
    %347 = vector.broadcast %cst_176 : f32 to vector<16x1xf32>
    %348 = arith.divf %346, %347 : vector<16x1xf32>
    %349 = vector.broadcast %348 : vector<16x1xf32> to vector<16x32xf32>
    %350 = arith.subf %340, %349 : vector<16x32xf32>
    %351 = arith.mulf %350, %350 : vector<16x32xf32>
    %cst_177 = arith.constant dense<0.000000e+00> : vector<16xf32>
    %352 = vector.multi_reduction <add>, %351, %cst_177 [1] : vector<16x32xf32> to vector<16xf32>
    %353 = vector.shape_cast %352 : vector<16xf32> to vector<16x1xf32>
    %cst_178 = arith.constant 3.200000e+01 : f32
    %354 = vector.broadcast %cst_178 : f32 to vector<16x1xf32>
    %355 = arith.divf %353, %354 : vector<16x1xf32>
    %356 = vector.broadcast %348 : vector<16x1xf32> to vector<16x32xf32>
    %357 = arith.subf %340, %356 : vector<16x32xf32>
    %cst_179 = arith.constant 9.99999974E-6 : f32
    %358 = vector.broadcast %cst_179 : f32 to vector<16x1xf32>
    %359 = arith.addf %355, %358 : vector<16x1xf32>
    %360 = math.rsqrt %359 : vector<16x1xf32>
    %361 = vector.broadcast %360 : vector<16x1xf32> to vector<16x32xf32>
    %362 = arith.mulf %357, %361 : vector<16x32xf32>
    %363 = vector.broadcast %342 : vector<1x32xf32> to vector<16x32xf32>
    %364 = arith.mulf %362, %363 : vector<16x32xf32>
    %365 = vector.broadcast %344 : vector<1x32xf32> to vector<16x32xf32>
    %366 = arith.addf %364, %365 : vector<16x32xf32>
    %367 = arith.truncf %366 : vector<16x32xf32> to vector<16x32xbf16>
    %c0_180 = arith.constant 0 : index
    %c0_181 = arith.constant 0 : index
    %c0_182 = arith.constant 0 : index
    %368 = vector.load %arg14[%c0_180, %c0_181, %c0_182] : memref<2x32x64xbf16, #tpu.memory_space<vmem>>, vector<1x32x64xbf16>
    %369 = vector.shape_cast %368 : vector<1x32x64xbf16> to vector<32x64xbf16>
    %cst_183 = arith.constant dense<0.000000e+00> : vector<16x64xf32>
    %370 = tpu.matmul %367, %369, %cst_183 {dimension_numbers = #tpu.dot_dimension_numbers<[1], [0], [0], [1], [0, 0, 1, 1], [], []>} : vector<16x32xbf16>, vector<32x64xbf16>, vector<16x64xf32> -> vector<16x64xf32>
    %c0_184 = arith.constant 0 : index
    %c0_185 = arith.constant 0 : index
    %c0_186 = arith.constant 0 : index
    %371 = vector.load %arg15[%c0_184, %c0_185, %c0_186] : memref<2x1x64xf32, #tpu.memory_space<vmem>>, vector<1x1x64xf32>
    %372 = vector.shape_cast %371 : vector<1x1x64xf32> to vector<1x64xf32>
    %373 = vector.broadcast %372 : vector<1x64xf32> to vector<16x64xf32>
    %374 = arith.addf %370, %373 : vector<16x64xf32>
    %cst_187 = arith.constant 5.000000e-01 : f32
    %375 = vector.broadcast %cst_187 : f32 to vector<16x64xf32>
    %376 = arith.mulf %375, %374 : vector<16x64xf32>
    %cst_188 = arith.constant 4.471500e-02 : f32
    %377 = vector.broadcast %cst_188 : f32 to vector<16x64xf32>
    %378 = arith.mulf %377, %374 : vector<16x64xf32>
    %379 = arith.mulf %378, %374 : vector<16x64xf32>
    %380 = arith.mulf %379, %374 : vector<16x64xf32>
    %381 = arith.addf %374, %380 : vector<16x64xf32>
    %cst_189 = arith.constant 0.797884583 : f32
    %382 = vector.broadcast %cst_189 : f32 to vector<16x64xf32>
    %383 = arith.mulf %382, %381 : vector<16x64xf32>
    %384 = math.tanh %383 : vector<16x64xf32>
    %cst_190 = arith.constant 1.000000e+00 : f32
    %385 = vector.broadcast %cst_190 : f32 to vector<16x64xf32>
    %386 = arith.addf %385, %384 : vector<16x64xf32>
    %387 = arith.mulf %376, %386 : vector<16x64xf32>
    %388 = arith.truncf %387 : vector<16x64xf32> to vector<16x64xbf16>
    %c0_191 = arith.constant 0 : index
    %c0_192 = arith.constant 0 : index
    %c0_193 = arith.constant 0 : index
    %389 = vector.load %arg16[%c0_191, %c0_192, %c0_193] : memref<2x64x32xbf16, #tpu.memory_space<vmem>>, vector<1x64x32xbf16>
    %390 = vector.shape_cast %389 : vector<1x64x32xbf16> to vector<64x32xbf16>
    %cst_194 = arith.constant dense<0.000000e+00> : vector<16x32xf32>
    %391 = tpu.matmul %388, %390, %cst_194 {dimension_numbers = #tpu.dot_dimension_numbers<[1], [0], [0], [1], [0, 0, 1, 1], [], []>} : vector<16x64xbf16>, vector<64x32xbf16>, vector<16x32xf32> -> vector<16x32xf32>
    %c0_195 = arith.constant 0 : index
    %c0_196 = arith.constant 0 : index
    %c0_197 = arith.constant 0 : index
    %392 = vector.load %arg17[%c0_195, %c0_196, %c0_197] : memref<2x1x32xf32, #tpu.memory_space<vmem>>, vector<1x1x32xf32>
    %393 = vector.shape_cast %392 : vector<1x1x32xf32> to vector<1x32xf32>
    %394 = vector.broadcast %393 : vector<1x32xf32> to vector<16x32xf32>
    %395 = arith.addf %391, %394 : vector<16x32xf32>
    %396 = arith.addf %366, %395 : vector<16x32xf32>
    %c0_198 = arith.constant 0 : index
    %c0_199 = arith.constant 0 : index
    %c0_200 = arith.constant 0 : index
    %397 = vector.load %arg18[%c0_198, %c0_199, %c0_200] : memref<2x1x32xf32, #tpu.memory_space<vmem>>, vector<1x1x32xf32>
    %398 = vector.shape_cast %397 : vector<1x1x32xf32> to vector<1x32xf32>
    %c0_201 = arith.constant 0 : index
    %c0_202 = arith.constant 0 : index
    %c0_203 = arith.constant 0 : index
    %399 = vector.load %arg19[%c0_201, %c0_202, %c0_203] : memref<2x1x32xf32, #tpu.memory_space<vmem>>, vector<1x1x32xf32>
    %400 = vector.shape_cast %399 : vector<1x1x32xf32> to vector<1x32xf32>
    %cst_204 = arith.constant dense<0.000000e+00> : vector<16xf32>
    %401 = vector.multi_reduction <add>, %396, %cst_204 [1] : vector<16x32xf32> to vector<16xf32>
    %402 = vector.shape_cast %401 : vector<16xf32> to vector<16x1xf32>
    %cst_205 = arith.constant 3.200000e+01 : f32
    %403 = vector.broadcast %cst_205 : f32 to vector<16x1xf32>
    %404 = arith.divf %402, %403 : vector<16x1xf32>
    %405 = vector.broadcast %404 : vector<16x1xf32> to vector<16x32xf32>
    %406 = arith.subf %396, %405 : vector<16x32xf32>
    %407 = arith.mulf %406, %406 : vector<16x32xf32>
    %cst_206 = arith.constant dense<0.000000e+00> : vector<16xf32>
    %408 = vector.multi_reduction <add>, %407, %cst_206 [1] : vector<16x32xf32> to vector<16xf32>
    %409 = vector.shape_cast %408 : vector<16xf32> to vector<16x1xf32>
    %cst_207 = arith.constant 3.200000e+01 : f32
    %410 = vector.broadcast %cst_207 : f32 to vector<16x1xf32>
    %411 = arith.divf %409, %410 : vector<16x1xf32>
    %412 = vector.broadcast %404 : vector<16x1xf32> to vector<16x32xf32>
    %413 = arith.subf %396, %412 : vector<16x32xf32>
    %cst_208 = arith.constant 9.99999974E-6 : f32
    %414 = vector.broadcast %cst_208 : f32 to vector<16x1xf32>
    %415 = arith.addf %411, %414 : vector<16x1xf32>
    %416 = math.rsqrt %415 : vector<16x1xf32>
    %417 = vector.broadcast %416 : vector<16x1xf32> to vector<16x32xf32>
    %418 = arith.mulf %413, %417 : vector<16x32xf32>
    %419 = vector.broadcast %398 : vector<1x32xf32> to vector<16x32xf32>
    %420 = arith.mulf %418, %419 : vector<16x32xf32>
    %421 = vector.broadcast %400 : vector<1x32xf32> to vector<16x32xf32>
    %422 = arith.addf %420, %421 : vector<16x32xf32>
    %423 = arith.truncf %422 : vector<16x32xf32> to vector<16x32xbf16>
    %c4 = arith.constant 4 : index
    %c0_209 = arith.constant 0 : index
    %c0_210 = arith.constant 0 : index
    %424 = vector.load %arg4[%c4, %c0_209, %c0_210] : memref<8x32x8xbf16, #tpu.memory_space<vmem>>, vector<1x32x8xbf16>
    %425 = vector.shape_cast %424 : vector<1x32x8xbf16> to vector<32x8xbf16>
    %cst_211 = arith.constant dense<0.000000e+00> : vector<16x8xf32>
    %426 = tpu.matmul %423, %425, %cst_211 {dimension_numbers = #tpu.dot_dimension_numbers<[1], [0], [0], [1], [0, 0, 1, 1], [], []>} : vector<16x32xbf16>, vector<32x8xbf16>, vector<16x8xf32> -> vector<16x8xf32>
    %c4_212 = arith.constant 4 : index
    %c0_213 = arith.constant 0 : index
    %c0_214 = arith.constant 0 : index
    %427 = vector.load %arg5[%c4_212, %c0_213, %c0_214] : memref<8x1x8xf32, #tpu.memory_space<vmem>>, vector<1x1x8xf32>
    %428 = vector.shape_cast %427 : vector<1x1x8xf32> to vector<1x8xf32>
    %429 = vector.broadcast %428 : vector<1x8xf32> to vector<16x8xf32>
    %430 = arith.addf %426, %429 : vector<16x8xf32>
    %c4_215 = arith.constant 4 : index
    %c0_216 = arith.constant 0 : index
    %c0_217 = arith.constant 0 : index
    %431 = vector.load %arg6[%c4_215, %c0_216, %c0_217] : memref<8x32x8xbf16, #tpu.memory_space<vmem>>, vector<1x32x8xbf16>
    %432 = vector.shape_cast %431 : vector<1x32x8xbf16> to vector<32x8xbf16>
    %cst_218 = arith.constant dense<0.000000e+00> : vector<16x8xf32>
    %433 = tpu.matmul %423, %432, %cst_218 {dimension_numbers = #tpu.dot_dimension_numbers<[1], [0], [0], [1], [0, 0, 1, 1], [], []>} : vector<16x32xbf16>, vector<32x8xbf16>, vector<16x8xf32> -> vector<16x8xf32>
    %c4_219 = arith.constant 4 : index
    %c0_220 = arith.constant 0 : index
    %c0_221 = arith.constant 0 : index
    %434 = vector.load %arg7[%c4_219, %c0_220, %c0_221] : memref<8x1x8xf32, #tpu.memory_space<vmem>>, vector<1x1x8xf32>
    %435 = vector.shape_cast %434 : vector<1x1x8xf32> to vector<1x8xf32>
    %436 = vector.broadcast %435 : vector<1x8xf32> to vector<16x8xf32>
    %437 = arith.addf %433, %436 : vector<16x8xf32>
    %c4_222 = arith.constant 4 : index
    %c0_223 = arith.constant 0 : index
    %c0_224 = arith.constant 0 : index
    %438 = vector.load %arg8[%c4_222, %c0_223, %c0_224] : memref<8x32x8xbf16, #tpu.memory_space<vmem>>, vector<1x32x8xbf16>
    %439 = vector.shape_cast %438 : vector<1x32x8xbf16> to vector<32x8xbf16>
    %cst_225 = arith.constant dense<0.000000e+00> : vector<16x8xf32>
    %440 = tpu.matmul %423, %439, %cst_225 {dimension_numbers = #tpu.dot_dimension_numbers<[1], [0], [0], [1], [0, 0, 1, 1], [], []>} : vector<16x32xbf16>, vector<32x8xbf16>, vector<16x8xf32> -> vector<16x8xf32>
    %c4_226 = arith.constant 4 : index
    %c0_227 = arith.constant 0 : index
    %c0_228 = arith.constant 0 : index
    %441 = vector.load %arg9[%c4_226, %c0_227, %c0_228] : memref<8x1x8xf32, #tpu.memory_space<vmem>>, vector<1x1x8xf32>
    %442 = vector.shape_cast %441 : vector<1x1x8xf32> to vector<1x8xf32>
    %443 = vector.broadcast %442 : vector<1x8xf32> to vector<16x8xf32>
    %444 = arith.addf %440, %443 : vector<16x8xf32>
    %c5 = arith.constant 5 : index
    %c0_229 = arith.constant 0 : index
    %c0_230 = arith.constant 0 : index
    %445 = vector.load %arg4[%c5, %c0_229, %c0_230] : memref<8x32x8xbf16, #tpu.memory_space<vmem>>, vector<1x32x8xbf16>
    %446 = vector.shape_cast %445 : vector<1x32x8xbf16> to vector<32x8xbf16>
    %cst_231 = arith.constant dense<0.000000e+00> : vector<16x8xf32>
    %447 = tpu.matmul %423, %446, %cst_231 {dimension_numbers = #tpu.dot_dimension_numbers<[1], [0], [0], [1], [0, 0, 1, 1], [], []>} : vector<16x32xbf16>, vector<32x8xbf16>, vector<16x8xf32> -> vector<16x8xf32>
    %c5_232 = arith.constant 5 : index
    %c0_233 = arith.constant 0 : index
    %c0_234 = arith.constant 0 : index
    %448 = vector.load %arg5[%c5_232, %c0_233, %c0_234] : memref<8x1x8xf32, #tpu.memory_space<vmem>>, vector<1x1x8xf32>
    %449 = vector.shape_cast %448 : vector<1x1x8xf32> to vector<1x8xf32>
    %450 = vector.broadcast %449 : vector<1x8xf32> to vector<16x8xf32>
    %451 = arith.addf %447, %450 : vector<16x8xf32>
    %c5_235 = arith.constant 5 : index
    %c0_236 = arith.constant 0 : index
    %c0_237 = arith.constant 0 : index
    %452 = vector.load %arg6[%c5_235, %c0_236, %c0_237] : memref<8x32x8xbf16, #tpu.memory_space<vmem>>, vector<1x32x8xbf16>
    %453 = vector.shape_cast %452 : vector<1x32x8xbf16> to vector<32x8xbf16>
    %cst_238 = arith.constant dense<0.000000e+00> : vector<16x8xf32>
    %454 = tpu.matmul %423, %453, %cst_238 {dimension_numbers = #tpu.dot_dimension_numbers<[1], [0], [0], [1], [0, 0, 1, 1], [], []>} : vector<16x32xbf16>, vector<32x8xbf16>, vector<16x8xf32> -> vector<16x8xf32>
    %c5_239 = arith.constant 5 : index
    %c0_240 = arith.constant 0 : index
    %c0_241 = arith.constant 0 : index
    %455 = vector.load %arg7[%c5_239, %c0_240, %c0_241] : memref<8x1x8xf32, #tpu.memory_space<vmem>>, vector<1x1x8xf32>
    %456 = vector.shape_cast %455 : vector<1x1x8xf32> to vector<1x8xf32>
    %457 = vector.broadcast %456 : vector<1x8xf32> to vector<16x8xf32>
    %458 = arith.addf %454, %457 : vector<16x8xf32>
    %c5_242 = arith.constant 5 : index
    %c0_243 = arith.constant 0 : index
    %c0_244 = arith.constant 0 : index
    %459 = vector.load %arg8[%c5_242, %c0_243, %c0_244] : memref<8x32x8xbf16, #tpu.memory_space<vmem>>, vector<1x32x8xbf16>
    %460 = vector.shape_cast %459 : vector<1x32x8xbf16> to vector<32x8xbf16>
    %cst_245 = arith.constant dense<0.000000e+00> : vector<16x8xf32>
    %461 = tpu.matmul %423, %460, %cst_245 {dimension_numbers = #tpu.dot_dimension_numbers<[1], [0], [0], [1], [0, 0, 1, 1], [], []>} : vector<16x32xbf16>, vector<32x8xbf16>, vector<16x8xf32> -> vector<16x8xf32>
    %c5_246 = arith.constant 5 : index
    %c0_247 = arith.constant 0 : index
    %c0_248 = arith.constant 0 : index
    %462 = vector.load %arg9[%c5_246, %c0_247, %c0_248] : memref<8x1x8xf32, #tpu.memory_space<vmem>>, vector<1x1x8xf32>
    %463 = vector.shape_cast %462 : vector<1x1x8xf32> to vector<1x8xf32>
    %464 = vector.broadcast %463 : vector<1x8xf32> to vector<16x8xf32>
    %465 = arith.addf %461, %464 : vector<16x8xf32>
    %c6 = arith.constant 6 : index
    %c0_249 = arith.constant 0 : index
    %c0_250 = arith.constant 0 : index
    %466 = vector.load %arg4[%c6, %c0_249, %c0_250] : memref<8x32x8xbf16, #tpu.memory_space<vmem>>, vector<1x32x8xbf16>
    %467 = vector.shape_cast %466 : vector<1x32x8xbf16> to vector<32x8xbf16>
    %cst_251 = arith.constant dense<0.000000e+00> : vector<16x8xf32>
    %468 = tpu.matmul %423, %467, %cst_251 {dimension_numbers = #tpu.dot_dimension_numbers<[1], [0], [0], [1], [0, 0, 1, 1], [], []>} : vector<16x32xbf16>, vector<32x8xbf16>, vector<16x8xf32> -> vector<16x8xf32>
    %c6_252 = arith.constant 6 : index
    %c0_253 = arith.constant 0 : index
    %c0_254 = arith.constant 0 : index
    %469 = vector.load %arg5[%c6_252, %c0_253, %c0_254] : memref<8x1x8xf32, #tpu.memory_space<vmem>>, vector<1x1x8xf32>
    %470 = vector.shape_cast %469 : vector<1x1x8xf32> to vector<1x8xf32>
    %471 = vector.broadcast %470 : vector<1x8xf32> to vector<16x8xf32>
    %472 = arith.addf %468, %471 : vector<16x8xf32>
    %c6_255 = arith.constant 6 : index
    %c0_256 = arith.constant 0 : index
    %c0_257 = arith.constant 0 : index
    %473 = vector.load %arg6[%c6_255, %c0_256, %c0_257] : memref<8x32x8xbf16, #tpu.memory_space<vmem>>, vector<1x32x8xbf16>
    %474 = vector.shape_cast %473 : vector<1x32x8xbf16> to vector<32x8xbf16>
    %cst_258 = arith.constant dense<0.000000e+00> : vector<16x8xf32>
    %475 = tpu.matmul %423, %474, %cst_258 {dimension_numbers = #tpu.dot_dimension_numbers<[1], [0], [0], [1], [0, 0, 1, 1], [], []>} : vector<16x32xbf16>, vector<32x8xbf16>, vector<16x8xf32> -> vector<16x8xf32>
    %c6_259 = arith.constant 6 : index
    %c0_260 = arith.constant 0 : index
    %c0_261 = arith.constant 0 : index
    %476 = vector.load %arg7[%c6_259, %c0_260, %c0_261] : memref<8x1x8xf32, #tpu.memory_space<vmem>>, vector<1x1x8xf32>
    %477 = vector.shape_cast %476 : vector<1x1x8xf32> to vector<1x8xf32>
    %478 = vector.broadcast %477 : vector<1x8xf32> to vector<16x8xf32>
    %479 = arith.addf %475, %478 : vector<16x8xf32>
    %c6_262 = arith.constant 6 : index
    %c0_263 = arith.constant 0 : index
    %c0_264 = arith.constant 0 : index
    %480 = vector.load %arg8[%c6_262, %c0_263, %c0_264] : memref<8x32x8xbf16, #tpu.memory_space<vmem>>, vector<1x32x8xbf16>
    %481 = vector.shape_cast %480 : vector<1x32x8xbf16> to vector<32x8xbf16>
    %cst_265 = arith.constant dense<0.000000e+00> : vector<16x8xf32>
    %482 = tpu.matmul %423, %481, %cst_265 {dimension_numbers = #tpu.dot_dimension_numbers<[1], [0], [0], [1], [0, 0, 1, 1], [], []>} : vector<16x32xbf16>, vector<32x8xbf16>, vector<16x8xf32> -> vector<16x8xf32>
    %c6_266 = arith.constant 6 : index
    %c0_267 = arith.constant 0 : index
    %c0_268 = arith.constant 0 : index
    %483 = vector.load %arg9[%c6_266, %c0_267, %c0_268] : memref<8x1x8xf32, #tpu.memory_space<vmem>>, vector<1x1x8xf32>
    %484 = vector.shape_cast %483 : vector<1x1x8xf32> to vector<1x8xf32>
    %485 = vector.broadcast %484 : vector<1x8xf32> to vector<16x8xf32>
    %486 = arith.addf %482, %485 : vector<16x8xf32>
    %c7 = arith.constant 7 : index
    %c0_269 = arith.constant 0 : index
    %c0_270 = arith.constant 0 : index
    %487 = vector.load %arg4[%c7, %c0_269, %c0_270] : memref<8x32x8xbf16, #tpu.memory_space<vmem>>, vector<1x32x8xbf16>
    %488 = vector.shape_cast %487 : vector<1x32x8xbf16> to vector<32x8xbf16>
    %cst_271 = arith.constant dense<0.000000e+00> : vector<16x8xf32>
    %489 = tpu.matmul %423, %488, %cst_271 {dimension_numbers = #tpu.dot_dimension_numbers<[1], [0], [0], [1], [0, 0, 1, 1], [], []>} : vector<16x32xbf16>, vector<32x8xbf16>, vector<16x8xf32> -> vector<16x8xf32>
    %c7_272 = arith.constant 7 : index
    %c0_273 = arith.constant 0 : index
    %c0_274 = arith.constant 0 : index
    %490 = vector.load %arg5[%c7_272, %c0_273, %c0_274] : memref<8x1x8xf32, #tpu.memory_space<vmem>>, vector<1x1x8xf32>
    %491 = vector.shape_cast %490 : vector<1x1x8xf32> to vector<1x8xf32>
    %492 = vector.broadcast %491 : vector<1x8xf32> to vector<16x8xf32>
    %493 = arith.addf %489, %492 : vector<16x8xf32>
    %c7_275 = arith.constant 7 : index
    %c0_276 = arith.constant 0 : index
    %c0_277 = arith.constant 0 : index
    %494 = vector.load %arg6[%c7_275, %c0_276, %c0_277] : memref<8x32x8xbf16, #tpu.memory_space<vmem>>, vector<1x32x8xbf16>
    %495 = vector.shape_cast %494 : vector<1x32x8xbf16> to vector<32x8xbf16>
    %cst_278 = arith.constant dense<0.000000e+00> : vector<16x8xf32>
    %496 = tpu.matmul %423, %495, %cst_278 {dimension_numbers = #tpu.dot_dimension_numbers<[1], [0], [0], [1], [0, 0, 1, 1], [], []>} : vector<16x32xbf16>, vector<32x8xbf16>, vector<16x8xf32> -> vector<16x8xf32>
    %c7_279 = arith.constant 7 : index
    %c0_280 = arith.constant 0 : index
    %c0_281 = arith.constant 0 : index
    %497 = vector.load %arg7[%c7_279, %c0_280, %c0_281] : memref<8x1x8xf32, #tpu.memory_space<vmem>>, vector<1x1x8xf32>
    %498 = vector.shape_cast %497 : vector<1x1x8xf32> to vector<1x8xf32>
    %499 = vector.broadcast %498 : vector<1x8xf32> to vector<16x8xf32>
    %500 = arith.addf %496, %499 : vector<16x8xf32>
    %c7_282 = arith.constant 7 : index
    %c0_283 = arith.constant 0 : index
    %c0_284 = arith.constant 0 : index
    %501 = vector.load %arg8[%c7_282, %c0_283, %c0_284] : memref<8x32x8xbf16, #tpu.memory_space<vmem>>, vector<1x32x8xbf16>
    %502 = vector.shape_cast %501 : vector<1x32x8xbf16> to vector<32x8xbf16>
    %cst_285 = arith.constant dense<0.000000e+00> : vector<16x8xf32>
    %503 = tpu.matmul %423, %502, %cst_285 {dimension_numbers = #tpu.dot_dimension_numbers<[1], [0], [0], [1], [0, 0, 1, 1], [], []>} : vector<16x32xbf16>, vector<32x8xbf16>, vector<16x8xf32> -> vector<16x8xf32>
    %c7_286 = arith.constant 7 : index
    %c0_287 = arith.constant 0 : index
    %c0_288 = arith.constant 0 : index
    %504 = vector.load %arg9[%c7_286, %c0_287, %c0_288] : memref<8x1x8xf32, #tpu.memory_space<vmem>>, vector<1x1x8xf32>
    %505 = vector.shape_cast %504 : vector<1x1x8xf32> to vector<1x8xf32>
    %506 = vector.broadcast %505 : vector<1x8xf32> to vector<16x8xf32>
    %507 = arith.addf %503, %506 : vector<16x8xf32>
    %508 = vector.extract_strided_slice %430 {offsets = [0, 0], sizes = [8, 8], strides = [1, 1]} : vector<16x8xf32> to vector<8x8xf32>
    %509 = arith.truncf %508 : vector<8x8xf32> to vector<8x8xbf16>
    %510 = vector.extract_strided_slice %437 {offsets = [0, 0], sizes = [8, 8], strides = [1, 1]} : vector<16x8xf32> to vector<8x8xf32>
    %511 = arith.truncf %510 : vector<8x8xf32> to vector<8x8xbf16>
    %512 = vector.extract_strided_slice %444 {offsets = [0, 0], sizes = [8, 8], strides = [1, 1]} : vector<16x8xf32> to vector<8x8xf32>
    %513 = arith.truncf %512 : vector<8x8xf32> to vector<8x8xbf16>
    %cst_289 = arith.constant dense<0.000000e+00> : vector<8x8xf32>
    %514 = tpu.matmul %509, %511, %cst_289 {dimension_numbers = #tpu.dot_dimension_numbers<[1], [1], [0], [0], [0, 0, 1, 0], [], []>} : vector<8x8xbf16>, vector<8x8xbf16>, vector<8x8xf32> -> vector<8x8xf32>
    %cst_290 = arith.constant 0.353553385 : f32
    %515 = vector.broadcast %cst_290 : f32 to vector<8x8xf32>
    %516 = arith.mulf %514, %515 : vector<8x8xf32>
    %517 = arith.addf %516, %32 : vector<8x8xf32>
    %cst_291 = arith.constant dense<0xFF800000> : vector<8xf32>
    %518 = vector.multi_reduction <maximumf>, %517, %cst_291 [1] : vector<8x8xf32> to vector<8xf32>
    %519 = vector.shape_cast %518 : vector<8xf32> to vector<8x1xf32>
    %520 = vector.broadcast %519 : vector<8x1xf32> to vector<8x8xf32>
    %521 = arith.subf %517, %520 : vector<8x8xf32>
    %522 = math.exp %521 : vector<8x8xf32>
    %cst_292 = arith.constant dense<0.000000e+00> : vector<8xf32>
    %523 = vector.multi_reduction <add>, %522, %cst_292 [1] : vector<8x8xf32> to vector<8xf32>
    %524 = vector.shape_cast %523 : vector<8xf32> to vector<8x1xf32>
    %525 = tpu.reciprocal %524 {approx = true} : vector<8x1xf32> -> vector<8x1xf32>
    %526 = vector.broadcast %525 : vector<8x1xf32> to vector<8x8xf32>
    %527 = arith.mulf %522, %526 : vector<8x8xf32>
    %528 = arith.truncf %527 : vector<8x8xf32> to vector<8x8xbf16>
    %cst_293 = arith.constant dense<0.000000e+00> : vector<8x8xf32>
    %529 = tpu.matmul %528, %513, %cst_293 {dimension_numbers = #tpu.dot_dimension_numbers<[1], [0], [0], [1], [0, 0, 1, 1], [], []>} : vector<8x8xbf16>, vector<8x8xbf16>, vector<8x8xf32> -> vector<8x8xf32>
    %530 = arith.truncf %529 : vector<8x8xf32> to vector<8x8xbf16>
    %c4_294 = arith.constant 4 : index
    %c0_295 = arith.constant 0 : index
    %c0_296 = arith.constant 0 : index
    %531 = vector.load %arg10[%c4_294, %c0_295, %c0_296] : memref<8x8x32xbf16, #tpu.memory_space<vmem>>, vector<1x8x32xbf16>
    %532 = vector.shape_cast %531 : vector<1x8x32xbf16> to vector<8x32xbf16>
    %cst_297 = arith.constant dense<0.000000e+00> : vector<8x32xf32>
    %533 = tpu.matmul %530, %532, %cst_297 {dimension_numbers = #tpu.dot_dimension_numbers<[1], [0], [0], [1], [0, 0, 1, 1], [], []>} : vector<8x8xbf16>, vector<8x32xbf16>, vector<8x32xf32> -> vector<8x32xf32>
    %534 = vector.extract_strided_slice %451 {offsets = [0, 0], sizes = [8, 8], strides = [1, 1]} : vector<16x8xf32> to vector<8x8xf32>
    %535 = arith.truncf %534 : vector<8x8xf32> to vector<8x8xbf16>
    %536 = vector.extract_strided_slice %458 {offsets = [0, 0], sizes = [8, 8], strides = [1, 1]} : vector<16x8xf32> to vector<8x8xf32>
    %537 = arith.truncf %536 : vector<8x8xf32> to vector<8x8xbf16>
    %538 = vector.extract_strided_slice %465 {offsets = [0, 0], sizes = [8, 8], strides = [1, 1]} : vector<16x8xf32> to vector<8x8xf32>
    %539 = arith.truncf %538 : vector<8x8xf32> to vector<8x8xbf16>
    %cst_298 = arith.constant dense<0.000000e+00> : vector<8x8xf32>
    %540 = tpu.matmul %535, %537, %cst_298 {dimension_numbers = #tpu.dot_dimension_numbers<[1], [1], [0], [0], [0, 0, 1, 0], [], []>} : vector<8x8xbf16>, vector<8x8xbf16>, vector<8x8xf32> -> vector<8x8xf32>
    %cst_299 = arith.constant 0.353553385 : f32
    %541 = vector.broadcast %cst_299 : f32 to vector<8x8xf32>
    %542 = arith.mulf %540, %541 : vector<8x8xf32>
    %543 = arith.addf %542, %32 : vector<8x8xf32>
    %cst_300 = arith.constant dense<0xFF800000> : vector<8xf32>
    %544 = vector.multi_reduction <maximumf>, %543, %cst_300 [1] : vector<8x8xf32> to vector<8xf32>
    %545 = vector.shape_cast %544 : vector<8xf32> to vector<8x1xf32>
    %546 = vector.broadcast %545 : vector<8x1xf32> to vector<8x8xf32>
    %547 = arith.subf %543, %546 : vector<8x8xf32>
    %548 = math.exp %547 : vector<8x8xf32>
    %cst_301 = arith.constant dense<0.000000e+00> : vector<8xf32>
    %549 = vector.multi_reduction <add>, %548, %cst_301 [1] : vector<8x8xf32> to vector<8xf32>
    %550 = vector.shape_cast %549 : vector<8xf32> to vector<8x1xf32>
    %551 = tpu.reciprocal %550 {approx = true} : vector<8x1xf32> -> vector<8x1xf32>
    %552 = vector.broadcast %551 : vector<8x1xf32> to vector<8x8xf32>
    %553 = arith.mulf %548, %552 : vector<8x8xf32>
    %554 = arith.truncf %553 : vector<8x8xf32> to vector<8x8xbf16>
    %cst_302 = arith.constant dense<0.000000e+00> : vector<8x8xf32>
    %555 = tpu.matmul %554, %539, %cst_302 {dimension_numbers = #tpu.dot_dimension_numbers<[1], [0], [0], [1], [0, 0, 1, 1], [], []>} : vector<8x8xbf16>, vector<8x8xbf16>, vector<8x8xf32> -> vector<8x8xf32>
    %556 = arith.truncf %555 : vector<8x8xf32> to vector<8x8xbf16>
    %c5_303 = arith.constant 5 : index
    %c0_304 = arith.constant 0 : index
    %c0_305 = arith.constant 0 : index
    %557 = vector.load %arg10[%c5_303, %c0_304, %c0_305] : memref<8x8x32xbf16, #tpu.memory_space<vmem>>, vector<1x8x32xbf16>
    %558 = vector.shape_cast %557 : vector<1x8x32xbf16> to vector<8x32xbf16>
    %cst_306 = arith.constant dense<0.000000e+00> : vector<8x32xf32>
    %559 = tpu.matmul %556, %558, %cst_306 {dimension_numbers = #tpu.dot_dimension_numbers<[1], [0], [0], [1], [0, 0, 1, 1], [], []>} : vector<8x8xbf16>, vector<8x32xbf16>, vector<8x32xf32> -> vector<8x32xf32>
    %560 = arith.addf %533, %559 : vector<8x32xf32>
    %561 = vector.extract_strided_slice %472 {offsets = [0, 0], sizes = [8, 8], strides = [1, 1]} : vector<16x8xf32> to vector<8x8xf32>
    %562 = arith.truncf %561 : vector<8x8xf32> to vector<8x8xbf16>
    %563 = vector.extract_strided_slice %479 {offsets = [0, 0], sizes = [8, 8], strides = [1, 1]} : vector<16x8xf32> to vector<8x8xf32>
    %564 = arith.truncf %563 : vector<8x8xf32> to vector<8x8xbf16>
    %565 = vector.extract_strided_slice %486 {offsets = [0, 0], sizes = [8, 8], strides = [1, 1]} : vector<16x8xf32> to vector<8x8xf32>
    %566 = arith.truncf %565 : vector<8x8xf32> to vector<8x8xbf16>
    %cst_307 = arith.constant dense<0.000000e+00> : vector<8x8xf32>
    %567 = tpu.matmul %562, %564, %cst_307 {dimension_numbers = #tpu.dot_dimension_numbers<[1], [1], [0], [0], [0, 0, 1, 0], [], []>} : vector<8x8xbf16>, vector<8x8xbf16>, vector<8x8xf32> -> vector<8x8xf32>
    %cst_308 = arith.constant 0.353553385 : f32
    %568 = vector.broadcast %cst_308 : f32 to vector<8x8xf32>
    %569 = arith.mulf %567, %568 : vector<8x8xf32>
    %570 = arith.addf %569, %32 : vector<8x8xf32>
    %cst_309 = arith.constant dense<0xFF800000> : vector<8xf32>
    %571 = vector.multi_reduction <maximumf>, %570, %cst_309 [1] : vector<8x8xf32> to vector<8xf32>
    %572 = vector.shape_cast %571 : vector<8xf32> to vector<8x1xf32>
    %573 = vector.broadcast %572 : vector<8x1xf32> to vector<8x8xf32>
    %574 = arith.subf %570, %573 : vector<8x8xf32>
    %575 = math.exp %574 : vector<8x8xf32>
    %cst_310 = arith.constant dense<0.000000e+00> : vector<8xf32>
    %576 = vector.multi_reduction <add>, %575, %cst_310 [1] : vector<8x8xf32> to vector<8xf32>
    %577 = vector.shape_cast %576 : vector<8xf32> to vector<8x1xf32>
    %578 = tpu.reciprocal %577 {approx = true} : vector<8x1xf32> -> vector<8x1xf32>
    %579 = vector.broadcast %578 : vector<8x1xf32> to vector<8x8xf32>
    %580 = arith.mulf %575, %579 : vector<8x8xf32>
    %581 = arith.truncf %580 : vector<8x8xf32> to vector<8x8xbf16>
    %cst_311 = arith.constant dense<0.000000e+00> : vector<8x8xf32>
    %582 = tpu.matmul %581, %566, %cst_311 {dimension_numbers = #tpu.dot_dimension_numbers<[1], [0], [0], [1], [0, 0, 1, 1], [], []>} : vector<8x8xbf16>, vector<8x8xbf16>, vector<8x8xf32> -> vector<8x8xf32>
    %583 = arith.truncf %582 : vector<8x8xf32> to vector<8x8xbf16>
    %c6_312 = arith.constant 6 : index
    %c0_313 = arith.constant 0 : index
    %c0_314 = arith.constant 0 : index
    %584 = vector.load %arg10[%c6_312, %c0_313, %c0_314] : memref<8x8x32xbf16, #tpu.memory_space<vmem>>, vector<1x8x32xbf16>
    %585 = vector.shape_cast %584 : vector<1x8x32xbf16> to vector<8x32xbf16>
    %cst_315 = arith.constant dense<0.000000e+00> : vector<8x32xf32>
    %586 = tpu.matmul %583, %585, %cst_315 {dimension_numbers = #tpu.dot_dimension_numbers<[1], [0], [0], [1], [0, 0, 1, 1], [], []>} : vector<8x8xbf16>, vector<8x32xbf16>, vector<8x32xf32> -> vector<8x32xf32>
    %587 = arith.addf %560, %586 : vector<8x32xf32>
    %588 = vector.extract_strided_slice %493 {offsets = [0, 0], sizes = [8, 8], strides = [1, 1]} : vector<16x8xf32> to vector<8x8xf32>
    %589 = arith.truncf %588 : vector<8x8xf32> to vector<8x8xbf16>
    %590 = vector.extract_strided_slice %500 {offsets = [0, 0], sizes = [8, 8], strides = [1, 1]} : vector<16x8xf32> to vector<8x8xf32>
    %591 = arith.truncf %590 : vector<8x8xf32> to vector<8x8xbf16>
    %592 = vector.extract_strided_slice %507 {offsets = [0, 0], sizes = [8, 8], strides = [1, 1]} : vector<16x8xf32> to vector<8x8xf32>
    %593 = arith.truncf %592 : vector<8x8xf32> to vector<8x8xbf16>
    %cst_316 = arith.constant dense<0.000000e+00> : vector<8x8xf32>
    %594 = tpu.matmul %589, %591, %cst_316 {dimension_numbers = #tpu.dot_dimension_numbers<[1], [1], [0], [0], [0, 0, 1, 0], [], []>} : vector<8x8xbf16>, vector<8x8xbf16>, vector<8x8xf32> -> vector<8x8xf32>
    %cst_317 = arith.constant 0.353553385 : f32
    %595 = vector.broadcast %cst_317 : f32 to vector<8x8xf32>
    %596 = arith.mulf %594, %595 : vector<8x8xf32>
    %597 = arith.addf %596, %32 : vector<8x8xf32>
    %cst_318 = arith.constant dense<0xFF800000> : vector<8xf32>
    %598 = vector.multi_reduction <maximumf>, %597, %cst_318 [1] : vector<8x8xf32> to vector<8xf32>
    %599 = vector.shape_cast %598 : vector<8xf32> to vector<8x1xf32>
    %600 = vector.broadcast %599 : vector<8x1xf32> to vector<8x8xf32>
    %601 = arith.subf %597, %600 : vector<8x8xf32>
    %602 = math.exp %601 : vector<8x8xf32>
    %cst_319 = arith.constant dense<0.000000e+00> : vector<8xf32>
    %603 = vector.multi_reduction <add>, %602, %cst_319 [1] : vector<8x8xf32> to vector<8xf32>
    %604 = vector.shape_cast %603 : vector<8xf32> to vector<8x1xf32>
    %605 = tpu.reciprocal %604 {approx = true} : vector<8x1xf32> -> vector<8x1xf32>
    %606 = vector.broadcast %605 : vector<8x1xf32> to vector<8x8xf32>
    %607 = arith.mulf %602, %606 : vector<8x8xf32>
    %608 = arith.truncf %607 : vector<8x8xf32> to vector<8x8xbf16>
    %cst_320 = arith.constant dense<0.000000e+00> : vector<8x8xf32>
    %609 = tpu.matmul %608, %593, %cst_320 {dimension_numbers = #tpu.dot_dimension_numbers<[1], [0], [0], [1], [0, 0, 1, 1], [], []>} : vector<8x8xbf16>, vector<8x8xbf16>, vector<8x8xf32> -> vector<8x8xf32>
    %610 = arith.truncf %609 : vector<8x8xf32> to vector<8x8xbf16>
    %c7_321 = arith.constant 7 : index
    %c0_322 = arith.constant 0 : index
    %c0_323 = arith.constant 0 : index
    %611 = vector.load %arg10[%c7_321, %c0_322, %c0_323] : memref<8x8x32xbf16, #tpu.memory_space<vmem>>, vector<1x8x32xbf16>
    %612 = vector.shape_cast %611 : vector<1x8x32xbf16> to vector<8x32xbf16>
    %cst_324 = arith.constant dense<0.000000e+00> : vector<8x32xf32>
    %613 = tpu.matmul %610, %612, %cst_324 {dimension_numbers = #tpu.dot_dimension_numbers<[1], [0], [0], [1], [0, 0, 1, 1], [], []>} : vector<8x8xbf16>, vector<8x32xbf16>, vector<8x32xf32> -> vector<8x32xf32>
    %614 = arith.addf %587, %613 : vector<8x32xf32>
    %615 = vector.extract_strided_slice %430 {offsets = [8, 0], sizes = [8, 8], strides = [1, 1]} : vector<16x8xf32> to vector<8x8xf32>
    %616 = arith.truncf %615 : vector<8x8xf32> to vector<8x8xbf16>
    %617 = vector.extract_strided_slice %437 {offsets = [8, 0], sizes = [8, 8], strides = [1, 1]} : vector<16x8xf32> to vector<8x8xf32>
    %618 = arith.truncf %617 : vector<8x8xf32> to vector<8x8xbf16>
    %619 = vector.extract_strided_slice %444 {offsets = [8, 0], sizes = [8, 8], strides = [1, 1]} : vector<16x8xf32> to vector<8x8xf32>
    %620 = arith.truncf %619 : vector<8x8xf32> to vector<8x8xbf16>
    %cst_325 = arith.constant dense<0.000000e+00> : vector<8x8xf32>
    %621 = tpu.matmul %616, %618, %cst_325 {dimension_numbers = #tpu.dot_dimension_numbers<[1], [1], [0], [0], [0, 0, 1, 0], [], []>} : vector<8x8xbf16>, vector<8x8xbf16>, vector<8x8xf32> -> vector<8x8xf32>
    %cst_326 = arith.constant 0.353553385 : f32
    %622 = vector.broadcast %cst_326 : f32 to vector<8x8xf32>
    %623 = arith.mulf %621, %622 : vector<8x8xf32>
    %624 = arith.addf %623, %35 : vector<8x8xf32>
    %cst_327 = arith.constant dense<0xFF800000> : vector<8xf32>
    %625 = vector.multi_reduction <maximumf>, %624, %cst_327 [1] : vector<8x8xf32> to vector<8xf32>
    %626 = vector.shape_cast %625 : vector<8xf32> to vector<8x1xf32>
    %627 = vector.broadcast %626 : vector<8x1xf32> to vector<8x8xf32>
    %628 = arith.subf %624, %627 : vector<8x8xf32>
    %629 = math.exp %628 : vector<8x8xf32>
    %cst_328 = arith.constant dense<0.000000e+00> : vector<8xf32>
    %630 = vector.multi_reduction <add>, %629, %cst_328 [1] : vector<8x8xf32> to vector<8xf32>
    %631 = vector.shape_cast %630 : vector<8xf32> to vector<8x1xf32>
    %632 = tpu.reciprocal %631 {approx = true} : vector<8x1xf32> -> vector<8x1xf32>
    %633 = vector.broadcast %632 : vector<8x1xf32> to vector<8x8xf32>
    %634 = arith.mulf %629, %633 : vector<8x8xf32>
    %635 = arith.truncf %634 : vector<8x8xf32> to vector<8x8xbf16>
    %cst_329 = arith.constant dense<0.000000e+00> : vector<8x8xf32>
    %636 = tpu.matmul %635, %620, %cst_329 {dimension_numbers = #tpu.dot_dimension_numbers<[1], [0], [0], [1], [0, 0, 1, 1], [], []>} : vector<8x8xbf16>, vector<8x8xbf16>, vector<8x8xf32> -> vector<8x8xf32>
    %637 = arith.truncf %636 : vector<8x8xf32> to vector<8x8xbf16>
    %c4_330 = arith.constant 4 : index
    %c0_331 = arith.constant 0 : index
    %c0_332 = arith.constant 0 : index
    %638 = vector.load %arg10[%c4_330, %c0_331, %c0_332] : memref<8x8x32xbf16, #tpu.memory_space<vmem>>, vector<1x8x32xbf16>
    %639 = vector.shape_cast %638 : vector<1x8x32xbf16> to vector<8x32xbf16>
    %cst_333 = arith.constant dense<0.000000e+00> : vector<8x32xf32>
    %640 = tpu.matmul %637, %639, %cst_333 {dimension_numbers = #tpu.dot_dimension_numbers<[1], [0], [0], [1], [0, 0, 1, 1], [], []>} : vector<8x8xbf16>, vector<8x32xbf16>, vector<8x32xf32> -> vector<8x32xf32>
    %641 = vector.extract_strided_slice %451 {offsets = [8, 0], sizes = [8, 8], strides = [1, 1]} : vector<16x8xf32> to vector<8x8xf32>
    %642 = arith.truncf %641 : vector<8x8xf32> to vector<8x8xbf16>
    %643 = vector.extract_strided_slice %458 {offsets = [8, 0], sizes = [8, 8], strides = [1, 1]} : vector<16x8xf32> to vector<8x8xf32>
    %644 = arith.truncf %643 : vector<8x8xf32> to vector<8x8xbf16>
    %645 = vector.extract_strided_slice %465 {offsets = [8, 0], sizes = [8, 8], strides = [1, 1]} : vector<16x8xf32> to vector<8x8xf32>
    %646 = arith.truncf %645 : vector<8x8xf32> to vector<8x8xbf16>
    %cst_334 = arith.constant dense<0.000000e+00> : vector<8x8xf32>
    %647 = tpu.matmul %642, %644, %cst_334 {dimension_numbers = #tpu.dot_dimension_numbers<[1], [1], [0], [0], [0, 0, 1, 0], [], []>} : vector<8x8xbf16>, vector<8x8xbf16>, vector<8x8xf32> -> vector<8x8xf32>
    %cst_335 = arith.constant 0.353553385 : f32
    %648 = vector.broadcast %cst_335 : f32 to vector<8x8xf32>
    %649 = arith.mulf %647, %648 : vector<8x8xf32>
    %650 = arith.addf %649, %35 : vector<8x8xf32>
    %cst_336 = arith.constant dense<0xFF800000> : vector<8xf32>
    %651 = vector.multi_reduction <maximumf>, %650, %cst_336 [1] : vector<8x8xf32> to vector<8xf32>
    %652 = vector.shape_cast %651 : vector<8xf32> to vector<8x1xf32>
    %653 = vector.broadcast %652 : vector<8x1xf32> to vector<8x8xf32>
    %654 = arith.subf %650, %653 : vector<8x8xf32>
    %655 = math.exp %654 : vector<8x8xf32>
    %cst_337 = arith.constant dense<0.000000e+00> : vector<8xf32>
    %656 = vector.multi_reduction <add>, %655, %cst_337 [1] : vector<8x8xf32> to vector<8xf32>
    %657 = vector.shape_cast %656 : vector<8xf32> to vector<8x1xf32>
    %658 = tpu.reciprocal %657 {approx = true} : vector<8x1xf32> -> vector<8x1xf32>
    %659 = vector.broadcast %658 : vector<8x1xf32> to vector<8x8xf32>
    %660 = arith.mulf %655, %659 : vector<8x8xf32>
    %661 = arith.truncf %660 : vector<8x8xf32> to vector<8x8xbf16>
    %cst_338 = arith.constant dense<0.000000e+00> : vector<8x8xf32>
    %662 = tpu.matmul %661, %646, %cst_338 {dimension_numbers = #tpu.dot_dimension_numbers<[1], [0], [0], [1], [0, 0, 1, 1], [], []>} : vector<8x8xbf16>, vector<8x8xbf16>, vector<8x8xf32> -> vector<8x8xf32>
    %663 = arith.truncf %662 : vector<8x8xf32> to vector<8x8xbf16>
    %c5_339 = arith.constant 5 : index
    %c0_340 = arith.constant 0 : index
    %c0_341 = arith.constant 0 : index
    %664 = vector.load %arg10[%c5_339, %c0_340, %c0_341] : memref<8x8x32xbf16, #tpu.memory_space<vmem>>, vector<1x8x32xbf16>
    %665 = vector.shape_cast %664 : vector<1x8x32xbf16> to vector<8x32xbf16>
    %cst_342 = arith.constant dense<0.000000e+00> : vector<8x32xf32>
    %666 = tpu.matmul %663, %665, %cst_342 {dimension_numbers = #tpu.dot_dimension_numbers<[1], [0], [0], [1], [0, 0, 1, 1], [], []>} : vector<8x8xbf16>, vector<8x32xbf16>, vector<8x32xf32> -> vector<8x32xf32>
    %667 = arith.addf %640, %666 : vector<8x32xf32>
    %668 = vector.extract_strided_slice %472 {offsets = [8, 0], sizes = [8, 8], strides = [1, 1]} : vector<16x8xf32> to vector<8x8xf32>
    %669 = arith.truncf %668 : vector<8x8xf32> to vector<8x8xbf16>
    %670 = vector.extract_strided_slice %479 {offsets = [8, 0], sizes = [8, 8], strides = [1, 1]} : vector<16x8xf32> to vector<8x8xf32>
    %671 = arith.truncf %670 : vector<8x8xf32> to vector<8x8xbf16>
    %672 = vector.extract_strided_slice %486 {offsets = [8, 0], sizes = [8, 8], strides = [1, 1]} : vector<16x8xf32> to vector<8x8xf32>
    %673 = arith.truncf %672 : vector<8x8xf32> to vector<8x8xbf16>
    %cst_343 = arith.constant dense<0.000000e+00> : vector<8x8xf32>
    %674 = tpu.matmul %669, %671, %cst_343 {dimension_numbers = #tpu.dot_dimension_numbers<[1], [1], [0], [0], [0, 0, 1, 0], [], []>} : vector<8x8xbf16>, vector<8x8xbf16>, vector<8x8xf32> -> vector<8x8xf32>
    %cst_344 = arith.constant 0.353553385 : f32
    %675 = vector.broadcast %cst_344 : f32 to vector<8x8xf32>
    %676 = arith.mulf %674, %675 : vector<8x8xf32>
    %677 = arith.addf %676, %35 : vector<8x8xf32>
    %cst_345 = arith.constant dense<0xFF800000> : vector<8xf32>
    %678 = vector.multi_reduction <maximumf>, %677, %cst_345 [1] : vector<8x8xf32> to vector<8xf32>
    %679 = vector.shape_cast %678 : vector<8xf32> to vector<8x1xf32>
    %680 = vector.broadcast %679 : vector<8x1xf32> to vector<8x8xf32>
    %681 = arith.subf %677, %680 : vector<8x8xf32>
    %682 = math.exp %681 : vector<8x8xf32>
    %cst_346 = arith.constant dense<0.000000e+00> : vector<8xf32>
    %683 = vector.multi_reduction <add>, %682, %cst_346 [1] : vector<8x8xf32> to vector<8xf32>
    %684 = vector.shape_cast %683 : vector<8xf32> to vector<8x1xf32>
    %685 = tpu.reciprocal %684 {approx = true} : vector<8x1xf32> -> vector<8x1xf32>
    %686 = vector.broadcast %685 : vector<8x1xf32> to vector<8x8xf32>
    %687 = arith.mulf %682, %686 : vector<8x8xf32>
    %688 = arith.truncf %687 : vector<8x8xf32> to vector<8x8xbf16>
    %cst_347 = arith.constant dense<0.000000e+00> : vector<8x8xf32>
    %689 = tpu.matmul %688, %673, %cst_347 {dimension_numbers = #tpu.dot_dimension_numbers<[1], [0], [0], [1], [0, 0, 1, 1], [], []>} : vector<8x8xbf16>, vector<8x8xbf16>, vector<8x8xf32> -> vector<8x8xf32>
    %690 = arith.truncf %689 : vector<8x8xf32> to vector<8x8xbf16>
    %c6_348 = arith.constant 6 : index
    %c0_349 = arith.constant 0 : index
    %c0_350 = arith.constant 0 : index
    %691 = vector.load %arg10[%c6_348, %c0_349, %c0_350] : memref<8x8x32xbf16, #tpu.memory_space<vmem>>, vector<1x8x32xbf16>
    %692 = vector.shape_cast %691 : vector<1x8x32xbf16> to vector<8x32xbf16>
    %cst_351 = arith.constant dense<0.000000e+00> : vector<8x32xf32>
    %693 = tpu.matmul %690, %692, %cst_351 {dimension_numbers = #tpu.dot_dimension_numbers<[1], [0], [0], [1], [0, 0, 1, 1], [], []>} : vector<8x8xbf16>, vector<8x32xbf16>, vector<8x32xf32> -> vector<8x32xf32>
    %694 = arith.addf %667, %693 : vector<8x32xf32>
    %695 = vector.extract_strided_slice %493 {offsets = [8, 0], sizes = [8, 8], strides = [1, 1]} : vector<16x8xf32> to vector<8x8xf32>
    %696 = arith.truncf %695 : vector<8x8xf32> to vector<8x8xbf16>
    %697 = vector.extract_strided_slice %500 {offsets = [8, 0], sizes = [8, 8], strides = [1, 1]} : vector<16x8xf32> to vector<8x8xf32>
    %698 = arith.truncf %697 : vector<8x8xf32> to vector<8x8xbf16>
    %699 = vector.extract_strided_slice %507 {offsets = [8, 0], sizes = [8, 8], strides = [1, 1]} : vector<16x8xf32> to vector<8x8xf32>
    %700 = arith.truncf %699 : vector<8x8xf32> to vector<8x8xbf16>
    %cst_352 = arith.constant dense<0.000000e+00> : vector<8x8xf32>
    %701 = tpu.matmul %696, %698, %cst_352 {dimension_numbers = #tpu.dot_dimension_numbers<[1], [1], [0], [0], [0, 0, 1, 0], [], []>} : vector<8x8xbf16>, vector<8x8xbf16>, vector<8x8xf32> -> vector<8x8xf32>
    %cst_353 = arith.constant 0.353553385 : f32
    %702 = vector.broadcast %cst_353 : f32 to vector<8x8xf32>
    %703 = arith.mulf %701, %702 : vector<8x8xf32>
    %704 = arith.addf %703, %35 : vector<8x8xf32>
    %cst_354 = arith.constant dense<0xFF800000> : vector<8xf32>
    %705 = vector.multi_reduction <maximumf>, %704, %cst_354 [1] : vector<8x8xf32> to vector<8xf32>
    %706 = vector.shape_cast %705 : vector<8xf32> to vector<8x1xf32>
    %707 = vector.broadcast %706 : vector<8x1xf32> to vector<8x8xf32>
    %708 = arith.subf %704, %707 : vector<8x8xf32>
    %709 = math.exp %708 : vector<8x8xf32>
    %cst_355 = arith.constant dense<0.000000e+00> : vector<8xf32>
    %710 = vector.multi_reduction <add>, %709, %cst_355 [1] : vector<8x8xf32> to vector<8xf32>
    %711 = vector.shape_cast %710 : vector<8xf32> to vector<8x1xf32>
    %712 = tpu.reciprocal %711 {approx = true} : vector<8x1xf32> -> vector<8x1xf32>
    %713 = vector.broadcast %712 : vector<8x1xf32> to vector<8x8xf32>
    %714 = arith.mulf %709, %713 : vector<8x8xf32>
    %715 = arith.truncf %714 : vector<8x8xf32> to vector<8x8xbf16>
    %cst_356 = arith.constant dense<0.000000e+00> : vector<8x8xf32>
    %716 = tpu.matmul %715, %700, %cst_356 {dimension_numbers = #tpu.dot_dimension_numbers<[1], [0], [0], [1], [0, 0, 1, 1], [], []>} : vector<8x8xbf16>, vector<8x8xbf16>, vector<8x8xf32> -> vector<8x8xf32>
    %717 = arith.truncf %716 : vector<8x8xf32> to vector<8x8xbf16>
    %c7_357 = arith.constant 7 : index
    %c0_358 = arith.constant 0 : index
    %c0_359 = arith.constant 0 : index
    %718 = vector.load %arg10[%c7_357, %c0_358, %c0_359] : memref<8x8x32xbf16, #tpu.memory_space<vmem>>, vector<1x8x32xbf16>
    %719 = vector.shape_cast %718 : vector<1x8x32xbf16> to vector<8x32xbf16>
    %cst_360 = arith.constant dense<0.000000e+00> : vector<8x32xf32>
    %720 = tpu.matmul %717, %719, %cst_360 {dimension_numbers = #tpu.dot_dimension_numbers<[1], [0], [0], [1], [0, 0, 1, 1], [], []>} : vector<8x8xbf16>, vector<8x32xbf16>, vector<8x32xf32> -> vector<8x32xf32>
    %721 = arith.addf %694, %720 : vector<8x32xf32>
    %722 = tpu.concatenate %614, %721 in 0 : vector<8x32xf32>, vector<8x32xf32> -> vector<16x32xf32>
    %c1_361 = arith.constant 1 : index
    %c0_362 = arith.constant 0 : index
    %c0_363 = arith.constant 0 : index
    %723 = vector.load %arg11[%c1_361, %c0_362, %c0_363] : memref<2x1x32xf32, #tpu.memory_space<vmem>>, vector<1x1x32xf32>
    %724 = vector.shape_cast %723 : vector<1x1x32xf32> to vector<1x32xf32>
    %725 = vector.broadcast %724 : vector<1x32xf32> to vector<16x32xf32>
    %726 = arith.addf %722, %725 : vector<16x32xf32>
    %727 = arith.addf %422, %726 : vector<16x32xf32>
    %c1_364 = arith.constant 1 : index
    %c0_365 = arith.constant 0 : index
    %c0_366 = arith.constant 0 : index
    %728 = vector.load %arg12[%c1_364, %c0_365, %c0_366] : memref<2x1x32xf32, #tpu.memory_space<vmem>>, vector<1x1x32xf32>
    %729 = vector.shape_cast %728 : vector<1x1x32xf32> to vector<1x32xf32>
    %c1_367 = arith.constant 1 : index
    %c0_368 = arith.constant 0 : index
    %c0_369 = arith.constant 0 : index
    %730 = vector.load %arg13[%c1_367, %c0_368, %c0_369] : memref<2x1x32xf32, #tpu.memory_space<vmem>>, vector<1x1x32xf32>
    %731 = vector.shape_cast %730 : vector<1x1x32xf32> to vector<1x32xf32>
    %cst_370 = arith.constant dense<0.000000e+00> : vector<16xf32>
    %732 = vector.multi_reduction <add>, %727, %cst_370 [1] : vector<16x32xf32> to vector<16xf32>
    %733 = vector.shape_cast %732 : vector<16xf32> to vector<16x1xf32>
    %cst_371 = arith.constant 3.200000e+01 : f32
    %734 = vector.broadcast %cst_371 : f32 to vector<16x1xf32>
    %735 = arith.divf %733, %734 : vector<16x1xf32>
    %736 = vector.broadcast %735 : vector<16x1xf32> to vector<16x32xf32>
    %737 = arith.subf %727, %736 : vector<16x32xf32>
    %738 = arith.mulf %737, %737 : vector<16x32xf32>
    %cst_372 = arith.constant dense<0.000000e+00> : vector<16xf32>
    %739 = vector.multi_reduction <add>, %738, %cst_372 [1] : vector<16x32xf32> to vector<16xf32>
    %740 = vector.shape_cast %739 : vector<16xf32> to vector<16x1xf32>
    %cst_373 = arith.constant 3.200000e+01 : f32
    %741 = vector.broadcast %cst_373 : f32 to vector<16x1xf32>
    %742 = arith.divf %740, %741 : vector<16x1xf32>
    %743 = vector.broadcast %735 : vector<16x1xf32> to vector<16x32xf32>
    %744 = arith.subf %727, %743 : vector<16x32xf32>
    %cst_374 = arith.constant 9.99999974E-6 : f32
    %745 = vector.broadcast %cst_374 : f32 to vector<16x1xf32>
    %746 = arith.addf %742, %745 : vector<16x1xf32>
    %747 = math.rsqrt %746 : vector<16x1xf32>
    %748 = vector.broadcast %747 : vector<16x1xf32> to vector<16x32xf32>
    %749 = arith.mulf %744, %748 : vector<16x32xf32>
    %750 = vector.broadcast %729 : vector<1x32xf32> to vector<16x32xf32>
    %751 = arith.mulf %749, %750 : vector<16x32xf32>
    %752 = vector.broadcast %731 : vector<1x32xf32> to vector<16x32xf32>
    %753 = arith.addf %751, %752 : vector<16x32xf32>
    %754 = arith.truncf %753 : vector<16x32xf32> to vector<16x32xbf16>
    %c1_375 = arith.constant 1 : index
    %c0_376 = arith.constant 0 : index
    %c0_377 = arith.constant 0 : index
    %755 = vector.load %arg14[%c1_375, %c0_376, %c0_377] : memref<2x32x64xbf16, #tpu.memory_space<vmem>>, vector<1x32x64xbf16>
    %756 = vector.shape_cast %755 : vector<1x32x64xbf16> to vector<32x64xbf16>
    %cst_378 = arith.constant dense<0.000000e+00> : vector<16x64xf32>
    %757 = tpu.matmul %754, %756, %cst_378 {dimension_numbers = #tpu.dot_dimension_numbers<[1], [0], [0], [1], [0, 0, 1, 1], [], []>} : vector<16x32xbf16>, vector<32x64xbf16>, vector<16x64xf32> -> vector<16x64xf32>
    %c1_379 = arith.constant 1 : index
    %c0_380 = arith.constant 0 : index
    %c0_381 = arith.constant 0 : index
    %758 = vector.load %arg15[%c1_379, %c0_380, %c0_381] : memref<2x1x64xf32, #tpu.memory_space<vmem>>, vector<1x1x64xf32>
    %759 = vector.shape_cast %758 : vector<1x1x64xf32> to vector<1x64xf32>
    %760 = vector.broadcast %759 : vector<1x64xf32> to vector<16x64xf32>
    %761 = arith.addf %757, %760 : vector<16x64xf32>
    %cst_382 = arith.constant 5.000000e-01 : f32
    %762 = vector.broadcast %cst_382 : f32 to vector<16x64xf32>
    %763 = arith.mulf %762, %761 : vector<16x64xf32>
    %cst_383 = arith.constant 4.471500e-02 : f32
    %764 = vector.broadcast %cst_383 : f32 to vector<16x64xf32>
    %765 = arith.mulf %764, %761 : vector<16x64xf32>
    %766 = arith.mulf %765, %761 : vector<16x64xf32>
    %767 = arith.mulf %766, %761 : vector<16x64xf32>
    %768 = arith.addf %761, %767 : vector<16x64xf32>
    %cst_384 = arith.constant 0.797884583 : f32
    %769 = vector.broadcast %cst_384 : f32 to vector<16x64xf32>
    %770 = arith.mulf %769, %768 : vector<16x64xf32>
    %771 = math.tanh %770 : vector<16x64xf32>
    %cst_385 = arith.constant 1.000000e+00 : f32
    %772 = vector.broadcast %cst_385 : f32 to vector<16x64xf32>
    %773 = arith.addf %772, %771 : vector<16x64xf32>
    %774 = arith.mulf %763, %773 : vector<16x64xf32>
    %775 = arith.truncf %774 : vector<16x64xf32> to vector<16x64xbf16>
    %c1_386 = arith.constant 1 : index
    %c0_387 = arith.constant 0 : index
    %c0_388 = arith.constant 0 : index
    %776 = vector.load %arg16[%c1_386, %c0_387, %c0_388] : memref<2x64x32xbf16, #tpu.memory_space<vmem>>, vector<1x64x32xbf16>
    %777 = vector.shape_cast %776 : vector<1x64x32xbf16> to vector<64x32xbf16>
    %cst_389 = arith.constant dense<0.000000e+00> : vector<16x32xf32>
    %778 = tpu.matmul %775, %777, %cst_389 {dimension_numbers = #tpu.dot_dimension_numbers<[1], [0], [0], [1], [0, 0, 1, 1], [], []>} : vector<16x64xbf16>, vector<64x32xbf16>, vector<16x32xf32> -> vector<16x32xf32>
    %c1_390 = arith.constant 1 : index
    %c0_391 = arith.constant 0 : index
    %c0_392 = arith.constant 0 : index
    %779 = vector.load %arg17[%c1_390, %c0_391, %c0_392] : memref<2x1x32xf32, #tpu.memory_space<vmem>>, vector<1x1x32xf32>
    %780 = vector.shape_cast %779 : vector<1x1x32xf32> to vector<1x32xf32>
    %781 = vector.broadcast %780 : vector<1x32xf32> to vector<16x32xf32>
    %782 = arith.addf %778, %781 : vector<16x32xf32>
    %783 = arith.addf %753, %782 : vector<16x32xf32>
    %c1_393 = arith.constant 1 : index
    %c0_394 = arith.constant 0 : index
    %c0_395 = arith.constant 0 : index
    %784 = vector.load %arg18[%c1_393, %c0_394, %c0_395] : memref<2x1x32xf32, #tpu.memory_space<vmem>>, vector<1x1x32xf32>
    %785 = vector.shape_cast %784 : vector<1x1x32xf32> to vector<1x32xf32>
    %c1_396 = arith.constant 1 : index
    %c0_397 = arith.constant 0 : index
    %c0_398 = arith.constant 0 : index
    %786 = vector.load %arg19[%c1_396, %c0_397, %c0_398] : memref<2x1x32xf32, #tpu.memory_space<vmem>>, vector<1x1x32xf32>
    %787 = vector.shape_cast %786 : vector<1x1x32xf32> to vector<1x32xf32>
    %cst_399 = arith.constant dense<0.000000e+00> : vector<16xf32>
    %788 = vector.multi_reduction <add>, %783, %cst_399 [1] : vector<16x32xf32> to vector<16xf32>
    %789 = vector.shape_cast %788 : vector<16xf32> to vector<16x1xf32>
    %cst_400 = arith.constant 3.200000e+01 : f32
    %790 = vector.broadcast %cst_400 : f32 to vector<16x1xf32>
    %791 = arith.divf %789, %790 : vector<16x1xf32>
    %792 = vector.broadcast %791 : vector<16x1xf32> to vector<16x32xf32>
    %793 = arith.subf %783, %792 : vector<16x32xf32>
    %794 = arith.mulf %793, %793 : vector<16x32xf32>
    %cst_401 = arith.constant dense<0.000000e+00> : vector<16xf32>
    %795 = vector.multi_reduction <add>, %794, %cst_401 [1] : vector<16x32xf32> to vector<16xf32>
    %796 = vector.shape_cast %795 : vector<16xf32> to vector<16x1xf32>
    %cst_402 = arith.constant 3.200000e+01 : f32
    %797 = vector.broadcast %cst_402 : f32 to vector<16x1xf32>
    %798 = arith.divf %796, %797 : vector<16x1xf32>
    %799 = vector.broadcast %791 : vector<16x1xf32> to vector<16x32xf32>
    %800 = arith.subf %783, %799 : vector<16x32xf32>
    %cst_403 = arith.constant 9.99999974E-6 : f32
    %801 = vector.broadcast %cst_403 : f32 to vector<16x1xf32>
    %802 = arith.addf %798, %801 : vector<16x1xf32>
    %803 = math.rsqrt %802 : vector<16x1xf32>
    %804 = vector.broadcast %803 : vector<16x1xf32> to vector<16x32xf32>
    %805 = arith.mulf %800, %804 : vector<16x32xf32>
    %806 = vector.broadcast %785 : vector<1x32xf32> to vector<16x32xf32>
    %807 = arith.mulf %805, %806 : vector<16x32xf32>
    %808 = vector.broadcast %787 : vector<1x32xf32> to vector<16x32xf32>
    %809 = arith.addf %807, %808 : vector<16x32xf32>
    %810 = vector.extract_strided_slice %809 {offsets = [0, 0], sizes = [1, 32], strides = [1, 1]} : vector<16x32xf32> to vector<1x32xf32>
    %811 = vector.extract_strided_slice %809 {offsets = [8, 0], sizes = [1, 32], strides = [1, 1]} : vector<16x32xf32> to vector<1x32xf32>
    %812 = tpu.concatenate %810, %811 in 0 : vector<1x32xf32>, vector<1x32xf32> -> vector<2x32xf32>
    %813 = arith.truncf %812 : vector<2x32xf32> to vector<2x32xbf16>
    %c0_404 = arith.constant 0 : index
    %c0_405 = arith.constant 0 : index
    %814 = vector.load %arg21[%c0_404, %c0_405] : memref<32x128xbf16, #tpu.memory_space<vmem>>, vector<32x128xbf16>
    %cst_406 = arith.constant dense<0.000000e+00> : vector<2x128xf32>
    %815 = tpu.matmul %813, %814, %cst_406 {dimension_numbers = #tpu.dot_dimension_numbers<[1], [0], [0], [1], [0, 0, 1, 1], [], []>} : vector<2x32xbf16>, vector<32x128xbf16>, vector<2x128xf32> -> vector<2x128xf32>
    %c0_407 = arith.constant 0 : index
    %c0_408 = arith.constant 0 : index
    %816 = vector.load %arg20[%c0_407, %c0_408] : memref<2x24xf32, #tpu.memory_space<vmem>>, vector<2x24xf32>
    %817 = arith.truncf %816 : vector<2x24xf32> to vector<2x24xbf16>
    %c0_409 = arith.constant 0 : index
    %c0_410 = arith.constant 0 : index
    %818 = vector.load %arg22[%c0_409, %c0_410] : memref<24x128xbf16, #tpu.memory_space<vmem>>, vector<24x128xbf16>
    %cst_411 = arith.constant dense<0.000000e+00> : vector<2x128xf32>
    %819 = tpu.matmul %817, %818, %cst_411 {dimension_numbers = #tpu.dot_dimension_numbers<[1], [0], [0], [1], [0, 0, 1, 1], [], []>} : vector<2x24xbf16>, vector<24x128xbf16>, vector<2x128xf32> -> vector<2x128xf32>
    %820 = arith.addf %815, %819 : vector<2x128xf32>
    %c0_412 = arith.constant 0 : index
    %c0_413 = arith.constant 0 : index
    %821 = vector.load %arg23[%c0_412, %c0_413] : memref<1x128xf32, #tpu.memory_space<vmem>>, vector<1x128xf32>
    %822 = vector.broadcast %821 : vector<1x128xf32> to vector<2x128xf32>
    %823 = arith.addf %820, %822 : vector<2x128xf32>
    %c0_414 = arith.constant 0 : index
    %c0_415 = arith.constant 0 : index
    %824 = vector.load %arg24[%c0_414, %c0_415] : memref<2x128xf32, #tpu.memory_space<vmem>>, vector<2x128xf32>
    tpu.vector_store %arg24[%c0_414, %c0_415], %823 {strides = array<i32>} : memref<2x128xf32, #tpu.memory_space<vmem>>, vector<2x128xf32>,
    return
  }
}

</mosaic_0001>

<llo_original>
// kernel: bert_class_forward.1
$region0: #{bert_class_forward.1}
  #allocation0 [shape = 'u32[]', space=smem, size = 0x4, offset = 0x4, fixed_abs, tag = 'smem constant byte address 0x4 - core index']
  #allocation1 [shape = 'u32[72,128]{1,0:T(1,128)}', space=vmem, size = 0x9000, scoped, tag = 'internal scratch']
  %s0 = inlined_call_operand.vmem [shape: f32[16,32], index: 0, kind: input, shape index: {}]
  %s1 = inlined_call_operand.vmem [shape: f32[2,8], index: 1, kind: input, shape index: {}]
  %s2 = inlined_call_operand.vmem [shape: f32[1,32], index: 2, kind: input, shape index: {}]
  %s3 = inlined_call_operand.vmem [shape: f32[1,32], index: 3, kind: input, shape index: {}]
  %s4 = inlined_call_operand.vmem [shape: bf16[8,32,8], index: 4, kind: input, shape index: {}]
  %s5 = inlined_call_operand.vmem [shape: f32[8,1,8], index: 5, kind: input, shape index: {}]
  %s6 = inlined_call_operand.vmem [shape: bf16[8,32,8], index: 6, kind: input, shape index: {}]
  %s7 = inlined_call_operand.vmem [shape: f32[8,1,8], index: 7, kind: input, shape index: {}]
  %s8 = inlined_call_operand.vmem [shape: bf16[8,32,8], index: 8, kind: input, shape index: {}]
  %s9 = inlined_call_operand.vmem [shape: f32[8,1,8], index: 9, kind: input, shape index: {}]
  %s10 = inlined_call_operand.vmem [shape: bf16[8,8,32], index: 10, kind: input, shape index: {}]
  %s11 = inlined_call_operand.vmem [shape: f32[2,1,32], index: 11, kind: input, shape index: {}]
  %s12 = inlined_call_operand.vmem [shape: f32[2,1,32], index: 12, kind: input, shape index: {}]
  %s13 = inlined_call_operand.vmem [shape: f32[2,1,32], index: 13, kind: input, shape index: {}]
  %s14 = inlined_call_operand.vmem [shape: bf16[2,32,64], index: 14, kind: input, shape index: {}]
  %s15 = inlined_call_operand.vmem [shape: f32[2,1,64], index: 15, kind: input, shape index: {}]
  %s16 = inlined_call_operand.vmem [shape: bf16[2,64,32], index: 16, kind: input, shape index: {}]
  %s17 = inlined_call_operand.vmem [shape: f32[2,1,32], index: 17, kind: input, shape index: {}]
  %s18 = inlined_call_operand.vmem [shape: f32[2,1,32], index: 18, kind: input, shape index: {}]
  %s19 = inlined_call_operand.vmem [shape: f32[2,1,32], index: 19, kind: input, shape index: {}]
  %s20 = inlined_call_operand.vmem [shape: f32[2,24], index: 20, kind: input, shape index: {}]
  %s21 = inlined_call_operand.vmem [shape: bf16[32,128], index: 21, kind: input, shape index: {}]
  %s22 = inlined_call_operand.vmem [shape: bf16[24,128], index: 22, kind: input, shape index: {}]
  %s23 = inlined_call_operand.vmem [shape: f32[1,128], index: 23, kind: input, shape index: {}]
  %s24 = inlined_call_operand.hbm [shape: f32[2,128], index: 24, kind: output, shape index: {}]
  %s25 = sld [smem:[#allocation0]]
  $region106: #{bert_class_forward.1} parent=0
    _
  %s27 = ssub.s32 1, %s25
  %s28 = scalar_select 0, %s27, %s25
  $region1: #{bert_class_forward.1} parent=0
    #allocation2 [shape = 'u8[1024]{0}', space=vmem, size = 0x400, scoped, tag = 'output window, operand 0, single buffered']
    #allocation3 [shape = 's32[1]{0}', space=sflag, size = 0x4, scoped, tag = 'scoped memory for bert_class_forward.1']
    %29 = vsyncpa [#allocation3], 0
    // Predicated region
    $region2: #{bert_class_forward.1} parent=1 // pred_check
      _
    $region3: #{bert_class_forward.1} parent=1 // pred_check_branch
      %31 = sbr.rel (0) target = $region5
    $region4: #{bert_class_forward.1} parent=1 // pred_region
      _
    $region5: #{bert_class_forward.1} parent=1 // pred_fallthru
      _
    // Predicated region
    $region6: #{bert_class_forward.1} parent=1 // pred_check
      _
    $region7: #{bert_class_forward.1} parent=1 // pred_check_branch
      %33 = sbr.rel (0) target = $region9
    $region8: #{bert_class_forward.1} parent=1 // pred_region
      _
    $region9: #{bert_class_forward.1} parent=1 // pred_fallthru
      _
    // Predicated region
    $region10: #{bert_class_forward.1} parent=1 // pred_check
      _
    $region11: #{bert_class_forward.1} parent=1 // pred_check_branch
      %35 = sbr.rel (0) target = $region13
    $region12: #{bert_class_forward.1} parent=1 // pred_region
      _
    $region13: #{bert_class_forward.1} parent=1 // pred_fallthru
      _
    // Predicated region
    $region14: #{bert_class_forward.1} parent=1 // pred_check
      _
    $region15: #{bert_class_forward.1} parent=1 // pred_check_branch
      %37 = sbr.rel (0) target = $region17
    $region16: #{bert_class_forward.1} parent=1 // pred_region
      _
    $region17: #{bert_class_forward.1} parent=1 // pred_fallthru
      _
    // Predicated region
    $region18: #{bert_class_forward.1} parent=1 // pred_check
      _
    $region19: #{bert_class_forward.1} parent=1 // pred_check_branch
      %39 = sbr.rel (0) target = $region21
    $region20: #{bert_class_forward.1} parent=1 // pred_region
      _
    $region21: #{bert_class_forward.1} parent=1 // pred_fallthru
      _
    // Predicated region
    $region22: #{bert_class_forward.1} parent=1 // pred_check
      _
    $region23: #{bert_class_forward.1} parent=1 // pred_check_branch
      %41 = sbr.rel (0) target = $region25
    $region24: #{bert_class_forward.1} parent=1 // pred_region
      _
    $region25: #{bert_class_forward.1} parent=1 // pred_fallthru
      _
    // Predicated region
    $region26: #{bert_class_forward.1} parent=1 // pred_check
      _
    $region27: #{bert_class_forward.1} parent=1 // pred_check_branch
      %43 = sbr.rel (0) target = $region29
    $region28: #{bert_class_forward.1} parent=1 // pred_region
      _
    $region29: #{bert_class_forward.1} parent=1 // pred_fallthru
      _
    // Predicated region
    $region30: #{bert_class_forward.1} parent=1 // pred_check
      _
    $region31: #{bert_class_forward.1} parent=1 // pred_check_branch
      %45 = sbr.rel (0) target = $region33
    $region32: #{bert_class_forward.1} parent=1 // pred_region
      _
    $region33: #{bert_class_forward.1} parent=1 // pred_fallthru
      _
    // Predicated region
    $region34: #{bert_class_forward.1} parent=1 // pred_check
      _
    $region35: #{bert_class_forward.1} parent=1 // pred_check_branch
      %47 = sbr.rel (0) target = $region37
    $region36: #{bert_class_forward.1} parent=1 // pred_region
      _
    $region37: #{bert_class_forward.1} parent=1 // pred_fallthru
      _
    // Predicated region
    $region38: #{bert_class_forward.1} parent=1 // pred_check
      _
    $region39: #{bert_class_forward.1} parent=1 // pred_check_branch
      %49 = sbr.rel (0) target = $region41
    $region40: #{bert_class_forward.1} parent=1 // pred_region
      _
    $region41: #{bert_class_forward.1} parent=1 // pred_fallthru
      _
    // Predicated region
    $region42: #{bert_class_forward.1} parent=1 // pred_check
      _
    $region43: #{bert_class_forward.1} parent=1 // pred_check_branch
      %51 = sbr.rel (0) target = $region45
    $region44: #{bert_class_forward.1} parent=1 // pred_region
      _
    $region45: #{bert_class_forward.1} parent=1 // pred_fallthru
      _
    // Predicated region
    $region46: #{bert_class_forward.1} parent=1 // pred_check
      _
    $region47: #{bert_class_forward.1} parent=1 // pred_check_branch
      %53 = sbr.rel (0) target = $region49
    $region48: #{bert_class_forward.1} parent=1 // pred_region
      _
    $region49: #{bert_class_forward.1} parent=1 // pred_fallthru
      _
    // Predicated region
    $region50: #{bert_class_forward.1} parent=1 // pred_check
      _
    $region51: #{bert_class_forward.1} parent=1 // pred_check_branch
      %55 = sbr.rel (0) target = $region53
    $region52: #{bert_class_forward.1} parent=1 // pred_region
      _
    $region53: #{bert_class_forward.1} parent=1 // pred_fallthru
      _
    // Predicated region
    $region54: #{bert_class_forward.1} parent=1 // pred_check
      _
    $region55: #{bert_class_forward.1} parent=1 // pred_check_branch
      %57 = sbr.rel (0) target = $region57
    $region56: #{bert_class_forward.1} parent=1 // pred_region
      _
    $region57: #{bert_class_forward.1} parent=1 // pred_fallthru
      _
    // Predicated region
    $region58: #{bert_class_forward.1} parent=1 // pred_check
      _
    $region59: #{bert_class_forward.1} parent=1 // pred_check_branch
      %59 = sbr.rel (0) target = $region61
    $region60: #{bert_class_forward.1} parent=1 // pred_region
      _
    $region61: #{bert_class_forward.1} parent=1 // pred_fallthru
      _
    // Predicated region
    $region62: #{bert_class_forward.1} parent=1 // pred_check
      _
    $region63: #{bert_class_forward.1} parent=1 // pred_check_branch
      %61 = sbr.rel (0) target = $region65
    $region64: #{bert_class_forward.1} parent=1 // pred_region
      _
    $region65: #{bert_class_forward.1} parent=1 // pred_fallthru
      _
    // Predicated region
    $region66: #{bert_class_forward.1} parent=1 // pred_check
      _
    $region67: #{bert_class_forward.1} parent=1 // pred_check_branch
      %63 = sbr.rel (0) target = $region69
    $region68: #{bert_class_forward.1} parent=1 // pred_region
      _
    $region69: #{bert_class_forward.1} parent=1 // pred_fallthru
      _
    // Predicated region
    $region70: #{bert_class_forward.1} parent=1 // pred_check
      _
    $region71: #{bert_class_forward.1} parent=1 // pred_check_branch
      %65 = sbr.rel (0) target = $region73
    $region72: #{bert_class_forward.1} parent=1 // pred_region
      _
    $region73: #{bert_class_forward.1} parent=1 // pred_fallthru
      _
    // Predicated region
    $region74: #{bert_class_forward.1} parent=1 // pred_check
      _
    $region75: #{bert_class_forward.1} parent=1 // pred_check_branch
      %67 = sbr.rel (0) target = $region77
    $region76: #{bert_class_forward.1} parent=1 // pred_region
      _
    $region77: #{bert_class_forward.1} parent=1 // pred_fallthru
      _
    // Predicated region
    $region78: #{bert_class_forward.1} parent=1 // pred_check
      _
    $region79: #{bert_class_forward.1} parent=1 // pred_check_branch
      %69 = sbr.rel (0) target = $region81
    $region80: #{bert_class_forward.1} parent=1 // pred_region
      _
    $region81: #{bert_class_forward.1} parent=1 // pred_fallthru
      _
    // Predicated region
    $region82: #{bert_class_forward.1} parent=1 // pred_check
      _
    $region83: #{bert_class_forward.1} parent=1 // pred_check_branch
      %71 = sbr.rel (0) target = $region85
    $region84: #{bert_class_forward.1} parent=1 // pred_region
      _
    $region85: #{bert_class_forward.1} parent=1 // pred_fallthru
      _
    // Predicated region
    $region86: #{bert_class_forward.1} parent=1 // pred_check
      _
    $region87: #{bert_class_forward.1} parent=1 // pred_check_branch
      %73 = sbr.rel (0) target = $region89
    $region88: #{bert_class_forward.1} parent=1 // pred_region
      _
    $region89: #{bert_class_forward.1} parent=1 // pred_fallthru
      _
    // Predicated region
    $region90: #{bert_class_forward.1} parent=1 // pred_check
      _
    $region91: #{bert_class_forward.1} parent=1 // pred_check_branch
      %75 = sbr.rel (0) target = $region93
    $region92: #{bert_class_forward.1} parent=1 // pred_region
      _
    $region93: #{bert_class_forward.1} parent=1 // pred_fallthru
      _
    // Predicated region
    $region94: #{bert_class_forward.1} parent=1 // pred_check
      _
    $region95: #{bert_class_forward.1} parent=1 // pred_check_branch
      %77 = sbr.rel (0) target = $region97
    $region96: #{bert_class_forward.1} parent=1 // pred_region
      _
    $region97: #{bert_class_forward.1} parent=1 // pred_fallthru
      _
    %v79 = vld [vmem:[%s0] sm:$0xff]
    %v80 = vld [vmem:[%s0 + $0x8] sm:$0xff]
    %v81 = vld [vmem:[%s2] sm:$0x1]
    %v82 = vld [vmem:[%s3] sm:$0x1]
    %vm83 = vcmask 261120
    %v84 = vsel %vm83, %v79, 0.0
    %85 = vadd.xlane.f32.xlu0 %v84
    %v86 = vpop.xlane.xlu0 %85
    %v87 = vsel %vm83, %v80, 0.0
    %88 = vadd.xlane.f32.xlu0 %v87
    %v89 = vpop.xlane.xlu0 %88
    %v90 = vrcp.pop 32.0
    %v91 = vmul.f32 32.0, %v90
    %v92 = vsub.f32 1.0, %v91
    %v93 = vmul.f32 %v90, %v92
    %v94 = vadd.f32 %v90, %v93
    %vm95 = vweird.f32 %v90
    %v96 = vsel %vm95, %v90, %v94
    %v97 = vmul.f32 %v86, %v96
    %v98 = vmul.f32 %v89, %v96
    %v99 = vsub.f32 %v79, %v97
    %v100 = vsub.f32 %v80, %v98
    %v101 = vmul.f32 %v99, %v99
    %v102 = vmul.f32 %v100, %v100
    %v103 = vsel %vm83, %v101, 0.0
    %104 = vadd.xlane.f32.xlu0 %v103
    %v105 = vpop.xlane.xlu0 %104
    %v106 = vsel %vm83, %v102, 0.0
    %107 = vadd.xlane.f32.xlu0 %v106
    %v108 = vpop.xlane.xlu0 %107
    %v109 = vmul.f32 %v105, %v96
    %v110 = vmul.f32 %v108, %v96
    %v111 = vadd.f32 %v109, 1e-05
    %v112 = vadd.f32 %v110, 1e-05
    %v113 = vrsqrt.pop %v111
    %v114 = vmul.f32 %v113, %v111
    %v115 = vmul.f32 %v114, %v113
    %v116 = vmul.f32 0.5, %v115
    %v117 = vsub.f32 1.5, %v116
    %v118 = vmul.f32 %v113, %v117
    %vm119 = vweird.f32 %v111
    %vm120 = vweird.f32 %v113
    %vm121 = vmor %vm119, %vm120
    %v122 = vsel %vm121, %v113, %v118
    %v123 = vrsqrt.pop %v112
    %v124 = vmul.f32 %v123, %v112
    %v125 = vmul.f32 %v124, %v123
    %v126 = vmul.f32 0.5, %v125
    %v127 = vsub.f32 1.5, %v126
    %v128 = vmul.f32 %v123, %v127
    %vm129 = vweird.f32 %v112
    %vm130 = vweird.f32 %v123
    %vm131 = vmor %vm129, %vm130
    %v132 = vsel %vm131, %v123, %v128
    %v133 = vmul.f32 %v99, %v122
    %v134 = vmul.f32 %v100, %v132
    %v136 = vperm.slane %v81, 0
    %v138 = vmul.f32 %v133, %v136
    %v139 = vmul.f32 %v134, %v136
    %v141 = vperm.slane %v82, 0
    %v143 = vadd.f32 %v138, %v141
    %v144 = vadd.f32 %v139, %v141
    %v145 = vld [vmem:[%s1] sm:$0x3]
    %v146 = vsub.f32 1.0, %v145
    %v147 = vmul.f32 %v146, -1e+09
    %v148 = vperm.slane %v147, 0
    %v149 = vperm.slane %v147, 1
    %v150 = vpack.c.bf16 %v144, %v143
    %v151 = vld [vmem:[%s4] sm:$0xf]
    %v152 = vld [vmem:[%s4 + $0x4] sm:$0xf]
    %v153 = vld [vmem:[%s4 + $0x8] sm:$0xf]
    %v154 = vld [vmem:[%s4 + $0xc] sm:$0xf]
    %v155 = vld [vmem:[%s5] sm:$0x1]
    %v157 = vperm.slane %v155, 0
    %v163 = vunpack.c.l.b16 %v151
    %v164 = vunpack.c.l.b16 %v152
    %v165 = vunpack.c.l.b16 %v153
    %v166 = vunpack.c.l.b16 %v154
    %v167 = vpack.c.b16 %v164, %v163
    %v168 = vpack.c.b16 %v166, %v165
    %v172 = vsel %vm83, %v150, 0
    %174 = vmatpush.bf16.msra.mxu0 0
    %175 = vmatpush.bf16.msra.mxu0 0
    %176 = vmatpush.bf16.msra.mxu0 0
    %177 = vmatpush.bf16.msra.mxu0 0
    %178 = vmatpush.bf16.msra.mxu0 0
    %179 = vmatpush.bf16.msra.mxu0 0
    %180 = vmatpush.bf16.msra.mxu0 %v168
    %181 = vmatpush.bf16.msra.mxu0 %v167
    %182 = vmatmul.bf16.gmra.mxu0 %v172
    %v183 = vpop.f32.mrf.mxu0
    %v184 = vadd.f32 %v157, %v183
    %v185 = vpop.f32.mrf.mxu0
    %v186 = vadd.f32 %v157, %v185
    %187 = vdwg.mxu0
    %v188 = vld [vmem:[%s6] sm:$0xf]
    %v189 = vld [vmem:[%s6 + $0x4] sm:$0xf]
    %v190 = vld [vmem:[%s6 + $0x8] sm:$0xf]
    %v191 = vld [vmem:[%s6 + $0xc] sm:$0xf]
    %v192 = vld [vmem:[%s7] sm:$0x1]
    %v194 = vperm.slane %v192, 0
    %v200 = vunpack.c.l.b16 %v188
    %v201 = vunpack.c.l.b16 %v189
    %v202 = vunpack.c.l.b16 %v190
    %v203 = vunpack.c.l.b16 %v191
    %v204 = vpack.c.b16 %v201, %v200
    %v205 = vpack.c.b16 %v203, %v202
    %208 = vmatpush.bf16.msra.mxu0 0
    %209 = vmatpush.bf16.msra.mxu0 0
    %210 = vmatpush.bf16.msra.mxu0 0
    %211 = vmatpush.bf16.msra.mxu0 0
    %212 = vmatpush.bf16.msra.mxu0 0
    %213 = vmatpush.bf16.msra.mxu0 0
    %214 = vmatpush.bf16.msra.mxu0 %v205
    %215 = vmatpush.bf16.msra.mxu0 %v204
    %216 = vmatmul.bf16.gmra.mxu0 %v172
    %v217 = vpop.f32.mrf.mxu0
    %v218 = vadd.f32 %v194, %v217
    %v219 = vpop.f32.mrf.mxu0
    %v220 = vadd.f32 %v194, %v219
    %221 = vdwg.mxu0
    %v222 = vld [vmem:[%s8] sm:$0xf]
    %v223 = vld [vmem:[%s8 + $0x4] sm:$0xf]
    %v224 = vld [vmem:[%s8 + $0x8] sm:$0xf]
    %v225 = vld [vmem:[%s8 + $0xc] sm:$0xf]
    %v226 = vld [vmem:[%s9] sm:$0x1]
    %v228 = vperm.slane %v226, 0
    %v234 = vunpack.c.l.b16 %v222
    %v235 = vunpack.c.l.b16 %v223
    %v236 = vunpack.c.l.b16 %v224
    %v237 = vunpack.c.l.b16 %v225
    %v238 = vpack.c.b16 %v235, %v234
    %v239 = vpack.c.b16 %v237, %v236
    %242 = vmatpush.bf16.msra.mxu0 0
    %243 = vmatpush.bf16.msra.mxu0 0
    %244 = vmatpush.bf16.msra.mxu0 0
    %245 = vmatpush.bf16.msra.mxu0 0
    %246 = vmatpush.bf16.msra.mxu0 0
    %247 = vmatpush.bf16.msra.mxu0 0
    %248 = vmatpush.bf16.msra.mxu0 %v239
    %249 = vmatpush.bf16.msra.mxu0 %v238
    %250 = vmatmul.bf16.gmra.mxu0 %v172
    %v251 = vpop.f32.mrf.mxu0
    %v252 = vadd.f32 %v228, %v251
    %v253 = vpop.f32.mrf.mxu0
    %v254 = vadd.f32 %v228, %v253
    %255 = vdwg.mxu0
    %s256 = scalar_lea.vmem %s4, 16
    %v257 = vld [vmem:[%s256] sm:$0xf]
    %v258 = vld [vmem:[%s256 + $0x4] sm:$0xf]
    %v259 = vld [vmem:[%s256 + $0x8] sm:$0xf]
    %v260 = vld [vmem:[%s256 + $0xc] sm:$0xf]
    %s261 = scalar_lea.vmem %s5, 1
    %v262 = vld [vmem:[%s261] sm:$0x1]
    %v264 = vperm.slane %v262, 0
    %v270 = vunpack.c.l.b16 %v257
    %v271 = vunpack.c.l.b16 %v258
    %v272 = vunpack.c.l.b16 %v259
    %v273 = vunpack.c.l.b16 %v260
    %v274 = vpack.c.b16 %v271, %v270
    %v275 = vpack.c.b16 %v273, %v272
    %278 = vmatpush.bf16.msra.mxu0 0
    %279 = vmatpush.bf16.msra.mxu0 0
    %280 = vmatpush.bf16.msra.mxu0 0
    %281 = vmatpush.bf16.msra.mxu0 0
    %282 = vmatpush.bf16.msra.mxu0 0
    %283 = vmatpush.bf16.msra.mxu0 0
    %284 = vmatpush.bf16.msra.mxu0 %v275
    %285 = vmatpush.bf16.msra.mxu0 %v274
    %286 = vmatmul.bf16.gmra.mxu0 %v172
    %v287 = vpop.f32.mrf.mxu0
    %v288 = vadd.f32 %v264, %v287
    %v289 = vpop.f32.mrf.mxu0
    %v290 = vadd.f32 %v264, %v289
    %291 = vdwg.mxu0
    %s292 = scalar_lea.vmem %s6, 16
    %v293 = vld [vmem:[%s292] sm:$0xf]
    %v294 = vld [vmem:[%s292 + $0x4] sm:$0xf]
    %v295 = vld [vmem:[%s292 + $0x8] sm:$0xf]
    %v296 = vld [vmem:[%s292 + $0xc] sm:$0xf]
    %s297 = scalar_lea.vmem %s7, 1
    %v298 = vld [vmem:[%s297] sm:$0x1]
    %v300 = vperm.slane %v298, 0
    %v306 = vunpack.c.l.b16 %v293
    %v307 = vunpack.c.l.b16 %v294
    %v308 = vunpack.c.l.b16 %v295
    %v309 = vunpack.c.l.b16 %v296
    %v310 = vpack.c.b16 %v307, %v306
    %v311 = vpack.c.b16 %v309, %v308
    %314 = vmatpush.bf16.msra.mxu0 0
    %315 = vmatpush.bf16.msra.mxu0 0
    %316 = vmatpush.bf16.msra.mxu0 0
    %317 = vmatpush.bf16.msra.mxu0 0
    %318 = vmatpush.bf16.msra.mxu0 0
    %319 = vmatpush.bf16.msra.mxu0 0
    %320 = vmatpush.bf16.msra.mxu0 %v311
    %321 = vmatpush.bf16.msra.mxu0 %v310
    %322 = vmatmul.bf16.gmra.mxu0 %v172
    %v323 = vpop.f32.mrf.mxu0
    %v324 = vadd.f32 %v300, %v323
    %v325 = vpop.f32.mrf.mxu0
    %v326 = vadd.f32 %v300, %v325
    %327 = vdwg.mxu0
    %s328 = scalar_lea.vmem %s8, 16
    %v329 = vld [vmem:[%s328] sm:$0xf]
    %v330 = vld [vmem:[%s328 + $0x4] sm:$0xf]
    %v331 = vld [vmem:[%s328 + $0x8] sm:$0xf]
    %v332 = vld [vmem:[%s328 + $0xc] sm:$0xf]
    %s333 = scalar_lea.vmem %s9, 1
    %v334 = vld [vmem:[%s333] sm:$0x1]
    %v336 = vperm.slane %v334, 0
    %v342 = vunpack.c.l.b16 %v329
    %v343 = vunpack.c.l.b16 %v330
    %v344 = vunpack.c.l.b16 %v331
    %v345 = vunpack.c.l.b16 %v332
    %v346 = vpack.c.b16 %v343, %v342
    %v347 = vpack.c.b16 %v345, %v344
    %350 = vmatpush.bf16.msra.mxu0 0
    %351 = vmatpush.bf16.msra.mxu0 0
    %352 = vmatpush.bf16.msra.mxu0 0
    %353 = vmatpush.bf16.msra.mxu0 0
    %354 = vmatpush.bf16.msra.mxu0 0
    %355 = vmatpush.bf16.msra.mxu0 0
    %356 = vmatpush.bf16.msra.mxu0 %v347
    %357 = vmatpush.bf16.msra.mxu0 %v346
    %358 = vmatmul.bf16.gmra.mxu0 %v172
    %v359 = vpop.f32.mrf.mxu0
    %v360 = vadd.f32 %v336, %v359
    %v361 = vpop.f32.mrf.mxu0
    %v362 = vadd.f32 %v336, %v361
    %363 = vdwg.mxu0
    %s364 = scalar_lea.vmem %s4, 32
    %v365 = vld [vmem:[%s364] sm:$0xf]
    %v366 = vld [vmem:[%s364 + $0x4] sm:$0xf]
    %v367 = vld [vmem:[%s364 + $0x8] sm:$0xf]
    %v368 = vld [vmem:[%s364 + $0xc] sm:$0xf]
    %s369 = scalar_lea.vmem %s5, 2
    %v370 = vld [vmem:[%s369] sm:$0x1]
    %v372 = vperm.slane %v370, 0
    %v378 = vunpack.c.l.b16 %v365
    %v379 = vunpack.c.l.b16 %v366
    %v380 = vunpack.c.l.b16 %v367
    %v381 = vunpack.c.l.b16 %v368
    %v382 = vpack.c.b16 %v379, %v378
    %v383 = vpack.c.b16 %v381, %v380
    %386 = vmatpush.bf16.msra.mxu0 0
    %387 = vmatpush.bf16.msra.mxu0 0
    %388 = vmatpush.bf16.msra.mxu0 0
    %389 = vmatpush.bf16.msra.mxu0 0
    %390 = vmatpush.bf16.msra.mxu0 0
    %391 = vmatpush.bf16.msra.mxu0 0
    %392 = vmatpush.bf16.msra.mxu0 %v383
    %393 = vmatpush.bf16.msra.mxu0 %v382
    %394 = vmatmul.bf16.gmra.mxu0 %v172
    %v395 = vpop.f32.mrf.mxu0
    %v396 = vadd.f32 %v372, %v395
    %v397 = vpop.f32.mrf.mxu0
    %v398 = vadd.f32 %v372, %v397
    %399 = vdwg.mxu0
    %s400 = scalar_lea.vmem %s6, 32
    %v401 = vld [vmem:[%s400] sm:$0xf]
    %v402 = vld [vmem:[%s400 + $0x4] sm:$0xf]
    %v403 = vld [vmem:[%s400 + $0x8] sm:$0xf]
    %v404 = vld [vmem:[%s400 + $0xc] sm:$0xf]
    %s405 = scalar_lea.vmem %s7, 2
    %v406 = vld [vmem:[%s405] sm:$0x1]
    %v408 = vperm.slane %v406, 0
    %v414 = vunpack.c.l.b16 %v401
    %v415 = vunpack.c.l.b16 %v402
    %v416 = vunpack.c.l.b16 %v403
    %v417 = vunpack.c.l.b16 %v404
    %v418 = vpack.c.b16 %v415, %v414
    %v419 = vpack.c.b16 %v417, %v416
    %422 = vmatpush.bf16.msra.mxu0 0
    %423 = vmatpush.bf16.msra.mxu0 0
    %424 = vmatpush.bf16.msra.mxu0 0
    %425 = vmatpush.bf16.msra.mxu0 0
    %426 = vmatpush.bf16.msra.mxu0 0
    %427 = vmatpush.bf16.msra.mxu0 0
    %428 = vmatpush.bf16.msra.mxu0 %v419
    %429 = vmatpush.bf16.msra.mxu0 %v418
    %430 = vmatmul.bf16.gmra.mxu0 %v172
    %v431 = vpop.f32.mrf.mxu0
    %v432 = vadd.f32 %v408, %v431
    %v433 = vpop.f32.mrf.mxu0
    %v434 = vadd.f32 %v408, %v433
    %435 = vdwg.mxu0
    %s436 = scalar_lea.vmem %s8, 32
    %v437 = vld [vmem:[%s436] sm:$0xf]
    %v438 = vld [vmem:[%s436 + $0x4] sm:$0xf]
    %v439 = vld [vmem:[%s436 + $0x8] sm:$0xf]
    %v440 = vld [vmem:[%s436 + $0xc] sm:$0xf]
    %s441 = scalar_lea.vmem %s9, 2
    %v442 = vld [vmem:[%s441] sm:$0x1]
    %v444 = vperm.slane %v442, 0
    %v450 = vunpack.c.l.b16 %v437
    %v451 = vunpack.c.l.b16 %v438
    %v452 = vunpack.c.l.b16 %v439
    %v453 = vunpack.c.l.b16 %v440
    %v454 = vpack.c.b16 %v451, %v450
    %v455 = vpack.c.b16 %v453, %v452
    %458 = vmatpush.bf16.msra.mxu0 0
    %459 = vmatpush.bf16.msra.mxu0 0
    %460 = vmatpush.bf16.msra.mxu0 0
    %461 = vmatpush.bf16.msra.mxu0 0
    %462 = vmatpush.bf16.msra.mxu0 0
    %463 = vmatpush.bf16.msra.mxu0 0
    %464 = vmatpush.bf16.msra.mxu0 %v455
    %465 = vmatpush.bf16.msra.mxu0 %v454
    %466 = vmatmul.bf16.gmra.mxu0 %v172
    %v467 = vpop.f32.mrf.mxu0
    %v468 = vadd.f32 %v444, %v467
    %v469 = vpop.f32.mrf.mxu0
    %v470 = vadd.f32 %v444, %v469
    %471 = vdwg.mxu0
    %s472 = scalar_lea.vmem %s4, 48
    %v473 = vld [vmem:[%s472] sm:$0xf]
    %v474 = vld [vmem:[%s472 + $0x4] sm:$0xf]
    %v475 = vld [vmem:[%s472 + $0x8] sm:$0xf]
    %v476 = vld [vmem:[%s472 + $0xc] sm:$0xf]
    %s477 = scalar_lea.vmem %s5, 3
    %v478 = vld [vmem:[%s477] sm:$0x1]
    %v480 = vperm.slane %v478, 0
    %v486 = vunpack.c.l.b16 %v473
    %v487 = vunpack.c.l.b16 %v474
    %v488 = vunpack.c.l.b16 %v475
    %v489 = vunpack.c.l.b16 %v476
    %v490 = vpack.c.b16 %v487, %v486
    %v491 = vpack.c.b16 %v489, %v488
    %494 = vmatpush.bf16.msra.mxu0 0
    %495 = vmatpush.bf16.msra.mxu0 0
    %496 = vmatpush.bf16.msra.mxu0 0
    %497 = vmatpush.bf16.msra.mxu0 0
    %498 = vmatpush.bf16.msra.mxu0 0
    %499 = vmatpush.bf16.msra.mxu0 0
    %500 = vmatpush.bf16.msra.mxu0 %v491
    %501 = vmatpush.bf16.msra.mxu0 %v490
    %502 = vmatmul.bf16.gmra.mxu0 %v172
    %v503 = vpop.f32.mrf.mxu0
    %v504 = vadd.f32 %v480, %v503
    %v505 = vpop.f32.mrf.mxu0
    %v506 = vadd.f32 %v480, %v505
    %507 = vdwg.mxu0
    %s508 = scalar_lea.vmem %s6, 48
    %v509 = vld [vmem:[%s508] sm:$0xf]
    %v510 = vld [vmem:[%s508 + $0x4] sm:$0xf]
    %v511 = vld [vmem:[%s508 + $0x8] sm:$0xf]
    %v512 = vld [vmem:[%s508 + $0xc] sm:$0xf]
    %s513 = scalar_lea.vmem %s7, 3
    %v514 = vld [vmem:[%s513] sm:$0x1]
    %v516 = vperm.slane %v514, 0
    %v522 = vunpack.c.l.b16 %v509
    %v523 = vunpack.c.l.b16 %v510
    %v524 = vunpack.c.l.b16 %v511
    %v525 = vunpack.c.l.b16 %v512
    %v526 = vpack.c.b16 %v523, %v522
    %v527 = vpack.c.b16 %v525, %v524
    %530 = vmatpush.bf16.msra.mxu0 0
    %531 = vmatpush.bf16.msra.mxu0 0
    %532 = vmatpush.bf16.msra.mxu0 0
    %533 = vmatpush.bf16.msra.mxu0 0
    %534 = vmatpush.bf16.msra.mxu0 0
    %535 = vmatpush.bf16.msra.mxu0 0
    %536 = vmatpush.bf16.msra.mxu0 %v527
    %537 = vmatpush.bf16.msra.mxu0 %v526
    %538 = vmatmul.bf16.gmra.mxu0 %v172
    %v539 = vpop.f32.mrf.mxu0
    %v540 = vadd.f32 %v516, %v539
    %v541 = vpop.f32.mrf.mxu0
    %v542 = vadd.f32 %v516, %v541
    %543 = vdwg.mxu0
    %s544 = scalar_lea.vmem %s8, 48
    %v545 = vld [vmem:[%s544] sm:$0xf]
    %v546 = vld [vmem:[%s544 + $0x4] sm:$0xf]
    %v547 = vld [vmem:[%s544 + $0x8] sm:$0xf]
    %v548 = vld [vmem:[%s544 + $0xc] sm:$0xf]
    %s549 = scalar_lea.vmem %s9, 3
    %v550 = vld [vmem:[%s549] sm:$0x1]
    %v552 = vperm.slane %v550, 0
    %v558 = vunpack.c.l.b16 %v545
    %v559 = vunpack.c.l.b16 %v546
    %v560 = vunpack.c.l.b16 %v547
    %v561 = vunpack.c.l.b16 %v548
    %v562 = vpack.c.b16 %v559, %v558
    %v563 = vpack.c.b16 %v561, %v560
    %566 = vmatpush.bf16.msra.mxu0 0
    %567 = vmatpush.bf16.msra.mxu0 0
    %568 = vmatpush.bf16.msra.mxu0 0
    %569 = vmatpush.bf16.msra.mxu0 0
    %570 = vmatpush.bf16.msra.mxu0 0
    %571 = vmatpush.bf16.msra.mxu0 0
    %572 = vmatpush.bf16.msra.mxu0 %v563
    %573 = vmatpush.bf16.msra.mxu0 %v562
    %574 = vmatmul.bf16.gmra.mxu0 %v172
    %v575 = vpop.f32.mrf.mxu0
    %v576 = vadd.f32 %v552, %v575
    %v577 = vpop.f32.mrf.mxu0
    %v578 = vadd.f32 %v552, %v577
    %579 = vdwg.mxu0
    %v580 = vpack.c.bf16 %v184, %v184
    %v581 = vpack.c.bf16 %v218, %v218
    %v582 = vpack.c.bf16 %v252, %v252
    %vm583 = vcmask 64512
    %v585 = vsel %vm583, %v580, 0
    %v588 = vsel %vm583, %v581, 0
    %590 = vmatpush.bf16.xpose.msra.mxu0 0
    %591 = vmatpush.bf16.xpose.msra.mxu0 0
    %592 = vmatpush.bf16.xpose.msra.mxu0 0
    %593 = vmatpush.bf16.xpose.msra.mxu0 0
    %594 = vmatpush.bf16.xpose.msra.mxu0 0
    %595 = vmatpush.bf16.xpose.msra.mxu0 0
    %596 = vmatpush.bf16.xpose.msra.mxu0 0
    %597 = vmatpush.bf16.xpose.msra.mxu0 %v588
    %598 = vmatmul.bf16.gmra.mxu0 %v585
    %v599 = vpop.f32.mrf.mxu0
    %v600 = vadd.f32 0.0, %v599
    %v601 = vpop.f32.mrf.mxu0
    %602 = vdwg.mxu0
    %v603 = vmul.f32 %v600, 0.35355338
    %v604 = vadd.f32 %v603, %v148
    %v605 = vsel %vm583, %v604, -inf
    %606 = vmax.xlane.f32.xlu0 %v605
    %v607 = vpop.xlane.xlu0 %606
    %v608 = vsub.f32 %v604, %v607
    %v609 = vmul.f32 %v608, 1.442695
    %v610 = vpow.pop %v609
    %v611 = vsel %vm583, %v610, 0.0
    %612 = vadd.xlane.f32.xlu0 %v611
    %v613 = vpop.xlane.xlu0 %612
    %v614 = vrcp.pop %v613
    %v615 = vmul.f32 %v610, %v614
    %v616 = vpack.c.bf16 %v615, %v615
    %v618 = vsel %vm583, %v616, 0
    %vm620 = vcmask 1043456
    %v622 = vsel %vm620, %v582, 0
    %624 = vmatpush.bf16.msra.mxu0 0
    %625 = vmatpush.bf16.msra.mxu0 0
    %626 = vmatpush.bf16.msra.mxu0 0
    %627 = vmatpush.bf16.msra.mxu0 0
    %628 = vmatpush.bf16.msra.mxu0 0
    %629 = vmatpush.bf16.msra.mxu0 0
    %630 = vmatpush.bf16.msra.mxu0 0
    %631 = vmatpush.bf16.msra.mxu0 %v622
    %632 = vmatmul.bf16.gmra.mxu0 %v618
    %v633 = vpop.f32.mrf.mxu0
    %v634 = vadd.f32 0.0, %v633
    %v635 = vpop.f32.mrf.mxu0
    %636 = vdwg.mxu0
    %v637 = vpack.c.bf16 %v634, %v634
    %v638 = vld [vmem:[%s10] sm:$0xf]
    %v639 = vpack.c.bf16 %v288, %v288
    %v640 = vpack.c.bf16 %v324, %v324
    %v641 = vpack.c.bf16 %v360, %v360
    %v643 = vsel %vm583, %v639, 0
    %v646 = vsel %vm583, %v640, 0
    %648 = vmatpush.bf16.xpose.msra.mxu0 0
    %649 = vmatpush.bf16.xpose.msra.mxu0 0
    %650 = vmatpush.bf16.xpose.msra.mxu0 0
    %651 = vmatpush.bf16.xpose.msra.mxu0 0
    %652 = vmatpush.bf16.xpose.msra.mxu0 0
    %653 = vmatpush.bf16.xpose.msra.mxu0 0
    %654 = vmatpush.bf16.xpose.msra.mxu0 0
    %655 = vmatpush.bf16.xpose.msra.mxu0 %v646
    %656 = vmatmul.bf16.gmra.mxu0 %v643
    %v657 = vpop.f32.mrf.mxu0
    %v658 = vadd.f32 0.0, %v657
    %v659 = vpop.f32.mrf.mxu0
    %660 = vdwg.mxu0
    %v661 = vmul.f32 %v658, 0.35355338
    %v662 = vadd.f32 %v661, %v148
    %v663 = vsel %vm583, %v662, -inf
    %664 = vmax.xlane.f32.xlu0 %v663
    %v665 = vpop.xlane.xlu0 %664
    %v666 = vsub.f32 %v662, %v665
    %v667 = vmul.f32 %v666, 1.442695
    %v668 = vpow.pop %v667
    %v669 = vsel %vm583, %v668, 0.0
    %670 = vadd.xlane.f32.xlu0 %v669
    %v671 = vpop.xlane.xlu0 %670
    %v672 = vrcp.pop %v671
    %v673 = vmul.f32 %v668, %v672
    %v674 = vpack.c.bf16 %v673, %v673
    %v676 = vsel %vm583, %v674, 0
    %v679 = vsel %vm620, %v641, 0
    %681 = vmatpush.bf16.msra.mxu0 0
    %682 = vmatpush.bf16.msra.mxu0 0
    %683 = vmatpush.bf16.msra.mxu0 0
    %684 = vmatpush.bf16.msra.mxu0 0
    %685 = vmatpush.bf16.msra.mxu0 0
    %686 = vmatpush.bf16.msra.mxu0 0
    %687 = vmatpush.bf16.msra.mxu0 0
    %688 = vmatpush.bf16.msra.mxu0 %v679
    %689 = vmatmul.bf16.gmra.mxu0 %v676
    %v690 = vpop.f32.mrf.mxu0
    %v691 = vadd.f32 0.0, %v690
    %v692 = vpop.f32.mrf.mxu0
    %693 = vdwg.mxu0
    %v694 = vpack.c.bf16 %v691, %v691
    %s695 = scalar_lea.vmem %s10, 4
    %v696 = vld [vmem:[%s695] sm:$0xf]
    %v698 = vsel %vm583, %v694, 0
    %v701 = vsel %vm620, %v696, 0
    %703 = vmatpush.bf16.msra.mxu0 0
    %704 = vmatpush.bf16.msra.mxu0 0
    %705 = vmatpush.bf16.msra.mxu0 0
    %706 = vmatpush.bf16.msra.mxu0 0
    %707 = vmatpush.bf16.msra.mxu0 0
    %708 = vmatpush.bf16.msra.mxu0 0
    %709 = vmatpush.bf16.msra.mxu0 0
    %710 = vmatpush.bf16.msra.mxu0 %v701
    %711 = vmatmul.bf16.gmra.mxu0 %v698
    %v712 = vpop.f32.mrf.mxu0
    %v713 = vadd.f32 0.0, %v712
    %v714 = vpop.f32.mrf.mxu0
    %715 = vdwg.mxu0
    %v717 = vsel %vm583, %v637, 0
    %v720 = vsel %vm620, %v638, 0
    %722 = vmatpush.bf16.msra.mxu0 0
    %723 = vmatpush.bf16.msra.mxu0 0
    %724 = vmatpush.bf16.msra.mxu0 0
    %725 = vmatpush.bf16.msra.mxu0 0
    %726 = vmatpush.bf16.msra.mxu0 0
    %727 = vmatpush.bf16.msra.mxu0 0
    %728 = vmatpush.bf16.msra.mxu0 0
    %729 = vmatpush.bf16.msra.mxu0 %v720
    %730 = vmatmul.bf16.gmra.mxu0 %v717
    %v731 = vpop.f32.mrf.mxu0
    %v732 = vadd.f32 %v713, %v731
    %v733 = vpop.f32.mrf.mxu0
    %734 = vdwg.mxu0
    %v735 = vpack.c.bf16 %v396, %v396
    %v736 = vpack.c.bf16 %v432, %v432
    %v737 = vpack.c.bf16 %v468, %v468
    %v739 = vsel %vm583, %v735, 0
    %v742 = vsel %vm583, %v736, 0
    %744 = vmatpush.bf16.xpose.msra.mxu0 0
    %745 = vmatpush.bf16.xpose.msra.mxu0 0
    %746 = vmatpush.bf16.xpose.msra.mxu0 0
    %747 = vmatpush.bf16.xpose.msra.mxu0 0
    %748 = vmatpush.bf16.xpose.msra.mxu0 0
    %749 = vmatpush.bf16.xpose.msra.mxu0 0
    %750 = vmatpush.bf16.xpose.msra.mxu0 0
    %751 = vmatpush.bf16.xpose.msra.mxu0 %v742
    %752 = vmatmul.bf16.gmra.mxu0 %v739
    %v753 = vpop.f32.mrf.mxu0
    %v754 = vadd.f32 0.0, %v753
    %v755 = vpop.f32.mrf.mxu0
    %756 = vdwg.mxu0
    %v757 = vmul.f32 %v754, 0.35355338
    %v758 = vadd.f32 %v757, %v148
    %v759 = vsel %vm583, %v758, -inf
    %760 = vmax.xlane.f32.xlu0 %v759
    %v761 = vpop.xlane.xlu0 %760
    %v762 = vsub.f32 %v758, %v761
    %v763 = vmul.f32 %v762, 1.442695
    %v764 = vpow.pop %v763
    %v765 = vsel %vm583, %v764, 0.0
    %766 = vadd.xlane.f32.xlu0 %v765
    %v767 = vpop.xlane.xlu0 %766
    %v768 = vrcp.pop %v767
    %v769 = vmul.f32 %v764, %v768
    %v770 = vpack.c.bf16 %v769, %v769
    %v772 = vsel %vm583, %v770, 0
    %v775 = vsel %vm620, %v737, 0
    %777 = vmatpush.bf16.msra.mxu0 0
    %778 = vmatpush.bf16.msra.mxu0 0
    %779 = vmatpush.bf16.msra.mxu0 0
    %780 = vmatpush.bf16.msra.mxu0 0
    %781 = vmatpush.bf16.msra.mxu0 0
    %782 = vmatpush.bf16.msra.mxu0 0
    %783 = vmatpush.bf16.msra.mxu0 0
    %784 = vmatpush.bf16.msra.mxu0 %v775
    %785 = vmatmul.bf16.gmra.mxu0 %v772
    %v786 = vpop.f32.mrf.mxu0
    %v787 = vadd.f32 0.0, %v786
    %v788 = vpop.f32.mrf.mxu0
    %789 = vdwg.mxu0
    %v790 = vpack.c.bf16 %v787, %v787
    %s791 = scalar_lea.vmem %s10, 8
    %v792 = vld [vmem:[%s791] sm:$0xf]
    %v794 = vsel %vm583, %v790, 0
    %v797 = vsel %vm620, %v792, 0
    %799 = vmatpush.bf16.msra.mxu0 0
    %800 = vmatpush.bf16.msra.mxu0 0
    %801 = vmatpush.bf16.msra.mxu0 0
    %802 = vmatpush.bf16.msra.mxu0 0
    %803 = vmatpush.bf16.msra.mxu0 0
    %804 = vmatpush.bf16.msra.mxu0 0
    %805 = vmatpush.bf16.msra.mxu0 0
    %806 = vmatpush.bf16.msra.mxu0 %v797
    %807 = vmatmul.bf16.gmra.mxu0 %v794
    %v808 = vpop.f32.mrf.mxu0
    %v809 = vadd.f32 0.0, %v808
    %v810 = vpop.f32.mrf.mxu0
    %811 = vdwg.mxu0
    %v812 = vadd.f32 %v732, %v809
    %v813 = vpack.c.bf16 %v504, %v504
    %v814 = vpack.c.bf16 %v540, %v540
    %v815 = vpack.c.bf16 %v576, %v576
    %v817 = vsel %vm583, %v813, 0
    %v820 = vsel %vm583, %v814, 0
    %822 = vmatpush.bf16.xpose.msra.mxu0 0
    %823 = vmatpush.bf16.xpose.msra.mxu0 0
    %824 = vmatpush.bf16.xpose.msra.mxu0 0
    %825 = vmatpush.bf16.xpose.msra.mxu0 0
    %826 = vmatpush.bf16.xpose.msra.mxu0 0
    %827 = vmatpush.bf16.xpose.msra.mxu0 0
    %828 = vmatpush.bf16.xpose.msra.mxu0 0
    %829 = vmatpush.bf16.xpose.msra.mxu0 %v820
    %830 = vmatmul.bf16.gmra.mxu0 %v817
    %v831 = vpop.f32.mrf.mxu0
    %v832 = vadd.f32 0.0, %v831
    %v833 = vpop.f32.mrf.mxu0
    %834 = vdwg.mxu0
    %v835 = vmul.f32 %v832, 0.35355338
    %v836 = vadd.f32 %v835, %v148
    %v837 = vsel %vm583, %v836, -inf
    %838 = vmax.xlane.f32.xlu0 %v837
    %v839 = vpop.xlane.xlu0 %838
    %v840 = vsub.f32 %v836, %v839
    %v841 = vmul.f32 %v840, 1.442695
    %v842 = vpow.pop %v841
    %v843 = vsel %vm583, %v842, 0.0
    %844 = vadd.xlane.f32.xlu0 %v843
    %v845 = vpop.xlane.xlu0 %844
    %v846 = vrcp.pop %v845
    %v847 = vmul.f32 %v842, %v846
    %v848 = vpack.c.bf16 %v847, %v847
    %v850 = vsel %vm583, %v848, 0
    %v853 = vsel %vm620, %v815, 0
    %855 = vmatpush.bf16.msra.mxu0 0
    %856 = vmatpush.bf16.msra.mxu0 0
    %857 = vmatpush.bf16.msra.mxu0 0
    %858 = vmatpush.bf16.msra.mxu0 0
    %859 = vmatpush.bf16.msra.mxu0 0
    %860 = vmatpush.bf16.msra.mxu0 0
    %861 = vmatpush.bf16.msra.mxu0 0
    %862 = vmatpush.bf16.msra.mxu0 %v853
    %863 = vmatmul.bf16.gmra.mxu0 %v850
    %v864 = vpop.f32.mrf.mxu0
    %v865 = vadd.f32 0.0, %v864
    %v866 = vpop.f32.mrf.mxu0
    %867 = vdwg.mxu0
    %v868 = vpack.c.bf16 %v865, %v865
    %s869 = scalar_lea.vmem %s10, 12
    %v870 = vld [vmem:[%s869] sm:$0xf]
    %v872 = vsel %vm583, %v868, 0
    %v875 = vsel %vm620, %v870, 0
    %877 = vmatpush.bf16.msra.mxu0 0
    %878 = vmatpush.bf16.msra.mxu0 0
    %879 = vmatpush.bf16.msra.mxu0 0
    %880 = vmatpush.bf16.msra.mxu0 0
    %881 = vmatpush.bf16.msra.mxu0 0
    %882 = vmatpush.bf16.msra.mxu0 0
    %883 = vmatpush.bf16.msra.mxu0 0
    %884 = vmatpush.bf16.msra.mxu0 %v875
    %885 = vmatmul.bf16.gmra.mxu0 %v872
    %v886 = vpop.f32.mrf.mxu0
    %v887 = vadd.f32 0.0, %v886
    %v888 = vpop.f32.mrf.mxu0
    %889 = vdwg.mxu0
    %v890 = vadd.f32 %v812, %v887
    %v891 = vpack.c.bf16 %v186, %v186
    %v892 = vpack.c.bf16 %v220, %v220
    %v893 = vpack.c.bf16 %v254, %v254
    %v895 = vsel %vm583, %v891, 0
    %v898 = vsel %vm583, %v892, 0
    %900 = vmatpush.bf16.xpose.msra.mxu0 0
    %901 = vmatpush.bf16.xpose.msra.mxu0 0
    %902 = vmatpush.bf16.xpose.msra.mxu0 0
    %903 = vmatpush.bf16.xpose.msra.mxu0 0
    %904 = vmatpush.bf16.xpose.msra.mxu0 0
    %905 = vmatpush.bf16.xpose.msra.mxu0 0
    %906 = vmatpush.bf16.xpose.msra.mxu0 0
    %907 = vmatpush.bf16.xpose.msra.mxu0 %v898
    %908 = vmatmul.bf16.gmra.mxu0 %v895
    %v909 = vpop.f32.mrf.mxu0
    %v910 = vadd.f32 0.0, %v909
    %v911 = vpop.f32.mrf.mxu0
    %912 = vdwg.mxu0
    %v913 = vmul.f32 %v910, 0.35355338
    %v914 = vadd.f32 %v913, %v149
    %v915 = vsel %vm583, %v914, -inf
    %916 = vmax.xlane.f32.xlu0 %v915
    %v917 = vpop.xlane.xlu0 %916
    %v918 = vsub.f32 %v914, %v917
    %v919 = vmul.f32 %v918, 1.442695
    %v920 = vpow.pop %v919
    %v921 = vsel %vm583, %v920, 0.0
    %922 = vadd.xlane.f32.xlu0 %v921
    %v923 = vpop.xlane.xlu0 %922
    %v924 = vrcp.pop %v923
    %v925 = vmul.f32 %v920, %v924
    %v926 = vpack.c.bf16 %v925, %v925
    %v928 = vsel %vm583, %v926, 0
    %v931 = vsel %vm620, %v893, 0
    %933 = vmatpush.bf16.msra.mxu0 0
    %934 = vmatpush.bf16.msra.mxu0 0
    %935 = vmatpush.bf16.msra.mxu0 0
    %936 = vmatpush.bf16.msra.mxu0 0
    %937 = vmatpush.bf16.msra.mxu0 0
    %938 = vmatpush.bf16.msra.mxu0 0
    %939 = vmatpush.bf16.msra.mxu0 0
    %940 = vmatpush.bf16.msra.mxu0 %v931
    %941 = vmatmul.bf16.gmra.mxu0 %v928
    %v942 = vpop.f32.mrf.mxu0
    %v943 = vadd.f32 0.0, %v942
    %v944 = vpop.f32.mrf.mxu0
    %945 = vdwg.mxu0
    %v946 = vpack.c.bf16 %v943, %v943
    %v947 = vpack.c.bf16 %v290, %v290
    %v948 = vpack.c.bf16 %v326, %v326
    %v949 = vpack.c.bf16 %v362, %v362
    %v951 = vsel %vm583, %v947, 0
    %v954 = vsel %vm583, %v948, 0
    %956 = vmatpush.bf16.xpose.msra.mxu0 0
    %957 = vmatpush.bf16.xpose.msra.mxu0 0
    %958 = vmatpush.bf16.xpose.msra.mxu0 0
    %959 = vmatpush.bf16.xpose.msra.mxu0 0
    %960 = vmatpush.bf16.xpose.msra.mxu0 0
    %961 = vmatpush.bf16.xpose.msra.mxu0 0
    %962 = vmatpush.bf16.xpose.msra.mxu0 0
    %963 = vmatpush.bf16.xpose.msra.mxu0 %v954
    %964 = vmatmul.bf16.gmra.mxu0 %v951
    %v965 = vpop.f32.mrf.mxu0
    %v966 = vadd.f32 0.0, %v965
    %v967 = vpop.f32.mrf.mxu0
    %968 = vdwg.mxu0
    %v969 = vmul.f32 %v966, 0.35355338
    %v970 = vadd.f32 %v969, %v149
    %v971 = vsel %vm583, %v970, -inf
    %972 = vmax.xlane.f32.xlu0 %v971
    %v973 = vpop.xlane.xlu0 %972
    %v974 = vsub.f32 %v970, %v973
    %v975 = vmul.f32 %v974, 1.442695
    %v976 = vpow.pop %v975
    %v977 = vsel %vm583, %v976, 0.0
    %978 = vadd.xlane.f32.xlu0 %v977
    %v979 = vpop.xlane.xlu0 %978
    %v980 = vrcp.pop %v979
    %v981 = vmul.f32 %v976, %v980
    %v982 = vpack.c.bf16 %v981, %v981
    %v984 = vsel %vm583, %v982, 0
    %v987 = vsel %vm620, %v949, 0
    %989 = vmatpush.bf16.msra.mxu0 0
    %990 = vmatpush.bf16.msra.mxu0 0
    %991 = vmatpush.bf16.msra.mxu0 0
    %992 = vmatpush.bf16.msra.mxu0 0
    %993 = vmatpush.bf16.msra.mxu0 0
    %994 = vmatpush.bf16.msra.mxu0 0
    %995 = vmatpush.bf16.msra.mxu0 0
    %996 = vmatpush.bf16.msra.mxu0 %v987
    %997 = vmatmul.bf16.gmra.mxu0 %v984
    %v998 = vpop.f32.mrf.mxu0
    %v999 = vadd.f32 0.0, %v998
    %v1000 = vpop.f32.mrf.mxu0
    %1001 = vdwg.mxu0
    %v1002 = vpack.c.bf16 %v999, %v999
    %v1004 = vsel %vm583, %v1002, 0
    %1006 = vmatpush.bf16.msra.mxu0 0
    %1007 = vmatpush.bf16.msra.mxu0 0
    %1008 = vmatpush.bf16.msra.mxu0 0
    %1009 = vmatpush.bf16.msra.mxu0 0
    %1010 = vmatpush.bf16.msra.mxu0 0
    %1011 = vmatpush.bf16.msra.mxu0 0
    %1012 = vmatpush.bf16.msra.mxu0 0
    %1013 = vmatpush.bf16.msra.mxu0 %v701
    %1014 = vmatmul.bf16.gmra.mxu0 %v1004
    %v1015 = vpop.f32.mrf.mxu0
    %v1016 = vadd.f32 0.0, %v1015
    %v1017 = vpop.f32.mrf.mxu0
    %1018 = vdwg.mxu0
    %v1020 = vsel %vm583, %v946, 0
    %1022 = vmatpush.bf16.msra.mxu0 0
    %1023 = vmatpush.bf16.msra.mxu0 0
    %1024 = vmatpush.bf16.msra.mxu0 0
    %1025 = vmatpush.bf16.msra.mxu0 0
    %1026 = vmatpush.bf16.msra.mxu0 0
    %1027 = vmatpush.bf16.msra.mxu0 0
    %1028 = vmatpush.bf16.msra.mxu0 0
    %1029 = vmatpush.bf16.msra.mxu0 %v720
    %1030 = vmatmul.bf16.gmra.mxu0 %v1020
    %v1031 = vpop.f32.mrf.mxu0
    %v1032 = vadd.f32 %v1016, %v1031
    %v1033 = vpop.f32.mrf.mxu0
    %1034 = vdwg.mxu0
    %v1035 = vpack.c.bf16 %v398, %v398
    %v1036 = vpack.c.bf16 %v434, %v434
    %v1037 = vpack.c.bf16 %v470, %v470
    %v1039 = vsel %vm583, %v1035, 0
    %v1042 = vsel %vm583, %v1036, 0
    %1044 = vmatpush.bf16.xpose.msra.mxu0 0
    %1045 = vmatpush.bf16.xpose.msra.mxu0 0
    %1046 = vmatpush.bf16.xpose.msra.mxu0 0
    %1047 = vmatpush.bf16.xpose.msra.mxu0 0
    %1048 = vmatpush.bf16.xpose.msra.mxu0 0
    %1049 = vmatpush.bf16.xpose.msra.mxu0 0
    %1050 = vmatpush.bf16.xpose.msra.mxu0 0
    %1051 = vmatpush.bf16.xpose.msra.mxu0 %v1042
    %1052 = vmatmul.bf16.gmra.mxu0 %v1039
    %v1053 = vpop.f32.mrf.mxu0
    %v1054 = vadd.f32 0.0, %v1053
    %v1055 = vpop.f32.mrf.mxu0
    %1056 = vdwg.mxu0
    %v1057 = vmul.f32 %v1054, 0.35355338
    %v1058 = vadd.f32 %v1057, %v149
    %v1059 = vsel %vm583, %v1058, -inf
    %1060 = vmax.xlane.f32.xlu0 %v1059
    %v1061 = vpop.xlane.xlu0 %1060
    %v1062 = vsub.f32 %v1058, %v1061
    %v1063 = vmul.f32 %v1062, 1.442695
    %v1064 = vpow.pop %v1063
    %v1065 = vsel %vm583, %v1064, 0.0
    %1066 = vadd.xlane.f32.xlu0 %v1065
    %v1067 = vpop.xlane.xlu0 %1066
    %v1068 = vrcp.pop %v1067
    %v1069 = vmul.f32 %v1064, %v1068
    %v1070 = vpack.c.bf16 %v1069, %v1069
    %v1072 = vsel %vm583, %v1070, 0
    %v1075 = vsel %vm620, %v1037, 0
    %1077 = vmatpush.bf16.msra.mxu0 0
    %1078 = vmatpush.bf16.msra.mxu0 0
    %1079 = vmatpush.bf16.msra.mxu0 0
    %1080 = vmatpush.bf16.msra.mxu0 0
    %1081 = vmatpush.bf16.msra.mxu0 0
    %1082 = vmatpush.bf16.msra.mxu0 0
    %1083 = vmatpush.bf16.msra.mxu0 0
    %1084 = vmatpush.bf16.msra.mxu0 %v1075
    %1085 = vmatmul.bf16.gmra.mxu0 %v1072
    %v1086 = vpop.f32.mrf.mxu0
    %v1087 = vadd.f32 0.0, %v1086
    %v1088 = vpop.f32.mrf.mxu0
    %1089 = vdwg.mxu0
    %v1090 = vpack.c.bf16 %v1087, %v1087
    %v1092 = vsel %vm583, %v1090, 0
    %1094 = vmatpush.bf16.msra.mxu0 0
    %1095 = vmatpush.bf16.msra.mxu0 0
    %1096 = vmatpush.bf16.msra.mxu0 0
    %1097 = vmatpush.bf16.msra.mxu0 0
    %1098 = vmatpush.bf16.msra.mxu0 0
    %1099 = vmatpush.bf16.msra.mxu0 0
    %1100 = vmatpush.bf16.msra.mxu0 0
    %1101 = vmatpush.bf16.msra.mxu0 %v797
    %1102 = vmatmul.bf16.gmra.mxu0 %v1092
    %v1103 = vpop.f32.mrf.mxu0
    %v1104 = vadd.f32 0.0, %v1103
    %v1105 = vpop.f32.mrf.mxu0
    %1106 = vdwg.mxu0
    %v1107 = vadd.f32 %v1032, %v1104
    %v1108 = vpack.c.bf16 %v506, %v506
    %v1109 = vpack.c.bf16 %v542, %v542
    %v1110 = vpack.c.bf16 %v578, %v578
    %v1112 = vsel %vm583, %v1108, 0
    %v1115 = vsel %vm583, %v1109, 0
    %1117 = vmatpush.bf16.xpose.msra.mxu0 0
    %1118 = vmatpush.bf16.xpose.msra.mxu0 0
    %1119 = vmatpush.bf16.xpose.msra.mxu0 0
    %1120 = vmatpush.bf16.xpose.msra.mxu0 0
    %1121 = vmatpush.bf16.xpose.msra.mxu0 0
    %1122 = vmatpush.bf16.xpose.msra.mxu0 0
    %1123 = vmatpush.bf16.xpose.msra.mxu0 0
    %1124 = vmatpush.bf16.xpose.msra.mxu0 %v1115
    %1125 = vmatmul.bf16.gmra.mxu0 %v1112
    %v1126 = vpop.f32.mrf.mxu0
    %v1127 = vadd.f32 0.0, %v1126
    %v1128 = vpop.f32.mrf.mxu0
    %1129 = vdwg.mxu0
    %v1130 = vmul.f32 %v1127, 0.35355338
    %v1131 = vadd.f32 %v1130, %v149
    %v1132 = vsel %vm583, %v1131, -inf
    %1133 = vmax.xlane.f32.xlu0 %v1132
    %v1134 = vpop.xlane.xlu0 %1133
    %v1135 = vsub.f32 %v1131, %v1134
    %v1136 = vmul.f32 %v1135, 1.442695
    %v1137 = vpow.pop %v1136
    %v1138 = vsel %vm583, %v1137, 0.0
    %1139 = vadd.xlane.f32.xlu0 %v1138
    %v1140 = vpop.xlane.xlu0 %1139
    %v1141 = vrcp.pop %v1140
    %v1142 = vmul.f32 %v1137, %v1141
    %v1143 = vpack.c.bf16 %v1142, %v1142
    %v1145 = vsel %vm583, %v1143, 0
    %v1148 = vsel %vm620, %v1110, 0
    %1150 = vmatpush.bf16.msra.mxu0 0
    %1151 = vmatpush.bf16.msra.mxu0 0
    %1152 = vmatpush.bf16.msra.mxu0 0
    %1153 = vmatpush.bf16.msra.mxu0 0
    %1154 = vmatpush.bf16.msra.mxu0 0
    %1155 = vmatpush.bf16.msra.mxu0 0
    %1156 = vmatpush.bf16.msra.mxu0 0
    %1157 = vmatpush.bf16.msra.mxu0 %v1148
    %1158 = vmatmul.bf16.gmra.mxu0 %v1145
    %v1159 = vpop.f32.mrf.mxu0
    %v1160 = vadd.f32 0.0, %v1159
    %v1161 = vpop.f32.mrf.mxu0
    %1162 = vdwg.mxu0
    %v1163 = vpack.c.bf16 %v1160, %v1160
    %v1165 = vsel %vm583, %v1163, 0
    %1167 = vmatpush.bf16.msra.mxu0 0
    %1168 = vmatpush.bf16.msra.mxu0 0
    %1169 = vmatpush.bf16.msra.mxu0 0
    %1170 = vmatpush.bf16.msra.mxu0 0
    %1171 = vmatpush.bf16.msra.mxu0 0
    %1172 = vmatpush.bf16.msra.mxu0 0
    %1173 = vmatpush.bf16.msra.mxu0 0
    %1174 = vmatpush.bf16.msra.mxu0 %v875
    %1175 = vmatmul.bf16.gmra.mxu0 %v1165
    %v1176 = vpop.f32.mrf.mxu0
    %v1177 = vadd.f32 0.0, %v1176
    %v1178 = vpop.f32.mrf.mxu0
    %1179 = vdwg.mxu0
    %v1180 = vadd.f32 %v1107, %v1177
    %v1181 = vld [vmem:[%s11] sm:$0x1]
    %v1183 = vperm.slane %v1181, 0
    %v1185 = vadd.f32 %v890, %v1183
    %v1186 = vadd.f32 %v1180, %v1183
    %v1187 = vadd.f32 %v143, %v1185
    %v1188 = vadd.f32 %v144, %v1186
    %v1189 = vld [vmem:[%s12] sm:$0x1]
    %v1190 = vld [vmem:[%s13] sm:$0x1]
    %v1191 = vsel %vm83, %v1187, 0.0
    %1192 = vadd.xlane.f32.xlu0 %v1191
    %v1193 = vpop.xlane.xlu0 %1192
    %v1194 = vsel %vm83, %v1188, 0.0
    %1195 = vadd.xlane.f32.xlu0 %v1194
    %v1196 = vpop.xlane.xlu0 %1195
    %v1197 = vmul.f32 %v1193, %v96
    %v1198 = vmul.f32 %v1196, %v96
    %v1199 = vsub.f32 %v1187, %v1197
    %v1200 = vsub.f32 %v1188, %v1198
    %v1201 = vmul.f32 %v1199, %v1199
    %v1202 = vmul.f32 %v1200, %v1200
    %v1203 = vsel %vm83, %v1201, 0.0
    %1204 = vadd.xlane.f32.xlu0 %v1203
    %v1205 = vpop.xlane.xlu0 %1204
    %v1206 = vsel %vm83, %v1202, 0.0
    %1207 = vadd.xlane.f32.xlu0 %v1206
    %v1208 = vpop.xlane.xlu0 %1207
    %v1209 = vmul.f32 %v1205, %v96
    %v1210 = vmul.f32 %v1208, %v96
    %v1211 = vadd.f32 %v1209, 1e-05
    %v1212 = vadd.f32 %v1210, 1e-05
    %v1213 = vrsqrt.pop %v1211
    %v1214 = vmul.f32 %v1213, %v1211
    %v1215 = vmul.f32 %v1214, %v1213
    %v1216 = vmul.f32 0.5, %v1215
    %v1217 = vsub.f32 1.5, %v1216
    %v1218 = vmul.f32 %v1213, %v1217
    %vm1219 = vweird.f32 %v1211
    %vm1220 = vweird.f32 %v1213
    %vm1221 = vmor %vm1219, %vm1220
    %v1222 = vsel %vm1221, %v1213, %v1218
    %v1223 = vrsqrt.pop %v1212
    %v1224 = vmul.f32 %v1223, %v1212
    %v1225 = vmul.f32 %v1224, %v1223
    %v1226 = vmul.f32 0.5, %v1225
    %v1227 = vsub.f32 1.5, %v1226
    %v1228 = vmul.f32 %v1223, %v1227
    %vm1229 = vweird.f32 %v1212
    %vm1230 = vweird.f32 %v1223
    %vm1231 = vmor %vm1229, %vm1230
    %v1232 = vsel %vm1231, %v1223, %v1228
    %v1233 = vmul.f32 %v1199, %v1222
    %v1234 = vmul.f32 %v1200, %v1232
    %v1236 = vperm.slane %v1189, 0
    %v1238 = vmul.f32 %v1233, %v1236
    %v1239 = vmul.f32 %v1234, %v1236
    %v1241 = vperm.slane %v1190, 0
    %v1243 = vadd.f32 %v1238, %v1241
    %v1244 = vadd.f32 %v1239, %v1241
    %v1245 = vpack.c.bf16 %v1244, %v1243
    %v1246 = vld [vmem:[%s14] sm:$0xf]
    %v1247 = vld [vmem:[%s14 + $0x4] sm:$0xf]
    %v1248 = vld [vmem:[%s14 + $0x8] sm:$0xf]
    %v1249 = vld [vmem:[%s14 + $0xc] sm:$0xf]
    %v1250 = vld [vmem:[%s15] sm:$0x1]
    %v1252 = vperm.slane %v1250, 0
    %v1258 = vunpack.c.l.b16 %v1246
    %v1259 = vunpack.c.l.b16 %v1247
    %v1260 = vunpack.c.l.b16 %v1248
    %v1261 = vunpack.c.l.b16 %v1249
    %v1262 = vpack.c.b16 %v1259, %v1258
    %v1263 = vpack.c.b16 %v1261, %v1260
    %v1267 = vsel %vm83, %v1245, 0
    %1269 = vmatpush.bf16.msra.mxu0 0
    %1270 = vmatpush.bf16.msra.mxu0 0
    %1271 = vmatpush.bf16.msra.mxu0 0
    %1272 = vmatpush.bf16.msra.mxu0 0
    %1273 = vmatpush.bf16.msra.mxu0 0
    %1274 = vmatpush.bf16.msra.mxu0 0
    %1275 = vmatpush.bf16.msra.mxu0 %v1263
    %1276 = vmatpush.bf16.msra.mxu0 %v1262
    %1277 = vmatmul.bf16.gmra.mxu0 %v1267
    %v1278 = vpop.f32.mrf.mxu0
    %v1279 = vadd.f32 %v1252, %v1278
    %v1280 = vpop.f32.mrf.mxu0
    %v1281 = vadd.f32 %v1252, %v1280
    %1282 = vdwg.mxu0
    %v1283 = vmul.f32 %v1279, 0.5
    %v1284 = vmul.f32 %v1281, 0.5
    %v1285 = vmul.f32 %v1279, 0.044715
    %v1286 = vmul.f32 %v1281, 0.044715
    %v1287 = vmul.f32 %v1285, %v1279
    %v1288 = vmul.f32 %v1286, %v1281
    %v1289 = vmul.f32 %v1287, %v1279
    %v1290 = vmul.f32 %v1288, %v1281
    %v1291 = vadd.f32 %v1279, %v1289
    %v1292 = vadd.f32 %v1281, %v1290
    %v1293 = vmul.f32 %v1291, 0.7978846
    %v1294 = vmul.f32 %v1292, 0.7978846
    %v1295 = vtanh.pop %v1293
    %v1296 = vtanh.pop %v1294
    %v1297 = vadd.f32 %v1295, 1.0
    %v1298 = vadd.f32 %v1296, 1.0
    %v1299 = vmul.f32 %v1283, %v1297
    %v1300 = vmul.f32 %v1284, %v1298
    %v1301 = vpack.c.bf16 %v1300, %v1299
    %v1302 = vld [vmem:[%s16] sm:$0xf]
    %v1303 = vld [vmem:[%s16 + $0x4] sm:$0xf]
    %v1304 = vld [vmem:[%s16 + $0x8] sm:$0xf]
    %v1305 = vld [vmem:[%s16 + $0xc] sm:$0xf]
    %v1306 = vld [vmem:[%s16 + $0x10] sm:$0xf]
    %v1307 = vld [vmem:[%s16 + $0x14] sm:$0xf]
    %v1308 = vld [vmem:[%s16 + $0x18] sm:$0xf]
    %v1309 = vld [vmem:[%s16 + $0x1c] sm:$0xf]
    %v1310 = vld [vmem:[%s17] sm:$0x1]
    %v1312 = vperm.slane %v1310, 0
    %v1322 = vunpack.c.l.b16 %v1302
    %v1323 = vunpack.c.l.b16 %v1303
    %v1324 = vunpack.c.l.b16 %v1304
    %v1325 = vunpack.c.l.b16 %v1305
    %v1326 = vunpack.c.l.b16 %v1306
    %v1327 = vunpack.c.l.b16 %v1307
    %v1328 = vunpack.c.l.b16 %v1308
    %v1329 = vunpack.c.l.b16 %v1309
    %v1330 = vpack.c.b16 %v1323, %v1322
    %v1331 = vpack.c.b16 %v1325, %v1324
    %v1332 = vpack.c.b16 %v1327, %v1326
    %v1333 = vpack.c.b16 %v1329, %v1328
    %vm1338 = vcmask 523264
    %v1340 = vsel %vm1338, %v1301, 0
    %1342 = vmatpush.bf16.msra.mxu0 0
    %1343 = vmatpush.bf16.msra.mxu0 0
    %1344 = vmatpush.bf16.msra.mxu0 0
    %1345 = vmatpush.bf16.msra.mxu0 0
    %1346 = vmatpush.bf16.msra.mxu0 %v1333
    %1347 = vmatpush.bf16.msra.mxu0 %v1332
    %1348 = vmatpush.bf16.msra.mxu0 %v1331
    %1349 = vmatpush.bf16.msra.mxu0 %v1330
    %1350 = vmatmul.bf16.gmra.mxu0 %v1340
    %v1351 = vpop.f32.mrf.mxu0
    %v1352 = vadd.f32 %v1312, %v1351
    %v1353 = vpop.f32.mrf.mxu0
    %v1354 = vadd.f32 %v1312, %v1353
    %1355 = vdwg.mxu0
    %v1356 = vadd.f32 %v1243, %v1352
    %v1357 = vadd.f32 %v1244, %v1354
    %v1358 = vld [vmem:[%s18] sm:$0x1]
    %v1359 = vld [vmem:[%s19] sm:$0x1]
    %v1360 = vsel %vm83, %v1356, 0.0
    %1361 = vadd.xlane.f32.xlu0 %v1360
    %v1362 = vpop.xlane.xlu0 %1361
    %v1363 = vsel %vm83, %v1357, 0.0
    %1364 = vadd.xlane.f32.xlu0 %v1363
    %v1365 = vpop.xlane.xlu0 %1364
    %v1366 = vmul.f32 %v1362, %v96
    %v1367 = vmul.f32 %v1365, %v96
    %v1368 = vsub.f32 %v1356, %v1366
    %v1369 = vsub.f32 %v1357, %v1367
    %v1370 = vmul.f32 %v1368, %v1368
    %v1371 = vmul.f32 %v1369, %v1369
    %v1372 = vsel %vm83, %v1370, 0.0
    %1373 = vadd.xlane.f32.xlu0 %v1372
    %v1374 = vpop.xlane.xlu0 %1373
    %v1375 = vsel %vm83, %v1371, 0.0
    %1376 = vadd.xlane.f32.xlu0 %v1375
    %v1377 = vpop.xlane.xlu0 %1376
    %v1378 = vmul.f32 %v1374, %v96
    %v1379 = vmul.f32 %v1377, %v96
    %v1380 = vadd.f32 %v1378, 1e-05
    %v1381 = vadd.f32 %v1379, 1e-05
    %v1382 = vrsqrt.pop %v1380
    %v1383 = vmul.f32 %v1382, %v1380
    %v1384 = vmul.f32 %v1383, %v1382
    %v1385 = vmul.f32 0.5, %v1384
    %v1386 = vsub.f32 1.5, %v1385
    %v1387 = vmul.f32 %v1382, %v1386
    %vm1388 = vweird.f32 %v1380
    %vm1389 = vweird.f32 %v1382
    %vm1390 = vmor %vm1388, %vm1389
    %v1391 = vsel %vm1390, %v1382, %v1387
    %v1392 = vrsqrt.pop %v1381
    %v1393 = vmul.f32 %v1392, %v1381
    %v1394 = vmul.f32 %v1393, %v1392
    %v1395 = vmul.f32 0.5, %v1394
    %v1396 = vsub.f32 1.5, %v1395
    %v1397 = vmul.f32 %v1392, %v1396
    %vm1398 = vweird.f32 %v1381
    %vm1399 = vweird.f32 %v1392
    %vm1400 = vmor %vm1398, %vm1399
    %v1401 = vsel %vm1400, %v1392, %v1397
    %v1402 = vmul.f32 %v1368, %v1391
    %v1403 = vmul.f32 %v1369, %v1401
    %v1405 = vperm.slane %v1358, 0
    %v1407 = vmul.f32 %v1402, %v1405
    %v1408 = vmul.f32 %v1403, %v1405
    %v1410 = vperm.slane %v1359, 0
    %v1412 = vadd.f32 %v1407, %v1410
    %v1413 = vadd.f32 %v1408, %v1410
    %v1414 = vpack.c.bf16 %v1413, %v1412
    %s1415 = scalar_lea.vmem %s4, 64
    %v1416 = vld [vmem:[%s1415] sm:$0xf]
    %v1417 = vld [vmem:[%s1415 + $0x4] sm:$0xf]
    %v1418 = vld [vmem:[%s1415 + $0x8] sm:$0xf]
    %v1419 = vld [vmem:[%s1415 + $0xc] sm:$0xf]
    %s1420 = scalar_lea.vmem %s5, 4
    %v1421 = vld [vmem:[%s1420] sm:$0x1]
    %v1423 = vperm.slane %v1421, 0
    %v1429 = vunpack.c.l.b16 %v1416
    %v1430 = vunpack.c.l.b16 %v1417
    %v1431 = vunpack.c.l.b16 %v1418
    %v1432 = vunpack.c.l.b16 %v1419
    %v1433 = vpack.c.b16 %v1430, %v1429
    %v1434 = vpack.c.b16 %v1432, %v1431
    %v1438 = vsel %vm83, %v1414, 0
    %1440 = vmatpush.bf16.msra.mxu0 0
    %1441 = vmatpush.bf16.msra.mxu0 0
    %1442 = vmatpush.bf16.msra.mxu0 0
    %1443 = vmatpush.bf16.msra.mxu0 0
    %1444 = vmatpush.bf16.msra.mxu0 0
    %1445 = vmatpush.bf16.msra.mxu0 0
    %1446 = vmatpush.bf16.msra.mxu0 %v1434
    %1447 = vmatpush.bf16.msra.mxu0 %v1433
    %1448 = vmatmul.bf16.gmra.mxu0 %v1438
    %v1449 = vpop.f32.mrf.mxu0
    %v1450 = vadd.f32 %v1423, %v1449
    %v1451 = vpop.f32.mrf.mxu0
    %v1452 = vadd.f32 %v1423, %v1451
    %1453 = vdwg.mxu0
    %s1454 = scalar_lea.vmem %s6, 64
    %v1455 = vld [vmem:[%s1454] sm:$0xf]
    %v1456 = vld [vmem:[%s1454 + $0x4] sm:$0xf]
    %v1457 = vld [vmem:[%s1454 + $0x8] sm:$0xf]
    %v1458 = vld [vmem:[%s1454 + $0xc] sm:$0xf]
    %s1459 = scalar_lea.vmem %s7, 4
    %v1460 = vld [vmem:[%s1459] sm:$0x1]
    %v1462 = vperm.slane %v1460, 0
    %v1468 = vunpack.c.l.b16 %v1455
    %v1469 = vunpack.c.l.b16 %v1456
    %v1470 = vunpack.c.l.b16 %v1457
    %v1471 = vunpack.c.l.b16 %v1458
    %v1472 = vpack.c.b16 %v1469, %v1468
    %v1473 = vpack.c.b16 %v1471, %v1470
    %1476 = vmatpush.bf16.msra.mxu0 0
    %1477 = vmatpush.bf16.msra.mxu0 0
    %1478 = vmatpush.bf16.msra.mxu0 0
    %1479 = vmatpush.bf16.msra.mxu0 0
    %1480 = vmatpush.bf16.msra.mxu0 0
    %1481 = vmatpush.bf16.msra.mxu0 0
    %1482 = vmatpush.bf16.msra.mxu0 %v1473
    %1483 = vmatpush.bf16.msra.mxu0 %v1472
    %1484 = vmatmul.bf16.gmra.mxu0 %v1438
    %v1485 = vpop.f32.mrf.mxu0
    %v1486 = vadd.f32 %v1462, %v1485
    %v1487 = vpop.f32.mrf.mxu0
    %v1488 = vadd.f32 %v1462, %v1487
    %1489 = vdwg.mxu0
    %s1490 = scalar_lea.vmem %s8, 64
    %v1491 = vld [vmem:[%s1490] sm:$0xf]
    %v1492 = vld [vmem:[%s1490 + $0x4] sm:$0xf]
    %v1493 = vld [vmem:[%s1490 + $0x8] sm:$0xf]
    %v1494 = vld [vmem:[%s1490 + $0xc] sm:$0xf]
    %s1495 = scalar_lea.vmem %s9, 4
    %v1496 = vld [vmem:[%s1495] sm:$0x1]
    %v1498 = vperm.slane %v1496, 0
    %v1504 = vunpack.c.l.b16 %v1491
    %v1505 = vunpack.c.l.b16 %v1492
    %v1506 = vunpack.c.l.b16 %v1493
    %v1507 = vunpack.c.l.b16 %v1494
    %v1508 = vpack.c.b16 %v1505, %v1504
    %v1509 = vpack.c.b16 %v1507, %v1506
    %1512 = vmatpush.bf16.msra.mxu0 0
    %1513 = vmatpush.bf16.msra.mxu0 0
    %1514 = vmatpush.bf16.msra.mxu0 0
    %1515 = vmatpush.bf16.msra.mxu0 0
    %1516 = vmatpush.bf16.msra.mxu0 0
    %1517 = vmatpush.bf16.msra.mxu0 0
    %1518 = vmatpush.bf16.msra.mxu0 %v1509
    %1519 = vmatpush.bf16.msra.mxu0 %v1508
    %1520 = vmatmul.bf16.gmra.mxu0 %v1438
    %v1521 = vpop.f32.mrf.mxu0
    %v1522 = vadd.f32 %v1498, %v1521
    %v1523 = vpop.f32.mrf.mxu0
    %v1524 = vadd.f32 %v1498, %v1523
    %1525 = vdwg.mxu0
    %s1526 = scalar_lea.vmem %s4, 80
    %v1527 = vld [vmem:[%s1526] sm:$0xf]
    %v1528 = vld [vmem:[%s1526 + $0x4] sm:$0xf]
    %v1529 = vld [vmem:[%s1526 + $0x8] sm:$0xf]
    %v1530 = vld [vmem:[%s1526 + $0xc] sm:$0xf]
    %s1531 = scalar_lea.vmem %s5, 5
    %v1532 = vld [vmem:[%s1531] sm:$0x1]
    %v1534 = vperm.slane %v1532, 0
    %v1540 = vunpack.c.l.b16 %v1527
    %v1541 = vunpack.c.l.b16 %v1528
    %v1542 = vunpack.c.l.b16 %v1529
    %v1543 = vunpack.c.l.b16 %v1530
    %v1544 = vpack.c.b16 %v1541, %v1540
    %v1545 = vpack.c.b16 %v1543, %v1542
    %1548 = vmatpush.bf16.msra.mxu0 0
    %1549 = vmatpush.bf16.msra.mxu0 0
    %1550 = vmatpush.bf16.msra.mxu0 0
    %1551 = vmatpush.bf16.msra.mxu0 0
    %1552 = vmatpush.bf16.msra.mxu0 0
    %1553 = vmatpush.bf16.msra.mxu0 0
    %1554 = vmatpush.bf16.msra.mxu0 %v1545
    %1555 = vmatpush.bf16.msra.mxu0 %v1544
    %1556 = vmatmul.bf16.gmra.mxu0 %v1438
    %v1557 = vpop.f32.mrf.mxu0
    %v1558 = vadd.f32 %v1534, %v1557
    %v1559 = vpop.f32.mrf.mxu0
    %v1560 = vadd.f32 %v1534, %v1559
    %1561 = vdwg.mxu0
    %s1562 = scalar_lea.vmem %s6, 80
    %v1563 = vld [vmem:[%s1562] sm:$0xf]
    %v1564 = vld [vmem:[%s1562 + $0x4] sm:$0xf]
    %v1565 = vld [vmem:[%s1562 + $0x8] sm:$0xf]
    %v1566 = vld [vmem:[%s1562 + $0xc] sm:$0xf]
    %s1567 = scalar_lea.vmem %s7, 5
    %v1568 = vld [vmem:[%s1567] sm:$0x1]
    %v1570 = vperm.slane %v1568, 0
    %v1576 = vunpack.c.l.b16 %v1563
    %v1577 = vunpack.c.l.b16 %v1564
    %v1578 = vunpack.c.l.b16 %v1565
    %v1579 = vunpack.c.l.b16 %v1566
    %v1580 = vpack.c.b16 %v1577, %v1576
    %v1581 = vpack.c.b16 %v1579, %v1578
    %1584 = vmatpush.bf16.msra.mxu0 0
    %1585 = vmatpush.bf16.msra.mxu0 0
    %1586 = vmatpush.bf16.msra.mxu0 0
    %1587 = vmatpush.bf16.msra.mxu0 0
    %1588 = vmatpush.bf16.msra.mxu0 0
    %1589 = vmatpush.bf16.msra.mxu0 0
    %1590 = vmatpush.bf16.msra.mxu0 %v1581
    %1591 = vmatpush.bf16.msra.mxu0 %v1580
    %1592 = vmatmul.bf16.gmra.mxu0 %v1438
    %v1593 = vpop.f32.mrf.mxu0
    %v1594 = vadd.f32 %v1570, %v1593
    %v1595 = vpop.f32.mrf.mxu0
    %v1596 = vadd.f32 %v1570, %v1595
    %1597 = vdwg.mxu0
    %s1598 = scalar_lea.vmem %s8, 80
    %v1599 = vld [vmem:[%s1598] sm:$0xf]
    %v1600 = vld [vmem:[%s1598 + $0x4] sm:$0xf]
    %v1601 = vld [vmem:[%s1598 + $0x8] sm:$0xf]
    %v1602 = vld [vmem:[%s1598 + $0xc] sm:$0xf]
    %s1603 = scalar_lea.vmem %s9, 5
    %v1604 = vld [vmem:[%s1603] sm:$0x1]
    %v1606 = vperm.slane %v1604, 0
    %v1612 = vunpack.c.l.b16 %v1599
    %v1613 = vunpack.c.l.b16 %v1600
    %v1614 = vunpack.c.l.b16 %v1601
    %v1615 = vunpack.c.l.b16 %v1602
    %v1616 = vpack.c.b16 %v1613, %v1612
    %v1617 = vpack.c.b16 %v1615, %v1614
    %1620 = vmatpush.bf16.msra.mxu0 0
    %1621 = vmatpush.bf16.msra.mxu0 0
    %1622 = vmatpush.bf16.msra.mxu0 0
    %1623 = vmatpush.bf16.msra.mxu0 0
    %1624 = vmatpush.bf16.msra.mxu0 0
    %1625 = vmatpush.bf16.msra.mxu0 0
    %1626 = vmatpush.bf16.msra.mxu0 %v1617
    %1627 = vmatpush.bf16.msra.mxu0 %v1616
    %1628 = vmatmul.bf16.gmra.mxu0 %v1438
    %v1629 = vpop.f32.mrf.mxu0
    %v1630 = vadd.f32 %v1606, %v1629
    %v1631 = vpop.f32.mrf.mxu0
    %v1632 = vadd.f32 %v1606, %v1631
    %1633 = vdwg.mxu0
    %s1634 = scalar_lea.vmem %s4, 96
    %v1635 = vld [vmem:[%s1634] sm:$0xf]
    %v1636 = vld [vmem:[%s1634 + $0x4] sm:$0xf]
    %v1637 = vld [vmem:[%s1634 + $0x8] sm:$0xf]
    %v1638 = vld [vmem:[%s1634 + $0xc] sm:$0xf]
    %s1639 = scalar_lea.vmem %s5, 6
    %v1640 = vld [vmem:[%s1639] sm:$0x1]
    %v1642 = vperm.slane %v1640, 0
    %v1648 = vunpack.c.l.b16 %v1635
    %v1649 = vunpack.c.l.b16 %v1636
    %v1650 = vunpack.c.l.b16 %v1637
    %v1651 = vunpack.c.l.b16 %v1638
    %v1652 = vpack.c.b16 %v1649, %v1648
    %v1653 = vpack.c.b16 %v1651, %v1650
    %1656 = vmatpush.bf16.msra.mxu0 0
    %1657 = vmatpush.bf16.msra.mxu0 0
    %1658 = vmatpush.bf16.msra.mxu0 0
    %1659 = vmatpush.bf16.msra.mxu0 0
    %1660 = vmatpush.bf16.msra.mxu0 0
    %1661 = vmatpush.bf16.msra.mxu0 0
    %1662 = vmatpush.bf16.msra.mxu0 %v1653
    %1663 = vmatpush.bf16.msra.mxu0 %v1652
    %1664 = vmatmul.bf16.gmra.mxu0 %v1438
    %v1665 = vpop.f32.mrf.mxu0
    %v1666 = vadd.f32 %v1642, %v1665
    %v1667 = vpop.f32.mrf.mxu0
    %v1668 = vadd.f32 %v1642, %v1667
    %1669 = vdwg.mxu0
    %s1670 = scalar_lea.vmem %s6, 96
    %v1671 = vld [vmem:[%s1670] sm:$0xf]
    %v1672 = vld [vmem:[%s1670 + $0x4] sm:$0xf]
    %v1673 = vld [vmem:[%s1670 + $0x8] sm:$0xf]
    %v1674 = vld [vmem:[%s1670 + $0xc] sm:$0xf]
    %s1675 = scalar_lea.vmem %s7, 6
    %v1676 = vld [vmem:[%s1675] sm:$0x1]
    %v1678 = vperm.slane %v1676, 0
    %v1684 = vunpack.c.l.b16 %v1671
    %v1685 = vunpack.c.l.b16 %v1672
    %v1686 = vunpack.c.l.b16 %v1673
    %v1687 = vunpack.c.l.b16 %v1674
    %v1688 = vpack.c.b16 %v1685, %v1684
    %v1689 = vpack.c.b16 %v1687, %v1686
    %1692 = vmatpush.bf16.msra.mxu0 0
    %1693 = vmatpush.bf16.msra.mxu0 0
    %1694 = vmatpush.bf16.msra.mxu0 0
    %1695 = vmatpush.bf16.msra.mxu0 0
    %1696 = vmatpush.bf16.msra.mxu0 0
    %1697 = vmatpush.bf16.msra.mxu0 0
    %1698 = vmatpush.bf16.msra.mxu0 %v1689
    %1699 = vmatpush.bf16.msra.mxu0 %v1688
    %1700 = vmatmul.bf16.gmra.mxu0 %v1438
    %v1701 = vpop.f32.mrf.mxu0
    %v1702 = vadd.f32 %v1678, %v1701
    %v1703 = vpop.f32.mrf.mxu0
    %v1704 = vadd.f32 %v1678, %v1703
    %1705 = vdwg.mxu0
    %s1706 = scalar_lea.vmem %s8, 96
    %v1707 = vld [vmem:[%s1706] sm:$0xf]
    %v1708 = vld [vmem:[%s1706 + $0x4] sm:$0xf]
    %v1709 = vld [vmem:[%s1706 + $0x8] sm:$0xf]
    %v1710 = vld [vmem:[%s1706 + $0xc] sm:$0xf]
    %s1711 = scalar_lea.vmem %s9, 6
    %v1712 = vld [vmem:[%s1711] sm:$0x1]
    %v1714 = vperm.slane %v1712, 0
    %v1720 = vunpack.c.l.b16 %v1707
    %v1721 = vunpack.c.l.b16 %v1708
    %v1722 = vunpack.c.l.b16 %v1709
    %v1723 = vunpack.c.l.b16 %v1710
    %v1724 = vpack.c.b16 %v1721, %v1720
    %v1725 = vpack.c.b16 %v1723, %v1722
    %1728 = vmatpush.bf16.msra.mxu0 0
    %1729 = vmatpush.bf16.msra.mxu0 0
    %1730 = vmatpush.bf16.msra.mxu0 0
    %1731 = vmatpush.bf16.msra.mxu0 0
    %1732 = vmatpush.bf16.msra.mxu0 0
    %1733 = vmatpush.bf16.msra.mxu0 0
    %1734 = vmatpush.bf16.msra.mxu0 %v1725
    %1735 = vmatpush.bf16.msra.mxu0 %v1724
    %1736 = vmatmul.bf16.gmra.mxu0 %v1438
    %v1737 = vpop.f32.mrf.mxu0
    %v1738 = vadd.f32 %v1714, %v1737
    %v1739 = vpop.f32.mrf.mxu0
    %v1740 = vadd.f32 %v1714, %v1739
    %1741 = vdwg.mxu0
    %s1742 = scalar_lea.vmem %s4, 112
    %v1743 = vld [vmem:[%s1742] sm:$0xf]
    %v1744 = vld [vmem:[%s1742 + $0x4] sm:$0xf]
    %v1745 = vld [vmem:[%s1742 + $0x8] sm:$0xf]
    %v1746 = vld [vmem:[%s1742 + $0xc] sm:$0xf]
    %s1747 = scalar_lea.vmem %s5, 7
    %v1748 = vld [vmem:[%s1747] sm:$0x1]
    %v1750 = vperm.slane %v1748, 0
    %v1756 = vunpack.c.l.b16 %v1743
    %v1757 = vunpack.c.l.b16 %v1744
    %v1758 = vunpack.c.l.b16 %v1745
    %v1759 = vunpack.c.l.b16 %v1746
    %v1760 = vpack.c.b16 %v1757, %v1756
    %v1761 = vpack.c.b16 %v1759, %v1758
    %1764 = vmatpush.bf16.msra.mxu0 0
    %1765 = vmatpush.bf16.msra.mxu0 0
    %1766 = vmatpush.bf16.msra.mxu0 0
    %1767 = vmatpush.bf16.msra.mxu0 0
    %1768 = vmatpush.bf16.msra.mxu0 0
    %1769 = vmatpush.bf16.msra.mxu0 0
    %1770 = vmatpush.bf16.msra.mxu0 %v1761
    %1771 = vmatpush.bf16.msra.mxu0 %v1760
    %1772 = vmatmul.bf16.gmra.mxu0 %v1438
    %v1773 = vpop.f32.mrf.mxu0
    %v1774 = vadd.f32 %v1750, %v1773
    %v1775 = vpop.f32.mrf.mxu0
    %v1776 = vadd.f32 %v1750, %v1775
    %1777 = vdwg.mxu0
    %s1778 = scalar_lea.vmem %s6, 112
    %v1779 = vld [vmem:[%s1778] sm:$0xf]
    %v1780 = vld [vmem:[%s1778 + $0x4] sm:$0xf]
    %v1781 = vld [vmem:[%s1778 + $0x8] sm:$0xf]
    %v1782 = vld [vmem:[%s1778 + $0xc] sm:$0xf]
    %s1783 = scalar_lea.vmem %s7, 7
    %v1784 = vld [vmem:[%s1783] sm:$0x1]
    %v1786 = vperm.slane %v1784, 0
    %v1792 = vunpack.c.l.b16 %v1779
    %v1793 = vunpack.c.l.b16 %v1780
    %v1794 = vunpack.c.l.b16 %v1781
    %v1795 = vunpack.c.l.b16 %v1782
    %v1796 = vpack.c.b16 %v1793, %v1792
    %v1797 = vpack.c.b16 %v1795, %v1794
    %1800 = vmatpush.bf16.msra.mxu0 0
    %1801 = vmatpush.bf16.msra.mxu0 0
    %1802 = vmatpush.bf16.msra.mxu0 0
    %1803 = vmatpush.bf16.msra.mxu0 0
    %1804 = vmatpush.bf16.msra.mxu0 0
    %1805 = vmatpush.bf16.msra.mxu0 0
    %1806 = vmatpush.bf16.msra.mxu0 %v1797
    %1807 = vmatpush.bf16.msra.mxu0 %v1796
    %1808 = vmatmul.bf16.gmra.mxu0 %v1438
    %v1809 = vpop.f32.mrf.mxu0
    %v1810 = vadd.f32 %v1786, %v1809
    %v1811 = vpop.f32.mrf.mxu0
    %v1812 = vadd.f32 %v1786, %v1811
    %1813 = vdwg.mxu0
    %s1814 = scalar_lea.vmem %s8, 112
    %v1815 = vld [vmem:[%s1814] sm:$0xf]
    %v1816 = vld [vmem:[%s1814 + $0x4] sm:$0xf]
    %v1817 = vld [vmem:[%s1814 + $0x8] sm:$0xf]
    %v1818 = vld [vmem:[%s1814 + $0xc] sm:$0xf]
    %s1819 = scalar_lea.vmem %s9, 7
    %v1820 = vld [vmem:[%s1819] sm:$0x1]
    %v1822 = vperm.slane %v1820, 0
    %v1828 = vunpack.c.l.b16 %v1815
    %v1829 = vunpack.c.l.b16 %v1816
    %v1830 = vunpack.c.l.b16 %v1817
    %v1831 = vunpack.c.l.b16 %v1818
    %v1832 = vpack.c.b16 %v1829, %v1828
    %v1833 = vpack.c.b16 %v1831, %v1830
    %1836 = vmatpush.bf16.msra.mxu0 0
    %1837 = vmatpush.bf16.msra.mxu0 0
    %1838 = vmatpush.bf16.msra.mxu0 0
    %1839 = vmatpush.bf16.msra.mxu0 0
    %1840 = vmatpush.bf16.msra.mxu0 0
    %1841 = vmatpush.bf16.msra.mxu0 0
    %1842 = vmatpush.bf16.msra.mxu0 %v1833
    %1843 = vmatpush.bf16.msra.mxu0 %v1832
    %1844 = vmatmul.bf16.gmra.mxu0 %v1438
    %v1845 = vpop.f32.mrf.mxu0
    %v1846 = vadd.f32 %v1822, %v1845
    %v1847 = vpop.f32.mrf.mxu0
    %v1848 = vadd.f32 %v1822, %v1847
    %1849 = vdwg.mxu0
    %v1850 = vpack.c.bf16 %v1450, %v1450
    %v1851 = vpack.c.bf16 %v1486, %v1486
    %v1852 = vpack.c.bf16 %v1522, %v1522
    %v1854 = vsel %vm583, %v1850, 0
    %v1857 = vsel %vm583, %v1851, 0
    %1859 = vmatpush.bf16.xpose.msra.mxu0 0
    %1860 = vmatpush.bf16.xpose.msra.mxu0 0
    %1861 = vmatpush.bf16.xpose.msra.mxu0 0
    %1862 = vmatpush.bf16.xpose.msra.mxu0 0
    %1863 = vmatpush.bf16.xpose.msra.mxu0 0
    %1864 = vmatpush.bf16.xpose.msra.mxu0 0
    %1865 = vmatpush.bf16.xpose.msra.mxu0 0
    %1866 = vmatpush.bf16.xpose.msra.mxu0 %v1857
    %1867 = vmatmul.bf16.gmra.mxu0 %v1854
    %v1868 = vpop.f32.mrf.mxu0
    %v1869 = vadd.f32 0.0, %v1868
    %v1870 = vpop.f32.mrf.mxu0
    %1871 = vdwg.mxu0
    %v1872 = vmul.f32 %v1869, 0.35355338
    %v1873 = vadd.f32 %v1872, %v148
    %v1874 = vsel %vm583, %v1873, -inf
    %1875 = vmax.xlane.f32.xlu0 %v1874
    %v1876 = vpop.xlane.xlu0 %1875
    %v1877 = vsub.f32 %v1873, %v1876
    %v1878 = vmul.f32 %v1877, 1.442695
    %v1879 = vpow.pop %v1878
    %v1880 = vsel %vm583, %v1879, 0.0
    %1881 = vadd.xlane.f32.xlu0 %v1880
    %v1882 = vpop.xlane.xlu0 %1881
    %v1883 = vrcp.pop %v1882
    %v1884 = vmul.f32 %v1879, %v1883
    %v1885 = vpack.c.bf16 %v1884, %v1884
    %v1887 = vsel %vm583, %v1885, 0
    %v1890 = vsel %vm620, %v1852, 0
    %1892 = vmatpush.bf16.msra.mxu0 0
    %1893 = vmatpush.bf16.msra.mxu0 0
    %1894 = vmatpush.bf16.msra.mxu0 0
    %1895 = vmatpush.bf16.msra.mxu0 0
    %1896 = vmatpush.bf16.msra.mxu0 0
    %1897 = vmatpush.bf16.msra.mxu0 0
    %1898 = vmatpush.bf16.msra.mxu0 0
    %1899 = vmatpush.bf16.msra.mxu0 %v1890
    %1900 = vmatmul.bf16.gmra.mxu0 %v1887
    %v1901 = vpop.f32.mrf.mxu0
    %v1902 = vadd.f32 0.0, %v1901
    %v1903 = vpop.f32.mrf.mxu0
    %1904 = vdwg.mxu0
    %v1905 = vpack.c.bf16 %v1902, %v1902
    %s1906 = scalar_lea.vmem %s10, 16
    %v1907 = vld [vmem:[%s1906] sm:$0xf]
    %v1908 = vpack.c.bf16 %v1558, %v1558
    %v1909 = vpack.c.bf16 %v1594, %v1594
    %v1910 = vpack.c.bf16 %v1630, %v1630
    %v1912 = vsel %vm583, %v1908, 0
    %v1915 = vsel %vm583, %v1909, 0
    %1917 = vmatpush.bf16.xpose.msra.mxu0 0
    %1918 = vmatpush.bf16.xpose.msra.mxu0 0
    %1919 = vmatpush.bf16.xpose.msra.mxu0 0
    %1920 = vmatpush.bf16.xpose.msra.mxu0 0
    %1921 = vmatpush.bf16.xpose.msra.mxu0 0
    %1922 = vmatpush.bf16.xpose.msra.mxu0 0
    %1923 = vmatpush.bf16.xpose.msra.mxu0 0
    %1924 = vmatpush.bf16.xpose.msra.mxu0 %v1915
    %1925 = vmatmul.bf16.gmra.mxu0 %v1912
    %v1926 = vpop.f32.mrf.mxu0
    %v1927 = vadd.f32 0.0, %v1926
    %v1928 = vpop.f32.mrf.mxu0
    %1929 = vdwg.mxu0
    %v1930 = vmul.f32 %v1927, 0.35355338
    %v1931 = vadd.f32 %v1930, %v148
    %v1932 = vsel %vm583, %v1931, -inf
    %1933 = vmax.xlane.f32.xlu0 %v1932
    %v1934 = vpop.xlane.xlu0 %1933
    %v1935 = vsub.f32 %v1931, %v1934
    %v1936 = vmul.f32 %v1935, 1.442695
    %v1937 = vpow.pop %v1936
    %v1938 = vsel %vm583, %v1937, 0.0
    %1939 = vadd.xlane.f32.xlu0 %v1938
    %v1940 = vpop.xlane.xlu0 %1939
    %v1941 = vrcp.pop %v1940
    %v1942 = vmul.f32 %v1937, %v1941
    %v1943 = vpack.c.bf16 %v1942, %v1942
    %v1945 = vsel %vm583, %v1943, 0
    %v1948 = vsel %vm620, %v1910, 0
    %1950 = vmatpush.bf16.msra.mxu0 0
    %1951 = vmatpush.bf16.msra.mxu0 0
    %1952 = vmatpush.bf16.msra.mxu0 0
    %1953 = vmatpush.bf16.msra.mxu0 0
    %1954 = vmatpush.bf16.msra.mxu0 0
    %1955 = vmatpush.bf16.msra.mxu0 0
    %1956 = vmatpush.bf16.msra.mxu0 0
    %1957 = vmatpush.bf16.msra.mxu0 %v1948
    %1958 = vmatmul.bf16.gmra.mxu0 %v1945
    %v1959 = vpop.f32.mrf.mxu0
    %v1960 = vadd.f32 0.0, %v1959
    %v1961 = vpop.f32.mrf.mxu0
    %1962 = vdwg.mxu0
    %v1963 = vpack.c.bf16 %v1960, %v1960
    %s1964 = scalar_lea.vmem %s10, 20
    %v1965 = vld [vmem:[%s1964] sm:$0xf]
    %v1967 = vsel %vm583, %v1963, 0
    %v1970 = vsel %vm620, %v1965, 0
    %1972 = vmatpush.bf16.msra.mxu0 0
    %1973 = vmatpush.bf16.msra.mxu0 0
    %1974 = vmatpush.bf16.msra.mxu0 0
    %1975 = vmatpush.bf16.msra.mxu0 0
    %1976 = vmatpush.bf16.msra.mxu0 0
    %1977 = vmatpush.bf16.msra.mxu0 0
    %1978 = vmatpush.bf16.msra.mxu0 0
    %1979 = vmatpush.bf16.msra.mxu0 %v1970
    %1980 = vmatmul.bf16.gmra.mxu0 %v1967
    %v1981 = vpop.f32.mrf.mxu0
    %v1982 = vadd.f32 0.0, %v1981
    %v1983 = vpop.f32.mrf.mxu0
    %1984 = vdwg.mxu0
    %v1986 = vsel %vm583, %v1905, 0
    %v1989 = vsel %vm620, %v1907, 0
    %1991 = vmatpush.bf16.msra.mxu0 0
    %1992 = vmatpush.bf16.msra.mxu0 0
    %1993 = vmatpush.bf16.msra.mxu0 0
    %1994 = vmatpush.bf16.msra.mxu0 0
    %1995 = vmatpush.bf16.msra.mxu0 0
    %1996 = vmatpush.bf16.msra.mxu0 0
    %1997 = vmatpush.bf16.msra.mxu0 0
    %1998 = vmatpush.bf16.msra.mxu0 %v1989
    %1999 = vmatmul.bf16.gmra.mxu0 %v1986
    %v2000 = vpop.f32.mrf.mxu0
    %v2001 = vadd.f32 %v1982, %v2000
    %v2002 = vpop.f32.mrf.mxu0
    %2003 = vdwg.mxu0
    %v2004 = vpack.c.bf16 %v1666, %v1666
    %v2005 = vpack.c.bf16 %v1702, %v1702
    %v2006 = vpack.c.bf16 %v1738, %v1738
    %v2008 = vsel %vm583, %v2004, 0
    %v2011 = vsel %vm583, %v2005, 0
    %2013 = vmatpush.bf16.xpose.msra.mxu0 0
    %2014 = vmatpush.bf16.xpose.msra.mxu0 0
    %2015 = vmatpush.bf16.xpose.msra.mxu0 0
    %2016 = vmatpush.bf16.xpose.msra.mxu0 0
    %2017 = vmatpush.bf16.xpose.msra.mxu0 0
    %2018 = vmatpush.bf16.xpose.msra.mxu0 0
    %2019 = vmatpush.bf16.xpose.msra.mxu0 0
    %2020 = vmatpush.bf16.xpose.msra.mxu0 %v2011
    %2021 = vmatmul.bf16.gmra.mxu0 %v2008
    %v2022 = vpop.f32.mrf.mxu0
    %v2023 = vadd.f32 0.0, %v2022
    %v2024 = vpop.f32.mrf.mxu0
    %2025 = vdwg.mxu0
    %v2026 = vmul.f32 %v2023, 0.35355338
    %v2027 = vadd.f32 %v2026, %v148
    %v2028 = vsel %vm583, %v2027, -inf
    %2029 = vmax.xlane.f32.xlu0 %v2028
    %v2030 = vpop.xlane.xlu0 %2029
    %v2031 = vsub.f32 %v2027, %v2030
    %v2032 = vmul.f32 %v2031, 1.442695
    %v2033 = vpow.pop %v2032
    %v2034 = vsel %vm583, %v2033, 0.0
    %2035 = vadd.xlane.f32.xlu0 %v2034
    %v2036 = vpop.xlane.xlu0 %2035
    %v2037 = vrcp.pop %v2036
    %v2038 = vmul.f32 %v2033, %v2037
    %v2039 = vpack.c.bf16 %v2038, %v2038
    %v2041 = vsel %vm583, %v2039, 0
    %v2044 = vsel %vm620, %v2006, 0
    %2046 = vmatpush.bf16.msra.mxu0 0
    %2047 = vmatpush.bf16.msra.mxu0 0
    %2048 = vmatpush.bf16.msra.mxu0 0
    %2049 = vmatpush.bf16.msra.mxu0 0
    %2050 = vmatpush.bf16.msra.mxu0 0
    %2051 = vmatpush.bf16.msra.mxu0 0
    %2052 = vmatpush.bf16.msra.mxu0 0
    %2053 = vmatpush.bf16.msra.mxu0 %v2044
    %2054 = vmatmul.bf16.gmra.mxu0 %v2041
    %v2055 = vpop.f32.mrf.mxu0
    %v2056 = vadd.f32 0.0, %v2055
    %v2057 = vpop.f32.mrf.mxu0
    %2058 = vdwg.mxu0
    %v2059 = vpack.c.bf16 %v2056, %v2056
    %s2060 = scalar_lea.vmem %s10, 24
    %v2061 = vld [vmem:[%s2060] sm:$0xf]
    %v2063 = vsel %vm583, %v2059, 0
    %v2066 = vsel %vm620, %v2061, 0
    %2068 = vmatpush.bf16.msra.mxu0 0
    %2069 = vmatpush.bf16.msra.mxu0 0
    %2070 = vmatpush.bf16.msra.mxu0 0
    %2071 = vmatpush.bf16.msra.mxu0 0
    %2072 = vmatpush.bf16.msra.mxu0 0
    %2073 = vmatpush.bf16.msra.mxu0 0
    %2074 = vmatpush.bf16.msra.mxu0 0
    %2075 = vmatpush.bf16.msra.mxu0 %v2066
    %2076 = vmatmul.bf16.gmra.mxu0 %v2063
    %v2077 = vpop.f32.mrf.mxu0
    %v2078 = vadd.f32 0.0, %v2077
    %v2079 = vpop.f32.mrf.mxu0
    %2080 = vdwg.mxu0
    %v2081 = vadd.f32 %v2001, %v2078
    %v2082 = vpack.c.bf16 %v1774, %v1774
    %v2083 = vpack.c.bf16 %v1810, %v1810
    %v2084 = vpack.c.bf16 %v1846, %v1846
    %v2086 = vsel %vm583, %v2082, 0
    %v2089 = vsel %vm583, %v2083, 0
    %2091 = vmatpush.bf16.xpose.msra.mxu0 0
    %2092 = vmatpush.bf16.xpose.msra.mxu0 0
    %2093 = vmatpush.bf16.xpose.msra.mxu0 0
    %2094 = vmatpush.bf16.xpose.msra.mxu0 0
    %2095 = vmatpush.bf16.xpose.msra.mxu0 0
    %2096 = vmatpush.bf16.xpose.msra.mxu0 0
    %2097 = vmatpush.bf16.xpose.msra.mxu0 0
    %2098 = vmatpush.bf16.xpose.msra.mxu0 %v2089
    %2099 = vmatmul.bf16.gmra.mxu0 %v2086
    %v2100 = vpop.f32.mrf.mxu0
    %v2101 = vadd.f32 0.0, %v2100
    %v2102 = vpop.f32.mrf.mxu0
    %2103 = vdwg.mxu0
    %v2104 = vmul.f32 %v2101, 0.35355338
    %v2105 = vadd.f32 %v2104, %v148
    %v2106 = vsel %vm583, %v2105, -inf
    %2107 = vmax.xlane.f32.xlu0 %v2106
    %v2108 = vpop.xlane.xlu0 %2107
    %v2109 = vsub.f32 %v2105, %v2108
    %v2110 = vmul.f32 %v2109, 1.442695
    %v2111 = vpow.pop %v2110
    %v2112 = vsel %vm583, %v2111, 0.0
    %2113 = vadd.xlane.f32.xlu0 %v2112
    %v2114 = vpop.xlane.xlu0 %2113
    %v2115 = vrcp.pop %v2114
    %v2116 = vmul.f32 %v2111, %v2115
    %v2117 = vpack.c.bf16 %v2116, %v2116
    %v2119 = vsel %vm583, %v2117, 0
    %v2122 = vsel %vm620, %v2084, 0
    %2124 = vmatpush.bf16.msra.mxu0 0
    %2125 = vmatpush.bf16.msra.mxu0 0
    %2126 = vmatpush.bf16.msra.mxu0 0
    %2127 = vmatpush.bf16.msra.mxu0 0
    %2128 = vmatpush.bf16.msra.mxu0 0
    %2129 = vmatpush.bf16.msra.mxu0 0
    %2130 = vmatpush.bf16.msra.mxu0 0
    %2131 = vmatpush.bf16.msra.mxu0 %v2122
    %2132 = vmatmul.bf16.gmra.mxu0 %v2119
    %v2133 = vpop.f32.mrf.mxu0
    %v2134 = vadd.f32 0.0, %v2133
    %v2135 = vpop.f32.mrf.mxu0
    %2136 = vdwg.mxu0
    %v2137 = vpack.c.bf16 %v2134, %v2134
    %s2138 = scalar_lea.vmem %s10, 28
    %v2139 = vld [vmem:[%s2138] sm:$0xf]
    %v2141 = vsel %vm583, %v2137, 0
    %v2144 = vsel %vm620, %v2139, 0
    %2146 = vmatpush.bf16.msra.mxu0 0
    %2147 = vmatpush.bf16.msra.mxu0 0
    %2148 = vmatpush.bf16.msra.mxu0 0
    %2149 = vmatpush.bf16.msra.mxu0 0
    %2150 = vmatpush.bf16.msra.mxu0 0
    %2151 = vmatpush.bf16.msra.mxu0 0
    %2152 = vmatpush.bf16.msra.mxu0 0
    %2153 = vmatpush.bf16.msra.mxu0 %v2144
    %2154 = vmatmul.bf16.gmra.mxu0 %v2141
    %v2155 = vpop.f32.mrf.mxu0
    %v2156 = vadd.f32 0.0, %v2155
    %v2157 = vpop.f32.mrf.mxu0
    %2158 = vdwg.mxu0
    %v2159 = vadd.f32 %v2081, %v2156
    %v2160 = vpack.c.bf16 %v1452, %v1452
    %v2161 = vpack.c.bf16 %v1488, %v1488
    %v2162 = vpack.c.bf16 %v1524, %v1524
    %v2164 = vsel %vm583, %v2160, 0
    %v2167 = vsel %vm583, %v2161, 0
    %2169 = vmatpush.bf16.xpose.msra.mxu0 0
    %2170 = vmatpush.bf16.xpose.msra.mxu0 0
    %2171 = vmatpush.bf16.xpose.msra.mxu0 0
    %2172 = vmatpush.bf16.xpose.msra.mxu0 0
    %2173 = vmatpush.bf16.xpose.msra.mxu0 0
    %2174 = vmatpush.bf16.xpose.msra.mxu0 0
    %2175 = vmatpush.bf16.xpose.msra.mxu0 0
    %2176 = vmatpush.bf16.xpose.msra.mxu0 %v2167
    %2177 = vmatmul.bf16.gmra.mxu0 %v2164
    %v2178 = vpop.f32.mrf.mxu0
    %v2179 = vadd.f32 0.0, %v2178
    %v2180 = vpop.f32.mrf.mxu0
    %2181 = vdwg.mxu0
    %v2182 = vmul.f32 %v2179, 0.35355338
    %v2183 = vadd.f32 %v2182, %v149
    %v2184 = vsel %vm583, %v2183, -inf
    %2185 = vmax.xlane.f32.xlu0 %v2184
    %v2186 = vpop.xlane.xlu0 %2185
    %v2187 = vsub.f32 %v2183, %v2186
    %v2188 = vmul.f32 %v2187, 1.442695
    %v2189 = vpow.pop %v2188
    %v2190 = vsel %vm583, %v2189, 0.0
    %2191 = vadd.xlane.f32.xlu0 %v2190
    %v2192 = vpop.xlane.xlu0 %2191
    %v2193 = vrcp.pop %v2192
    %v2194 = vmul.f32 %v2189, %v2193
    %v2195 = vpack.c.bf16 %v2194, %v2194
    %v2197 = vsel %vm583, %v2195, 0
    %v2200 = vsel %vm620, %v2162, 0
    %2202 = vmatpush.bf16.msra.mxu0 0
    %2203 = vmatpush.bf16.msra.mxu0 0
    %2204 = vmatpush.bf16.msra.mxu0 0
    %2205 = vmatpush.bf16.msra.mxu0 0
    %2206 = vmatpush.bf16.msra.mxu0 0
    %2207 = vmatpush.bf16.msra.mxu0 0
    %2208 = vmatpush.bf16.msra.mxu0 0
    %2209 = vmatpush.bf16.msra.mxu0 %v2200
    %2210 = vmatmul.bf16.gmra.mxu0 %v2197
    %v2211 = vpop.f32.mrf.mxu0
    %v2212 = vadd.f32 0.0, %v2211
    %v2213 = vpop.f32.mrf.mxu0
    %2214 = vdwg.mxu0
    %v2215 = vpack.c.bf16 %v2212, %v2212
    %v2216 = vpack.c.bf16 %v1560, %v1560
    %v2217 = vpack.c.bf16 %v1596, %v1596
    %v2218 = vpack.c.bf16 %v1632, %v1632
    %v2220 = vsel %vm583, %v2216, 0
    %v2223 = vsel %vm583, %v2217, 0
    %2225 = vmatpush.bf16.xpose.msra.mxu0 0
    %2226 = vmatpush.bf16.xpose.msra.mxu0 0
    %2227 = vmatpush.bf16.xpose.msra.mxu0 0
    %2228 = vmatpush.bf16.xpose.msra.mxu0 0
    %2229 = vmatpush.bf16.xpose.msra.mxu0 0
    %2230 = vmatpush.bf16.xpose.msra.mxu0 0
    %2231 = vmatpush.bf16.xpose.msra.mxu0 0
    %2232 = vmatpush.bf16.xpose.msra.mxu0 %v2223
    %2233 = vmatmul.bf16.gmra.mxu0 %v2220
    %v2234 = vpop.f32.mrf.mxu0
    %v2235 = vadd.f32 0.0, %v2234
    %v2236 = vpop.f32.mrf.mxu0
    %2237 = vdwg.mxu0
    %v2238 = vmul.f32 %v2235, 0.35355338
    %v2239 = vadd.f32 %v2238, %v149
    %v2240 = vsel %vm583, %v2239, -inf
    %2241 = vmax.xlane.f32.xlu0 %v2240
    %v2242 = vpop.xlane.xlu0 %2241
    %v2243 = vsub.f32 %v2239, %v2242
    %v2244 = vmul.f32 %v2243, 1.442695
    %v2245 = vpow.pop %v2244
    %v2246 = vsel %vm583, %v2245, 0.0
    %2247 = vadd.xlane.f32.xlu0 %v2246
    %v2248 = vpop.xlane.xlu0 %2247
    %v2249 = vrcp.pop %v2248
    %v2250 = vmul.f32 %v2245, %v2249
    %v2251 = vpack.c.bf16 %v2250, %v2250
    %v2253 = vsel %vm583, %v2251, 0
    %v2256 = vsel %vm620, %v2218, 0
    %2258 = vmatpush.bf16.msra.mxu0 0
    %2259 = vmatpush.bf16.msra.mxu0 0
    %2260 = vmatpush.bf16.msra.mxu0 0
    %2261 = vmatpush.bf16.msra.mxu0 0
    %2262 = vmatpush.bf16.msra.mxu0 0
    %2263 = vmatpush.bf16.msra.mxu0 0
    %2264 = vmatpush.bf16.msra.mxu0 0
    %2265 = vmatpush.bf16.msra.mxu0 %v2256
    %2266 = vmatmul.bf16.gmra.mxu0 %v2253
    %v2267 = vpop.f32.mrf.mxu0
    %v2268 = vadd.f32 0.0, %v2267
    %v2269 = vpop.f32.mrf.mxu0
    %2270 = vdwg.mxu0
    %v2271 = vpack.c.bf16 %v2268, %v2268
    %v2273 = vsel %vm583, %v2271, 0
    %2275 = vmatpush.bf16.msra.mxu0 0
    %2276 = vmatpush.bf16.msra.mxu0 0
    %2277 = vmatpush.bf16.msra.mxu0 0
    %2278 = vmatpush.bf16.msra.mxu0 0
    %2279 = vmatpush.bf16.msra.mxu0 0
    %2280 = vmatpush.bf16.msra.mxu0 0
    %2281 = vmatpush.bf16.msra.mxu0 0
    %2282 = vmatpush.bf16.msra.mxu0 %v1970
    %2283 = vmatmul.bf16.gmra.mxu0 %v2273
    %v2284 = vpop.f32.mrf.mxu0
    %v2285 = vadd.f32 0.0, %v2284
    %v2286 = vpop.f32.mrf.mxu0
    %2287 = vdwg.mxu0
    %v2289 = vsel %vm583, %v2215, 0
    %2291 = vmatpush.bf16.msra.mxu0 0
    %2292 = vmatpush.bf16.msra.mxu0 0
    %2293 = vmatpush.bf16.msra.mxu0 0
    %2294 = vmatpush.bf16.msra.mxu0 0
    %2295 = vmatpush.bf16.msra.mxu0 0
    %2296 = vmatpush.bf16.msra.mxu0 0
    %2297 = vmatpush.bf16.msra.mxu0 0
    %2298 = vmatpush.bf16.msra.mxu0 %v1989
    %2299 = vmatmul.bf16.gmra.mxu0 %v2289
    %v2300 = vpop.f32.mrf.mxu0
    %v2301 = vadd.f32 %v2285, %v2300
    %v2302 = vpop.f32.mrf.mxu0
    %2303 = vdwg.mxu0
    %v2304 = vpack.c.bf16 %v1668, %v1668
    %v2305 = vpack.c.bf16 %v1704, %v1704
    %v2306 = vpack.c.bf16 %v1740, %v1740
    %v2308 = vsel %vm583, %v2304, 0
    %v2311 = vsel %vm583, %v2305, 0
    %2313 = vmatpush.bf16.xpose.msra.mxu0 0
    %2314 = vmatpush.bf16.xpose.msra.mxu0 0
    %2315 = vmatpush.bf16.xpose.msra.mxu0 0
    %2316 = vmatpush.bf16.xpose.msra.mxu0 0
    %2317 = vmatpush.bf16.xpose.msra.mxu0 0
    %2318 = vmatpush.bf16.xpose.msra.mxu0 0
    %2319 = vmatpush.bf16.xpose.msra.mxu0 0
    %2320 = vmatpush.bf16.xpose.msra.mxu0 %v2311
    %2321 = vmatmul.bf16.gmra.mxu0 %v2308
    %v2322 = vpop.f32.mrf.mxu0
    %v2323 = vadd.f32 0.0, %v2322
    %v2324 = vpop.f32.mrf.mxu0
    %2325 = vdwg.mxu0
    %v2326 = vmul.f32 %v2323, 0.35355338
    %v2327 = vadd.f32 %v2326, %v149
    %v2328 = vsel %vm583, %v2327, -inf
    %2329 = vmax.xlane.f32.xlu0 %v2328
    %v2330 = vpop.xlane.xlu0 %2329
    %v2331 = vsub.f32 %v2327, %v2330
    %v2332 = vmul.f32 %v2331, 1.442695
    %v2333 = vpow.pop %v2332
    %v2334 = vsel %vm583, %v2333, 0.0
    %2335 = vadd.xlane.f32.xlu0 %v2334
    %v2336 = vpop.xlane.xlu0 %2335
    %v2337 = vrcp.pop %v2336
    %v2338 = vmul.f32 %v2333, %v2337
    %v2339 = vpack.c.bf16 %v2338, %v2338
    %v2341 = vsel %vm583, %v2339, 0
    %v2344 = vsel %vm620, %v2306, 0
    %2346 = vmatpush.bf16.msra.mxu0 0
    %2347 = vmatpush.bf16.msra.mxu0 0
    %2348 = vmatpush.bf16.msra.mxu0 0
    %2349 = vmatpush.bf16.msra.mxu0 0
    %2350 = vmatpush.bf16.msra.mxu0 0
    %2351 = vmatpush.bf16.msra.mxu0 0
    %2352 = vmatpush.bf16.msra.mxu0 0
    %2353 = vmatpush.bf16.msra.mxu0 %v2344
    %2354 = vmatmul.bf16.gmra.mxu0 %v2341
    %v2355 = vpop.f32.mrf.mxu0
    %v2356 = vadd.f32 0.0, %v2355
    %v2357 = vpop.f32.mrf.mxu0
    %2358 = vdwg.mxu0
    %v2359 = vpack.c.bf16 %v2356, %v2356
    %v2361 = vsel %vm583, %v2359, 0
    %2363 = vmatpush.bf16.msra.mxu0 0
    %2364 = vmatpush.bf16.msra.mxu0 0
    %2365 = vmatpush.bf16.msra.mxu0 0
    %2366 = vmatpush.bf16.msra.mxu0 0
    %2367 = vmatpush.bf16.msra.mxu0 0
    %2368 = vmatpush.bf16.msra.mxu0 0
    %2369 = vmatpush.bf16.msra.mxu0 0
    %2370 = vmatpush.bf16.msra.mxu0 %v2066
    %2371 = vmatmul.bf16.gmra.mxu0 %v2361
    %v2372 = vpop.f32.mrf.mxu0
    %v2373 = vadd.f32 0.0, %v2372
    %v2374 = vpop.f32.mrf.mxu0
    %2375 = vdwg.mxu0
    %v2376 = vadd.f32 %v2301, %v2373
    %v2377 = vpack.c.bf16 %v1776, %v1776
    %v2378 = vpack.c.bf16 %v1812, %v1812
    %v2379 = vpack.c.bf16 %v1848, %v1848
    %v2381 = vsel %vm583, %v2377, 0
    %v2384 = vsel %vm583, %v2378, 0
    %2386 = vmatpush.bf16.xpose.msra.mxu0 0
    %2387 = vmatpush.bf16.xpose.msra.mxu0 0
    %2388 = vmatpush.bf16.xpose.msra.mxu0 0
    %2389 = vmatpush.bf16.xpose.msra.mxu0 0
    %2390 = vmatpush.bf16.xpose.msra.mxu0 0
    %2391 = vmatpush.bf16.xpose.msra.mxu0 0
    %2392 = vmatpush.bf16.xpose.msra.mxu0 0
    %2393 = vmatpush.bf16.xpose.msra.mxu0 %v2384
    %2394 = vmatmul.bf16.gmra.mxu0 %v2381
    %v2395 = vpop.f32.mrf.mxu0
    %v2396 = vadd.f32 0.0, %v2395
    %v2397 = vpop.f32.mrf.mxu0
    %2398 = vdwg.mxu0
    %v2399 = vmul.f32 %v2396, 0.35355338
    %v2400 = vadd.f32 %v2399, %v149
    %v2401 = vsel %vm583, %v2400, -inf
    %2402 = vmax.xlane.f32.xlu0 %v2401
    %v2403 = vpop.xlane.xlu0 %2402
    %v2404 = vsub.f32 %v2400, %v2403
    %v2405 = vmul.f32 %v2404, 1.442695
    %v2406 = vpow.pop %v2405
    %v2407 = vsel %vm583, %v2406, 0.0
    %2408 = vadd.xlane.f32.xlu0 %v2407
    %v2409 = vpop.xlane.xlu0 %2408
    %v2410 = vrcp.pop %v2409
    %v2411 = vmul.f32 %v2406, %v2410
    %v2412 = vpack.c.bf16 %v2411, %v2411
    %v2414 = vsel %vm583, %v2412, 0
    %v2417 = vsel %vm620, %v2379, 0
    %2419 = vmatpush.bf16.msra.mxu0 0
    %2420 = vmatpush.bf16.msra.mxu0 0
    %2421 = vmatpush.bf16.msra.mxu0 0
    %2422 = vmatpush.bf16.msra.mxu0 0
    %2423 = vmatpush.bf16.msra.mxu0 0
    %2424 = vmatpush.bf16.msra.mxu0 0
    %2425 = vmatpush.bf16.msra.mxu0 0
    %2426 = vmatpush.bf16.msra.mxu0 %v2417
    %2427 = vmatmul.bf16.gmra.mxu0 %v2414
    %v2428 = vpop.f32.mrf.mxu0
    %v2429 = vadd.f32 0.0, %v2428
    %v2430 = vpop.f32.mrf.mxu0
    %2431 = vdwg.mxu0
    %v2432 = vpack.c.bf16 %v2429, %v2429
    %v2434 = vsel %vm583, %v2432, 0
    %2436 = vmatpush.bf16.msra.mxu0 0
    %2437 = vmatpush.bf16.msra.mxu0 0
    %2438 = vmatpush.bf16.msra.mxu0 0
    %2439 = vmatpush.bf16.msra.mxu0 0
    %2440 = vmatpush.bf16.msra.mxu0 0
    %2441 = vmatpush.bf16.msra.mxu0 0
    %2442 = vmatpush.bf16.msra.mxu0 0
    %2443 = vmatpush.bf16.msra.mxu0 %v2144
    %2444 = vmatmul.bf16.gmra.mxu0 %v2434
    %v2445 = vpop.f32.mrf.mxu0
    %v2446 = vadd.f32 0.0, %v2445
    %v2447 = vpop.f32.mrf.mxu0
    %2448 = vdwg.mxu0
    %v2449 = vadd.f32 %v2376, %v2446
    %s2450 = scalar_lea.vmem %s11, 1
    %v2451 = vld [vmem:[%s2450] sm:$0x1]
    %v2453 = vperm.slane %v2451, 0
    %v2455 = vadd.f32 %v2159, %v2453
    %v2456 = vadd.f32 %v2449, %v2453
    %v2457 = vadd.f32 %v1412, %v2455
    %v2458 = vadd.f32 %v1413, %v2456
    %s2459 = scalar_lea.vmem %s12, 1
    %v2460 = vld [vmem:[%s2459] sm:$0x1]
    %s2461 = scalar_lea.vmem %s13, 1
    %v2462 = vld [vmem:[%s2461] sm:$0x1]
    %v2463 = vsel %vm83, %v2457, 0.0
    %2464 = vadd.xlane.f32.xlu0 %v2463
    %v2465 = vpop.xlane.xlu0 %2464
    %v2466 = vsel %vm83, %v2458, 0.0
    %2467 = vadd.xlane.f32.xlu0 %v2466
    %v2468 = vpop.xlane.xlu0 %2467
    %v2469 = vmul.f32 %v2465, %v96
    %v2470 = vmul.f32 %v2468, %v96
    %v2471 = vsub.f32 %v2457, %v2469
    %v2472 = vsub.f32 %v2458, %v2470
    %v2473 = vmul.f32 %v2471, %v2471
    %v2474 = vmul.f32 %v2472, %v2472
    %v2475 = vsel %vm83, %v2473, 0.0
    %2476 = vadd.xlane.f32.xlu0 %v2475
    %v2477 = vpop.xlane.xlu0 %2476
    %v2478 = vsel %vm83, %v2474, 0.0
    %2479 = vadd.xlane.f32.xlu0 %v2478
    %v2480 = vpop.xlane.xlu0 %2479
    %v2481 = vmul.f32 %v2477, %v96
    %v2482 = vmul.f32 %v2480, %v96
    %v2483 = vadd.f32 %v2481, 1e-05
    %v2484 = vadd.f32 %v2482, 1e-05
    %v2485 = vrsqrt.pop %v2483
    %v2486 = vmul.f32 %v2485, %v2483
    %v2487 = vmul.f32 %v2486, %v2485
    %v2488 = vmul.f32 0.5, %v2487
    %v2489 = vsub.f32 1.5, %v2488
    %v2490 = vmul.f32 %v2485, %v2489
    %vm2491 = vweird.f32 %v2483
    %vm2492 = vweird.f32 %v2485
    %vm2493 = vmor %vm2491, %vm2492
    %v2494 = vsel %vm2493, %v2485, %v2490
    %v2495 = vrsqrt.pop %v2484
    %v2496 = vmul.f32 %v2495, %v2484
    %v2497 = vmul.f32 %v2496, %v2495
    %v2498 = vmul.f32 0.5, %v2497
    %v2499 = vsub.f32 1.5, %v2498
    %v2500 = vmul.f32 %v2495, %v2499
    %vm2501 = vweird.f32 %v2484
    %vm2502 = vweird.f32 %v2495
    %vm2503 = vmor %vm2501, %vm2502
    %v2504 = vsel %vm2503, %v2495, %v2500
    %v2505 = vmul.f32 %v2471, %v2494
    %v2506 = vmul.f32 %v2472, %v2504
    %v2508 = vperm.slane %v2460, 0
    %v2510 = vmul.f32 %v2505, %v2508
    %v2511 = vmul.f32 %v2506, %v2508
    %v2513 = vperm.slane %v2462, 0
    %v2515 = vadd.f32 %v2510, %v2513
    %v2516 = vadd.f32 %v2511, %v2513
    %v2517 = vpack.c.bf16 %v2516, %v2515
    %s2518 = scalar_lea.vmem %s14, 16
    %v2519 = vld [vmem:[%s2518] sm:$0xf]
    %v2520 = vld [vmem:[%s2518 + $0x4] sm:$0xf]
    %v2521 = vld [vmem:[%s2518 + $0x8] sm:$0xf]
    %v2522 = vld [vmem:[%s2518 + $0xc] sm:$0xf]
    %s2523 = scalar_lea.vmem %s15, 1
    %v2524 = vld [vmem:[%s2523] sm:$0x1]
    %v2526 = vperm.slane %v2524, 0
    %v2532 = vunpack.c.l.b16 %v2519
    %v2533 = vunpack.c.l.b16 %v2520
    %v2534 = vunpack.c.l.b16 %v2521
    %v2535 = vunpack.c.l.b16 %v2522
    %v2536 = vpack.c.b16 %v2533, %v2532
    %v2537 = vpack.c.b16 %v2535, %v2534
    %v2541 = vsel %vm83, %v2517, 0
    %2543 = vmatpush.bf16.msra.mxu0 0
    %2544 = vmatpush.bf16.msra.mxu0 0
    %2545 = vmatpush.bf16.msra.mxu0 0
    %2546 = vmatpush.bf16.msra.mxu0 0
    %2547 = vmatpush.bf16.msra.mxu0 0
    %2548 = vmatpush.bf16.msra.mxu0 0
    %2549 = vmatpush.bf16.msra.mxu0 %v2537
    %2550 = vmatpush.bf16.msra.mxu0 %v2536
    %2551 = vmatmul.bf16.gmra.mxu0 %v2541
    %v2552 = vpop.f32.mrf.mxu0
    %v2553 = vadd.f32 %v2526, %v2552
    %v2554 = vpop.f32.mrf.mxu0
    %v2555 = vadd.f32 %v2526, %v2554
    %2556 = vdwg.mxu0
    %v2557 = vmul.f32 %v2553, 0.5
    %v2558 = vmul.f32 %v2555, 0.5
    %v2559 = vmul.f32 %v2553, 0.044715
    %v2560 = vmul.f32 %v2555, 0.044715
    %v2561 = vmul.f32 %v2559, %v2553
    %v2562 = vmul.f32 %v2560, %v2555
    %v2563 = vmul.f32 %v2561, %v2553
    %v2564 = vmul.f32 %v2562, %v2555
    %v2565 = vadd.f32 %v2553, %v2563
    %v2566 = vadd.f32 %v2555, %v2564
    %v2567 = vmul.f32 %v2565, 0.7978846
    %v2568 = vmul.f32 %v2566, 0.7978846
    %v2569 = vtanh.pop %v2567
    %v2570 = vtanh.pop %v2568
    %v2571 = vadd.f32 %v2569, 1.0
    %v2572 = vadd.f32 %v2570, 1.0
    %v2573 = vmul.f32 %v2557, %v2571
    %v2574 = vmul.f32 %v2558, %v2572
    %v2575 = vpack.c.bf16 %v2574, %v2573
    %s2576 = scalar_lea.vmem %s16, 32
    %v2577 = vld [vmem:[%s2576] sm:$0xf]
    %v2578 = vld [vmem:[%s2576 + $0x4] sm:$0xf]
    %v2579 = vld [vmem:[%s2576 + $0x8] sm:$0xf]
    %v2580 = vld [vmem:[%s2576 + $0xc] sm:$0xf]
    %v2581 = vld [vmem:[%s2576 + $0x10] sm:$0xf]
    %v2582 = vld [vmem:[%s2576 + $0x14] sm:$0xf]
    %v2583 = vld [vmem:[%s2576 + $0x18] sm:$0xf]
    %v2584 = vld [vmem:[%s2576 + $0x1c] sm:$0xf]
    %s2585 = scalar_lea.vmem %s17, 1
    %v2586 = vld [vmem:[%s2585] sm:$0x1]
    %v2588 = vperm.slane %v2586, 0
    %v2598 = vunpack.c.l.b16 %v2577
    %v2599 = vunpack.c.l.b16 %v2578
    %v2600 = vunpack.c.l.b16 %v2579
    %v2601 = vunpack.c.l.b16 %v2580
    %v2602 = vunpack.c.l.b16 %v2581
    %v2603 = vunpack.c.l.b16 %v2582
    %v2604 = vunpack.c.l.b16 %v2583
    %v2605 = vunpack.c.l.b16 %v2584
    %v2606 = vpack.c.b16 %v2599, %v2598
    %v2607 = vpack.c.b16 %v2601, %v2600
    %v2608 = vpack.c.b16 %v2603, %v2602
    %v2609 = vpack.c.b16 %v2605, %v2604
    %v2615 = vsel %vm1338, %v2575, 0
    %2617 = vmatpush.bf16.msra.mxu0 0
    %2618 = vmatpush.bf16.msra.mxu0 0
    %2619 = vmatpush.bf16.msra.mxu0 0
    %2620 = vmatpush.bf16.msra.mxu0 0
    %2621 = vmatpush.bf16.msra.mxu0 %v2609
    %2622 = vmatpush.bf16.msra.mxu0 %v2608
    %2623 = vmatpush.bf16.msra.mxu0 %v2607
    %2624 = vmatpush.bf16.msra.mxu0 %v2606
    %2625 = vmatmul.bf16.gmra.mxu0 %v2615
    %v2626 = vpop.f32.mrf.mxu0
    %v2627 = vadd.f32 %v2588, %v2626
    %v2628 = vpop.f32.mrf.mxu0
    %v2629 = vadd.f32 %v2588, %v2628
    %2630 = vdwg.mxu0
    %v2631 = vadd.f32 %v2515, %v2627
    %v2632 = vadd.f32 %v2516, %v2629
    %s2633 = scalar_lea.vmem %s18, 1
    %v2634 = vld [vmem:[%s2633] sm:$0x1]
    %s2635 = scalar_lea.vmem %s19, 1
    %v2636 = vld [vmem:[%s2635] sm:$0x1]
    %v2637 = vsel %vm83, %v2631, 0.0
    %2638 = vadd.xlane.f32.xlu0 %v2637
    %v2639 = vpop.xlane.xlu0 %2638
    %v2640 = vsel %vm83, %v2632, 0.0
    %2641 = vadd.xlane.f32.xlu0 %v2640
    %v2642 = vpop.xlane.xlu0 %2641
    %v2643 = vmul.f32 %v2639, %v96
    %v2644 = vmul.f32 %v2642, %v96
    %v2645 = vsub.f32 %v2631, %v2643
    %v2646 = vsub.f32 %v2632, %v2644
    %v2647 = vmul.f32 %v2645, %v2645
    %v2648 = vmul.f32 %v2646, %v2646
    %v2649 = vsel %vm83, %v2647, 0.0
    %2650 = vadd.xlane.f32.xlu0 %v2649
    %v2651 = vpop.xlane.xlu0 %2650
    %v2652 = vsel %vm83, %v2648, 0.0
    %2653 = vadd.xlane.f32.xlu0 %v2652
    %v2654 = vpop.xlane.xlu0 %2653
    %v2655 = vmul.f32 %v2651, %v96
    %v2656 = vmul.f32 %v2654, %v96
    %v2657 = vadd.f32 %v2655, 1e-05
    %v2658 = vadd.f32 %v2656, 1e-05
    %v2659 = vrsqrt.pop %v2657
    %v2660 = vmul.f32 %v2659, %v2657
    %v2661 = vmul.f32 %v2660, %v2659
    %v2662 = vmul.f32 0.5, %v2661
    %v2663 = vsub.f32 1.5, %v2662
    %v2664 = vmul.f32 %v2659, %v2663
    %vm2665 = vweird.f32 %v2657
    %vm2666 = vweird.f32 %v2659
    %vm2667 = vmor %vm2665, %vm2666
    %v2668 = vsel %vm2667, %v2659, %v2664
    %v2669 = vrsqrt.pop %v2658
    %v2670 = vmul.f32 %v2669, %v2658
    %v2671 = vmul.f32 %v2670, %v2669
    %v2672 = vmul.f32 0.5, %v2671
    %v2673 = vsub.f32 1.5, %v2672
    %v2674 = vmul.f32 %v2669, %v2673
    %vm2675 = vweird.f32 %v2658
    %vm2676 = vweird.f32 %v2669
    %vm2677 = vmor %vm2675, %vm2676
    %v2678 = vsel %vm2677, %v2669, %v2674
    %v2679 = vmul.f32 %v2645, %v2668
    %v2680 = vmul.f32 %v2646, %v2678
    %v2682 = vperm.slane %v2634, 0
    %v2684 = vmul.f32 %v2679, %v2682
    %v2685 = vmul.f32 %v2680, %v2682
    %v2687 = vperm.slane %v2636, 0
    %v2689 = vadd.f32 %v2684, %v2687
    %v2690 = vadd.f32 %v2685, %v2687
    %v2692 = vrot.slane %v2690, 7
    %vm2694 = vcmask 1040384
    %v2695 = vsel %vm2694, %v2689, %v2692
    %v2696 = vpack.c.bf16 %v2695, %v2695
    %v2697 = vld [vmem:[%s21] sm:$0xf]
    %v2698 = vld [vmem:[%s21 + $0x4] sm:$0xf]
    %v2699 = vld [vmem:[%s21 + $0x8] sm:$0xf]
    %v2700 = vld [vmem:[%s21 + $0xc] sm:$0xf]
    %v2701 = vld [vmem:[%s20] sm:$0x3]
    %v2702 = vpack.c.bf16 %v2701, %v2701
    %v2703 = vld [vmem:[%s22] sm:$0xf]
    %v2704 = vld [vmem:[%s22 + $0x4] sm:$0xf]
    %v2705 = vld [vmem:[%s22 + $0x8] sm:$0xf]
    %v2709 = vunpack.c.l.b16 %v2703
    %v2710 = vunpack.c.l.b16 %v2704
    %v2711 = vunpack.c.l.b16 %v2705
    %v2712 = vpack.c.b16 %v2710, %v2709
    %v2713 = vpack.c.b16 %v2711, %v2711
    %vm2715 = vcmask 195584
    %v2717 = vsel %vm2715, %v2702, 0
    %v2720 = vsel %vm620, %v2713, 0
    %2722 = vmatpush.bf16.msra.mxu0 0
    %2723 = vmatpush.bf16.msra.mxu0 0
    %2724 = vmatpush.bf16.msra.mxu0 0
    %2725 = vmatpush.bf16.msra.mxu0 0
    %2726 = vmatpush.bf16.msra.mxu0 0
    %2727 = vmatpush.bf16.msra.mxu0 0
    %2728 = vmatpush.bf16.msra.mxu0 %v2720
    %2729 = vmatpush.bf16.msra.mxu0 %v2712
    %2730 = vmatmul.bf16.gmra.mxu0 %v2717
    %v2731 = vpop.f32.mrf.mxu0
    %v2732 = vadd.f32 0.0, %v2731
    %v2733 = vpop.f32.mrf.mxu0
    %2734 = vdwg.mxu0
    %v2739 = vunpack.c.l.b16 %v2697
    %v2740 = vunpack.c.l.b16 %v2698
    %v2741 = vunpack.c.l.b16 %v2699
    %v2742 = vunpack.c.l.b16 %v2700
    %v2743 = vpack.c.b16 %v2740, %v2739
    %v2744 = vpack.c.b16 %v2742, %v2741
    %v2748 = vsel %vm83, %v2696, 0
    %2750 = vmatpush.bf16.msra.mxu0 0
    %2751 = vmatpush.bf16.msra.mxu0 0
    %2752 = vmatpush.bf16.msra.mxu0 0
    %2753 = vmatpush.bf16.msra.mxu0 0
    %2754 = vmatpush.bf16.msra.mxu0 0
    %2755 = vmatpush.bf16.msra.mxu0 0
    %2756 = vmatpush.bf16.msra.mxu0 %v2744
    %2757 = vmatpush.bf16.msra.mxu0 %v2743
    %2758 = vmatmul.bf16.gmra.mxu0 %v2748
    %v2759 = vpop.f32.mrf.mxu0
    %v2760 = vadd.f32 %v2732, %v2759
    %v2761 = vpop.f32.mrf.mxu0
    %2762 = vdwg.mxu0
    %v2763 = vld [vmem:[%s23] sm:$0x1]
    %v2765 = vperm.slane %v2763, 0
    %v2767 = vadd.f32 %v2760, %v2765
    %2768 = vst [vmem:[#allocation2] sm:$0x3] %v2767
    // Predicated region
    $region98: #{bert_class_forward.1} parent=1 // pred_check
      _
    $region99: #{bert_class_forward.1} parent=1 // pred_check_branch
      %2770 = sbr.rel (0) target = $region101
    $region100: #{bert_class_forward.1} parent=1 // pred_region
      %2772 = vsyncadd [#allocation3], 0
      %s2774 = sshll.u32 [#allocation2], 4
      %s2775 = int_to_ptr.vmem [resolvable:$true] %s2774
      %s2776 = sshll.u32 %s24, 4
      %s2777 = int_to_ptr.hbm [resolvable:$true] %s2776
      %2779 = dma.vmem_to_hbm [thread:$0]  %s2775, 32, %s2777, [#allocation3]
    $region101: #{bert_class_forward.1} parent=1 // pred_fallthru
      _
    // Predicated region
    $region102: #{bert_class_forward.1} parent=1 // pred_check
      _
    $region103: #{bert_class_forward.1} parent=1 // pred_check_branch
      %2781 = sbr.rel (0) target = $region105
    $region104: #{bert_class_forward.1} parent=1 // pred_region
      %2783 = dma.done [#allocation3], 32
    $region105: #{bert_class_forward.1} parent=1 // pred_fallthru
      _
    %2784 = vsyncpa [#allocation3], 1

</llo_original>
